<compile_context>
chip_gen: v7x
topology: tpu7x:2x2x1
jax: 0.10.0
libtpu: 0.0.40
codegen_flags: <defaults>
</compile_context>

<pallas_src>
import jax
import jax.numpy as jnp
from jax.experimental import pallas as pl
from jax.experimental.pallas import tpu as pltpu

# Lane-dense padded feature widths (stores become unmasked vst, MXU columns not idle).
COUT_PAD = 128   # conv features 32  -> 128 (zero weight columns)
HID_PAD = 128    # projector hidden 64 -> 128
PROJ_PAD = 128   # projection 16     -> 128
BN_EPS = 1e-5


# ----------------------------------------------------------------------------
# Fused kernel
# ----------------------------------------------------------------------------
def _make_fused_kernel(*, B, T, TM, H, W, C):
    Wp = W + 2                      # padded row width
    inv_hw = 1.0 / float(H * W)     # global-avg-pool divisor (valid pixels only)

    def kernel(x_ref, mask_ref, wc_ref, bc_ref, w1_ref, b1_ref, g_ref, bt_ref,
               w2_ref, b2_ref, proj_ref, rep_ref, acc_ref):
        b = pl.program_id(0)
        t = pl.program_id(1)

        @pl.when(jnp.logical_and(b == 0, t == 0))
        def _init():
            acc_ref[...] = jnp.zeros_like(acc_ref)

        # --- Conv2d(3x3, pad=1): 9 accumulated matmuls on shifted views (no im2col) ---
        w_all = wc_ref[...]                                   # (9*C, COUT_PAD), resident
        conv = jnp.zeros((TM, COUT_PAD), jnp.float32)
        for kh in range(3):
            for kw in range(3):
                off = kh * Wp + kw                            # static shift into the slab
                tap = (kh * 3 + kw) * C
                conv = conv + jnp.dot(x_ref[off:off + TM, :],
                                      w_all[tap:tap + C, :],
                                      preferred_element_type=jnp.float32)
        conv = jnp.maximum(conv + bc_ref[...], 0.0)           # bias + ReLU, (TM, COUT_PAD)

        # --- fused global average pool: masked partial sum for image `b` ---
        tile_sum = jnp.sum(conv * mask_ref[...], axis=0, keepdims=True)   # (1, COUT_PAD)
        row_ids = jax.lax.broadcasted_iota(jnp.int32, (B, 1), 0)
        acc_ref[...] = acc_ref[...] + jnp.where(row_ids == b, tile_sum, 0.0)

        # --- epilogue on the last grid step: finish pool + projector MLP ---
        @pl.when(jnp.logical_and(b == B - 1, t == T - 1))
        def _epilogue():
            rep = acc_ref[...] * inv_hw                       # (B, COUT_PAD)
            rep_ref[...] = rep
            h = jnp.dot(rep, w1_ref[...], preferred_element_type=jnp.float32) + b1_ref[...]
            mean = jnp.mean(h, axis=0, keepdims=True)         # BatchNorm1d, train-mode
            var = jnp.mean((h - mean) ** 2, axis=0, keepdims=True)   # biased, as in PyTorch
            h = (h - mean) * jax.lax.rsqrt(var + BN_EPS)
            h = jnp.maximum(h * g_ref[...] + bt_ref[...], 0.0)
            proj_ref[...] = (jnp.dot(h, w2_ref[...], preferred_element_type=jnp.float32)
                             + b2_ref[...])

    return kernel


# ----------------------------------------------------------------------------
# Wrapper-side glue (cheap, no 9x expansion)
# ----------------------------------------------------------------------------
def _pick_anchor_tile(n_out, halo, c_in, cout_pad, vmem_budget_bytes=8 << 20):
    """Largest sublane-aligned anchor tile that divides n_out, keeps >= 2 grid steps
    (so the pipelined accumulate path is exercised), and fits a conservative VMEM
    budget (double-buffered input tile + activation slab); safe on v5e/v6e/v7x
    scoped-VMEM defaults.  Falls back to a single step."""
    best = None
    for tm in range(8, n_out // 2 + 1, 8):
        if n_out % tm:
            continue
        tile_bytes = 2 * (tm + halo) * c_in * 4 + tm * (cout_pad + 1) * 4
        if tile_bytes <= vmem_budget_bytes:
            best = tm
    return best if best is not None else n_out


def _build_anchor_tiles(x_nchw, TM, halo):
    """NCHW -> zero-padded NHWC, flattened to a (padded-pixel, C) slab, cut into
    overlapping anchor-row tiles (B, T, TM + halo, C).  Only the small halo per tile
    is duplicated (vs 9x for a materialized im2col)."""
    B, C, H, W = x_nchw.shape
    Wp = W + 2
    x = jnp.transpose(x_nchw, (0, 2, 3, 1))                # NHWC
    xp = jnp.pad(x, ((0, 0), (1, 2), (1, 1), (0, 0)))      # 1 top, 2 bottom, 1 left/right
    flat = xp.reshape(B, (H + 3) * Wp, C)
    n_out = H * Wp
    T = n_out // TM
    tiles = [flat[:, t * TM: t * TM + TM + halo, :] for t in range(T)]
    return jnp.stack(tiles, axis=1)                        # (B, T, TM + halo, C)


def _fused_encoder(tiles, mask, kp, *, B, C, H, W, TM, T, halo):
    kernel = _make_fused_kernel(B=B, T=T, TM=TM, H=H, W=W, C=C)

    in_arrays = (tiles, mask, kp["w_taps"], kp["b_conv"], kp["w1"], kp["b1"],
                 kp["gamma"], kp["beta"], kp["w2"], kp["b2"])
    cost = pl.CostEstimate(
        flops=int(2 * B * T * TM * 9 * C * COUT_PAD
                  + 2 * B * (COUT_PAD * HID_PAD + HID_PAD * PROJ_PAD)),
        transcendentals=int(HID_PAD),
        bytes_accessed=int(sum(int(a.size) * 4 for a in in_arrays)
                           + B * (COUT_PAD + PROJ_PAD) * 4),
    )

    grid_spec = pltpu.PrefetchScalarGridSpec(
        num_scalar_prefetch=0,
        grid=(B, T),
        in_specs=[
            # conv input slab: row-tiled over anchors, auto double-buffered by Pallas
            pl.BlockSpec((None, None, TM + halo, C), lambda b, t: (b, t, 0, 0)),
            pl.BlockSpec((TM, 1), lambda b, t: (t, 0)),               # valid-anchor mask
            # weights / BN params: constant index maps -> stay resident in VMEM
            pl.BlockSpec((9 * C, COUT_PAD), lambda b, t: (0, 0)),
            pl.BlockSpec((1, COUT_PAD), lambda b, t: (0, 0)),
            pl.BlockSpec((COUT_PAD, HID_PAD), lambda b, t: (0, 0)),
            pl.BlockSpec((1, HID_PAD), lambda b, t: (0, 0)),
            pl.BlockSpec((1, HID_PAD), lambda b, t: (0, 0)),
            pl.BlockSpec((1, HID_PAD), lambda b, t: (0, 0)),
            pl.BlockSpec((HID_PAD, PROJ_PAD), lambda b, t: (0, 0)),
            pl.BlockSpec((1, PROJ_PAD), lambda b, t: (0, 0)),
        ],
        out_specs=(
            pl.BlockSpec((B, PROJ_PAD), lambda b, t: (0, 0)),   # lane-dense, written on last step
            pl.BlockSpec((B, COUT_PAD), lambda b, t: (0, 0)),
        ),
        scratch_shapes=[pltpu.VMEM((B, COUT_PAD), jnp.float32)],  # pooled-sum accumulator
    )

    proj_pad, rep_pad = pl.pallas_call(
        kernel,
        out_shape=(jax.ShapeDtypeStruct((B, PROJ_PAD), jnp.float32),
                   jax.ShapeDtypeStruct((B, COUT_PAD), jnp.float32)),
        grid_spec=grid_spec,
        compiler_params=pltpu.CompilerParams(
            # Outputs + accumulator are carried across BOTH grid axes (the projector's
            # BatchNorm needs the whole batch), so both axes must be "arbitrary".
            dimension_semantics=("arbitrary", "arbitrary"),
            vmem_limit_bytes=32 * 1024 * 1024,
        ),
        cost_estimate=cost,
    )(*in_arrays)
    return proj_pad, rep_pad


def net_wrapper_forward(x, kp, return_projection=True, feat_dim=32, proj_dim=16):
    """NetWrapper.forward: returns (projection, representation), like the PyTorch module."""
    B, C, H, W = x.shape
    Wp = W + 2
    n_out = H * Wp                    # conv evaluated at every padded-column anchor;
    halo = 2 * Wp + 2                 # invalid anchors are masked before pooling
    TM = _pick_anchor_tile(n_out, halo, C, COUT_PAD)
    T = n_out // TM

    tiles = _build_anchor_tiles(x, TM, halo)                          # (B, T, TM+halo, C)
    mask = (jnp.arange(n_out, dtype=jnp.int32) % Wp < W)
    mask = mask.astype(jnp.float32).reshape(n_out, 1)                 # valid-anchor mask

    proj_pad, rep_pad = _fused_encoder(tiles, mask, kp, B=B, C=C, H=H, W=W,
                                       TM=TM, T=T, halo=halo)
    representation = rep_pad[:, :feat_dim]
    if not return_projection:
        return representation
    return proj_pad[:, :proj_dim], representation


# ----------------------------------------------------------------------------
# Parameters
# ----------------------------------------------------------------------------
def init_params(key, c_in=4, c_feat=32, n_classes=10,
                projection_size=16, projection_hidden_size=64):
    ks = jax.random.split(key, 8)
    return {
        # backbone: Conv2d -> ReLU -> GlobalAvgPool -> Flatten -> Linear
        "conv_w": 0.1 * jax.random.normal(ks[0], (c_feat, c_in, 3, 3), jnp.float32),
        "conv_b": 0.1 * jax.random.normal(ks[1], (c_feat,), jnp.float32),
        "fc_w":   0.1 * jax.random.normal(ks[2], (n_classes, c_feat), jnp.float32),
        "fc_b":   0.1 * jax.random.normal(ks[3], (n_classes,), jnp.float32),
        # projector MLP (PyTorch Linear layout: (out, in))
        "proj_w1": 0.1 * jax.random.normal(ks[4], (projection_hidden_size, c_feat), jnp.float32),
        "proj_b1": 0.1 * jax.random.normal(ks[5], (projection_hidden_size,), jnp.float32),
        "bn_gamma": jnp.ones((projection_hidden_size,), jnp.float32),
        "bn_beta":  jnp.zeros((projection_hidden_size,), jnp.float32),
        "proj_w2": 0.1 * jax.random.normal(ks[6], (projection_size, projection_hidden_size), jnp.float32),
        "proj_b2": 0.1 * jax.random.normal(ks[7], (projection_size,), jnp.float32),
    }


def prepare_kernel_params(p):
    """One-time layout prep (hoisted out of the forward pass): transpose weights to
    (in, out) matmul layout and zero-pad feature dims to 128 so every kernel store is
    lane-dense and padded columns contribute exactly 0 through conv/BN/ReLU/Linear."""
    c_feat, c_in, kh, kw = p["conv_w"].shape
    hid = p["proj_w1"].shape[0]
    proj = p["proj_w2"].shape[0]

    # (c_feat, c_in, 3, 3) -> (kh, kw, c_in, c_feat) -> (9*c_in, c_feat) -> pad columns
    w_taps = jnp.transpose(p["conv_w"], (2, 3, 1, 0)).reshape(kh * kw * c_in, c_feat)
    w_taps = jnp.pad(w_taps, ((0, 0), (0, COUT_PAD - c_feat)))
    b_conv = jnp.pad(p["conv_b"], (0, COUT_PAD - c_feat)).reshape(1, COUT_PAD)

    w1 = jnp.pad(p["proj_w1"].T, ((0, COUT_PAD - c_feat), (0, HID_PAD - hid)))
    b1 = jnp.pad(p["proj_b1"], (0, HID_PAD - hid)).reshape(1, HID_PAD)
    gamma = jnp.pad(p["bn_gamma"], (0, HID_PAD - hid), constant_values=1.0).reshape(1, HID_PAD)
    beta = jnp.pad(p["bn_beta"], (0, HID_PAD - hid)).reshape(1, HID_PAD)
    w2 = jnp.pad(p["proj_w2"].T, ((0, HID_PAD - hid), (0, PROJ_PAD - proj)))
    b2 = jnp.pad(p["proj_b2"], (0, PROJ_PAD - proj)).reshape(1, PROJ_PAD)

    # NOTE: fc_w / fc_b (backbone's final Linear) are intentionally unused: with
    # layer=-2 NetWrapper discards that output, so the dead matmul is not computed.
    return {"w_taps": w_taps, "b_conv": b_conv, "w1": w1, "b1": b1,
            "gamma": gamma, "beta": beta, "w2": w2, "b2": b2}


# ----------------------------------------------------------------------------
# Pure-JAX references (correctness checks)
# ----------------------------------------------------------------------------
def reference_representation(x, p):
    y = jax.lax.conv_general_dilated(
        x, p["conv_w"], window_strides=(1, 1), padding=((1, 1), (1, 1)),
        dimension_numbers=("NCHW", "OIHW", "NCHW"),
        precision=jax.lax.Precision.HIGHEST)
    y = jnp.maximum(y + p["conv_b"][None, :, None, None], 0.0)
    return jnp.mean(y, axis=(2, 3))


def reference_projection(rep, p, eps=BN_EPS):
    hp = jax.lax.Precision.HIGHEST
    h = jnp.dot(rep, p["proj_w1"].T, precision=hp) + p["proj_b1"]
    mean = jnp.mean(h, axis=0, keepdims=True)
    var = jnp.mean((h - mean) ** 2, axis=0, keepdims=True)
    h = (h - mean) * jax.lax.rsqrt(var + eps)
    h = jnp.maximum(h * p["bn_gamma"] + p["bn_beta"], 0.0)
    return jnp.dot(h, p["proj_w2"].T, precision=hp) + p["proj_b2"]


if __name__ == "__main__":
    key = jax.random.PRNGKey(0)
    k_x, k_p = jax.random.split(key)

    x = jax.random.normal(k_x, (2, 4, 16, 16), jnp.float32)     # NCHW, like PyTorch
    params = init_params(k_p)
    kparams = prepare_kernel_params(params)                     # one-time layout prep

    fwd = jax.jit(net_wrapper_forward)
    projection, representation = fwd(x, kparams)
    jax.block_until_ready((projection, representation))

    assert projection.shape == (2, 16)
    assert representation.shape == (2, 32)
    assert bool(jnp.all(jnp.isfinite(projection)))
    assert bool(jnp.all(jnp.isfinite(representation)))

    # Numerical checks against pure-JAX references.
    ref_rep = reference_representation(x, params)
    assert jnp.allclose(representation, ref_rep, rtol=1e-2, atol=1e-2)
    ref_proj = reference_projection(representation, params)
    assert jnp.allclose(projection, ref_proj, rtol=2e-2, atol=2e-2)

    print("KERNEL_OK")
</pallas_src>

<mosaic_0001>
module attributes {stable_mosaic.version = 11 : i64} {
  func.func @kernel(%arg0: i32, %arg1: i32, %arg2: memref<1x1x182x4xf32, #tpu.memory_space<vmem>>, %arg3: memref<144x1xf32, #tpu.memory_space<vmem>>, %arg4: memref<36x128xf32, #tpu.memory_space<vmem>>, %arg5: memref<1x128xf32, #tpu.memory_space<vmem>>, %arg6: memref<128x128xf32, #tpu.memory_space<vmem>>, %arg7: memref<1x128xf32, #tpu.memory_space<vmem>>, %arg8: memref<1x128xf32, #tpu.memory_space<vmem>>, %arg9: memref<1x128xf32, #tpu.memory_space<vmem>>, %arg10: memref<128x128xf32, #tpu.memory_space<vmem>>, %arg11: memref<1x128xf32, #tpu.memory_space<vmem>>, %arg12: memref<2x128xf32, #tpu.memory_space<vmem>>, %arg13: memref<2x128xf32, #tpu.memory_space<vmem>>, %arg14: memref<2x128xf32, #tpu.memory_space<vmem>>) attributes {dimension_semantics = [#tpu.dimension_semantics<arbitrary>, #tpu.dimension_semantics<arbitrary>], iteration_bounds = array<i64: 2, 2>, scalar_prefetch = 0 : i64, scratch_operands = 1 : i64, tpu.core_type = #tpu.core_type<tc>, window_params = [{transform_indices = @transform_0, window_bounds = array<i64: 1, 1, 182, 4>}, {transform_indices = @transform_1, window_bounds = array<i64: 144, 1>}, {pipeline_mode = #tpu.pipeline_mode<synchronous>, transform_indices = @transform_2, window_bounds = array<i64: 36, 128>}, {pipeline_mode = #tpu.pipeline_mode<synchronous>, transform_indices = @transform_3, window_bounds = array<i64: 1, 128>}, {pipeline_mode = #tpu.pipeline_mode<synchronous>, transform_indices = @transform_4, window_bounds = array<i64: 128, 128>}, {pipeline_mode = #tpu.pipeline_mode<synchronous>, transform_indices = @transform_5, window_bounds = array<i64: 1, 128>}, {pipeline_mode = #tpu.pipeline_mode<synchronous>, transform_indices = @transform_6, window_bounds = array<i64: 1, 128>}, {pipeline_mode = #tpu.pipeline_mode<synchronous>, transform_indices = @transform_7, window_bounds = array<i64: 1, 128>}, {pipeline_mode = #tpu.pipeline_mode<synchronous>, transform_indices = @transform_8, window_bounds = array<i64: 128, 128>}, {pipeline_mode = #tpu.pipeline_mode<synchronous>, transform_indices = @transform_9, window_bounds = array<i64: 1, 128>}, {pipeline_mode = #tpu.pipeline_mode<synchronous>, transform_indices = @transform_10, window_bounds = array<i64: 2, 128>}, {pipeline_mode = #tpu.pipeline_mode<synchronous>, transform_indices = @transform_11, window_bounds = array<i64: 2, 128>}]} {
    %c0_i32 = arith.constant 0 : i32
    %0 = arith.cmpi eq, %arg0, %c0_i32 : i32
    %c0_i32_0 = arith.constant 0 : i32
    %1 = arith.cmpi eq, %arg1, %c0_i32_0 : i32
    %2 = arith.andi %0, %1 : i1
    %3 = arith.extui %2 : i1 to i32
    %c0_i32_1 = arith.constant 0 : i32
    %4 = arith.cmpi ne, %3, %c0_i32_1 : i32
    scf.if %4 {
      %cst_53 = arith.constant 0.000000e+00 : f32
      %79 = vector.broadcast %cst_53 : f32 to vector<2x128xf32>
      %c0_54 = arith.constant 0 : index
      %c0_55 = arith.constant 0 : index
      %80 = vector.load %arg14[%c0_54, %c0_55] : memref<2x128xf32, #tpu.memory_space<vmem>>, vector<2x128xf32>
      tpu.vector_store %arg14[%c0_54, %c0_55], %79 {strides = array<i32>} : memref<2x128xf32, #tpu.memory_space<vmem>>, vector<2x128xf32>,
    } else {
    }
    %c0 = arith.constant 0 : index
    %c0_2 = arith.constant 0 : index
    %5 = vector.load %arg4[%c0, %c0_2] : memref<36x128xf32, #tpu.memory_space<vmem>>, vector<36x128xf32>
    %cst = arith.constant 0.000000e+00 : f32
    %6 = vector.broadcast %cst : f32 to vector<144x128xf32>
    %c0_3 = arith.constant 0 : index
    %c0_4 = arith.constant 0 : index
    %c0_5 = arith.constant 0 : index
    %c0_6 = arith.constant 0 : index
    %7 = vector.load %arg2[%c0_3, %c0_4, %c0_5, %c0_6] : memref<1x1x182x4xf32, #tpu.memory_space<vmem>>, vector<1x1x144x4xf32>
    %8 = vector.shape_cast %7 : vector<1x1x144x4xf32> to vector<144x4xf32>
    %9 = vector.extract_strided_slice %5 {offsets = [0, 0], sizes = [4, 128], strides = [1, 1]} : vector<36x128xf32> to vector<4x128xf32>
    %cst_7 = arith.constant dense<0.000000e+00> : vector<144x128xf32>
    %10 = tpu.matmul %8, %9, %cst_7 {dimension_numbers = #tpu.dot_dimension_numbers<[1], [0], [0], [1], [0, 0, 1, 1], [], []>} : vector<144x4xf32>, vector<4x128xf32>, vector<144x128xf32> -> vector<144x128xf32>
    %11 = arith.addf %6, %10 : vector<144x128xf32>
    %c0_8 = arith.constant 0 : index
    %c0_9 = arith.constant 0 : index
    %c1 = arith.constant 1 : index
    %c0_10 = arith.constant 0 : index
    %12 = vector.load %arg2[%c0_8, %c0_9, %c1, %c0_10] : memref<1x1x182x4xf32, #tpu.memory_space<vmem>>, vector<1x1x144x4xf32>
    %13 = vector.shape_cast %12 : vector<1x1x144x4xf32> to vector<144x4xf32>
    %14 = vector.extract_strided_slice %5 {offsets = [4, 0], sizes = [4, 128], strides = [1, 1]} : vector<36x128xf32> to vector<4x128xf32>
    %cst_11 = arith.constant dense<0.000000e+00> : vector<144x128xf32>
    %15 = tpu.matmul %13, %14, %cst_11 {dimension_numbers = #tpu.dot_dimension_numbers<[1], [0], [0], [1], [0, 0, 1, 1], [], []>} : vector<144x4xf32>, vector<4x128xf32>, vector<144x128xf32> -> vector<144x128xf32>
    %16 = arith.addf %11, %15 : vector<144x128xf32>
    %c0_12 = arith.constant 0 : index
    %c0_13 = arith.constant 0 : index
    %c2 = arith.constant 2 : index
    %c0_14 = arith.constant 0 : index
    %17 = vector.load %arg2[%c0_12, %c0_13, %c2, %c0_14] : memref<1x1x182x4xf32, #tpu.memory_space<vmem>>, vector<1x1x144x4xf32>
    %18 = vector.shape_cast %17 : vector<1x1x144x4xf32> to vector<144x4xf32>
    %19 = vector.extract_strided_slice %5 {offsets = [8, 0], sizes = [4, 128], strides = [1, 1]} : vector<36x128xf32> to vector<4x128xf32>
    %cst_15 = arith.constant dense<0.000000e+00> : vector<144x128xf32>
    %20 = tpu.matmul %18, %19, %cst_15 {dimension_numbers = #tpu.dot_dimension_numbers<[1], [0], [0], [1], [0, 0, 1, 1], [], []>} : vector<144x4xf32>, vector<4x128xf32>, vector<144x128xf32> -> vector<144x128xf32>
    %21 = arith.addf %16, %20 : vector<144x128xf32>
    %c0_16 = arith.constant 0 : index
    %c0_17 = arith.constant 0 : index
    %c18 = arith.constant 18 : index
    %c0_18 = arith.constant 0 : index
    %22 = vector.load %arg2[%c0_16, %c0_17, %c18, %c0_18] : memref<1x1x182x4xf32, #tpu.memory_space<vmem>>, vector<1x1x144x4xf32>
    %23 = vector.shape_cast %22 : vector<1x1x144x4xf32> to vector<144x4xf32>
    %24 = vector.extract_strided_slice %5 {offsets = [12, 0], sizes = [4, 128], strides = [1, 1]} : vector<36x128xf32> to vector<4x128xf32>
    %cst_19 = arith.constant dense<0.000000e+00> : vector<144x128xf32>
    %25 = tpu.matmul %23, %24, %cst_19 {dimension_numbers = #tpu.dot_dimension_numbers<[1], [0], [0], [1], [0, 0, 1, 1], [], []>} : vector<144x4xf32>, vector<4x128xf32>, vector<144x128xf32> -> vector<144x128xf32>
    %26 = arith.addf %21, %25 : vector<144x128xf32>
    %c0_20 = arith.constant 0 : index
    %c0_21 = arith.constant 0 : index
    %c19 = arith.constant 19 : index
    %c0_22 = arith.constant 0 : index
    %27 = vector.load %arg2[%c0_20, %c0_21, %c19, %c0_22] : memref<1x1x182x4xf32, #tpu.memory_space<vmem>>, vector<1x1x144x4xf32>
    %28 = vector.shape_cast %27 : vector<1x1x144x4xf32> to vector<144x4xf32>
    %29 = vector.extract_strided_slice %5 {offsets = [16, 0], sizes = [4, 128], strides = [1, 1]} : vector<36x128xf32> to vector<4x128xf32>
    %cst_23 = arith.constant dense<0.000000e+00> : vector<144x128xf32>
    %30 = tpu.matmul %28, %29, %cst_23 {dimension_numbers = #tpu.dot_dimension_numbers<[1], [0], [0], [1], [0, 0, 1, 1], [], []>} : vector<144x4xf32>, vector<4x128xf32>, vector<144x128xf32> -> vector<144x128xf32>
    %31 = arith.addf %26, %30 : vector<144x128xf32>
    %c0_24 = arith.constant 0 : index
    %c0_25 = arith.constant 0 : index
    %c20 = arith.constant 20 : index
    %c0_26 = arith.constant 0 : index
    %32 = vector.load %arg2[%c0_24, %c0_25, %c20, %c0_26] : memref<1x1x182x4xf32, #tpu.memory_space<vmem>>, vector<1x1x144x4xf32>
    %33 = vector.shape_cast %32 : vector<1x1x144x4xf32> to vector<144x4xf32>
    %34 = vector.extract_strided_slice %5 {offsets = [20, 0], sizes = [4, 128], strides = [1, 1]} : vector<36x128xf32> to vector<4x128xf32>
    %cst_27 = arith.constant dense<0.000000e+00> : vector<144x128xf32>
    %35 = tpu.matmul %33, %34, %cst_27 {dimension_numbers = #tpu.dot_dimension_numbers<[1], [0], [0], [1], [0, 0, 1, 1], [], []>} : vector<144x4xf32>, vector<4x128xf32>, vector<144x128xf32> -> vector<144x128xf32>
    %36 = arith.addf %31, %35 : vector<144x128xf32>
    %c0_28 = arith.constant 0 : index
    %c0_29 = arith.constant 0 : index
    %c36 = arith.constant 36 : index
    %c0_30 = arith.constant 0 : index
    %37 = vector.load %arg2[%c0_28, %c0_29, %c36, %c0_30] : memref<1x1x182x4xf32, #tpu.memory_space<vmem>>, vector<1x1x144x4xf32>
    %38 = vector.shape_cast %37 : vector<1x1x144x4xf32> to vector<144x4xf32>
    %39 = vector.extract_strided_slice %5 {offsets = [24, 0], sizes = [4, 128], strides = [1, 1]} : vector<36x128xf32> to vector<4x128xf32>
    %cst_31 = arith.constant dense<0.000000e+00> : vector<144x128xf32>
    %40 = tpu.matmul %38, %39, %cst_31 {dimension_numbers = #tpu.dot_dimension_numbers<[1], [0], [0], [1], [0, 0, 1, 1], [], []>} : vector<144x4xf32>, vector<4x128xf32>, vector<144x128xf32> -> vector<144x128xf32>
    %41 = arith.addf %36, %40 : vector<144x128xf32>
    %c0_32 = arith.constant 0 : index
    %c0_33 = arith.constant 0 : index
    %c37 = arith.constant 37 : index
    %c0_34 = arith.constant 0 : index
    %42 = vector.load %arg2[%c0_32, %c0_33, %c37, %c0_34] : memref<1x1x182x4xf32, #tpu.memory_space<vmem>>, vector<1x1x144x4xf32>
    %43 = vector.shape_cast %42 : vector<1x1x144x4xf32> to vector<144x4xf32>
    %44 = vector.extract_strided_slice %5 {offsets = [28, 0], sizes = [4, 128], strides = [1, 1]} : vector<36x128xf32> to vector<4x128xf32>
    %cst_35 = arith.constant dense<0.000000e+00> : vector<144x128xf32>
    %45 = tpu.matmul %43, %44, %cst_35 {dimension_numbers = #tpu.dot_dimension_numbers<[1], [0], [0], [1], [0, 0, 1, 1], [], []>} : vector<144x4xf32>, vector<4x128xf32>, vector<144x128xf32> -> vector<144x128xf32>
    %46 = arith.addf %41, %45 : vector<144x128xf32>
    %c0_36 = arith.constant 0 : index
    %c0_37 = arith.constant 0 : index
    %c38 = arith.constant 38 : index
    %c0_38 = arith.constant 0 : index
    %47 = vector.load %arg2[%c0_36, %c0_37, %c38, %c0_38] : memref<1x1x182x4xf32, #tpu.memory_space<vmem>>, vector<1x1x144x4xf32>
    %48 = vector.shape_cast %47 : vector<1x1x144x4xf32> to vector<144x4xf32>
    %49 = vector.extract_strided_slice %5 {offsets = [32, 0], sizes = [4, 128], strides = [1, 1]} : vector<36x128xf32> to vector<4x128xf32>
    %cst_39 = arith.constant dense<0.000000e+00> : vector<144x128xf32>
    %50 = tpu.matmul %48, %49, %cst_39 {dimension_numbers = #tpu.dot_dimension_numbers<[1], [0], [0], [1], [0, 0, 1, 1], [], []>} : vector<144x4xf32>, vector<4x128xf32>, vector<144x128xf32> -> vector<144x128xf32>
    %51 = arith.addf %46, %50 : vector<144x128xf32>
    %c0_40 = arith.constant 0 : index
    %c0_41 = arith.constant 0 : index
    %52 = vector.load %arg5[%c0_40, %c0_41] : memref<1x128xf32, #tpu.memory_space<vmem>>, vector<1x128xf32>
    %53 = vector.broadcast %52 : vector<1x128xf32> to vector<144x128xf32>
    %54 = arith.addf %51, %53 : vector<144x128xf32>
    %cst_42 = arith.constant 0.000000e+00 : f32
    %55 = vector.broadcast %cst_42 : f32 to vector<144x128xf32>
    %56 = arith.maximumf %54, %55 : vector<144x128xf32>
    %c0_43 = arith.constant 0 : index
    %c0_44 = arith.constant 0 : index
    %57 = vector.load %arg3[%c0_43, %c0_44] : memref<144x1xf32, #tpu.memory_space<vmem>>, vector<144x1xf32>
    %58 = vector.broadcast %57 : vector<144x1xf32> to vector<144x128xf32>
    %59 = arith.mulf %56, %58 : vector<144x128xf32>
    %cst_45 = arith.constant dense<0.000000e+00> : vector<128xf32>
    %60 = vector.multi_reduction <add>, %59, %cst_45 [0] : vector<144x128xf32> to vector<128xf32>
    %61 = vector.shape_cast %60 : vector<128xf32> to vector<1x128xf32>
    %62 = tpu.iota {dimensions = array<i32: 0>} : vector<2x1xi32>
    %c0_46 = arith.constant 0 : index
    %c0_47 = arith.constant 0 : index
    %63 = vector.load %arg14[%c0_46, %c0_47] : memref<2x128xf32, #tpu.memory_space<vmem>>, vector<2x128xf32>
    %64 = vector.broadcast %arg0 : i32 to vector<2x1xi32>
    %65 = arith.cmpi eq, %62, %64 : vector<2x1xi32>
    %cst_48 = arith.constant 0.000000e+00 : f32
    %66 = vector.shape_cast %65 : vector<2x1xi1> to vector<2x1xi1>
    %67 = vector.broadcast %66 : vector<2x1xi1> to vector<2x128xi1>
    %68 = vector.shape_cast %61 : vector<1x128xf32> to vector<1x128xf32>
    %69 = vector.broadcast %68 : vector<1x128xf32> to vector<2x128xf32>
    %70 = vector.broadcast %cst_48 : f32 to vector<2x128xf32>
    %71 = arith.select %67, %69, %70 : vector<2x128xi1>, vector<2x128xf32>
    %72 = arith.addf %63, %71 : vector<2x128xf32>
    %c0_49 = arith.constant 0 : index
    %c0_50 = arith.constant 0 : index
    %73 = vector.load %arg14[%c0_49, %c0_50] : memref<2x128xf32, #tpu.memory_space<vmem>>, vector<2x128xf32>
    tpu.vector_store %arg14[%c0_49, %c0_50], %72 {strides = array<i32>} : memref<2x128xf32, #tpu.memory_space<vmem>>, vector<2x128xf32>,
    %c1_i32 = arith.constant 1 : i32
    %74 = arith.cmpi eq, %arg0, %c1_i32 : i32
    %c1_i32_51 = arith.constant 1 : i32
    %75 = arith.cmpi eq, %arg1, %c1_i32_51 : i32
    %76 = arith.andi %74, %75 : i1
    %77 = arith.extui %76 : i1 to i32
    %c0_i32_52 = arith.constant 0 : i32
    %78 = arith.cmpi ne, %77, %c0_i32_52 : i32
    scf.if %78 {
      %c0_53 = arith.constant 0 : index
      %c0_54 = arith.constant 0 : index
      %79 = vector.load %arg14[%c0_53, %c0_54] : memref<2x128xf32, #tpu.memory_space<vmem>>, vector<2x128xf32>
      %cst_55 = arith.constant 3.906250e-03 : f32
      %80 = vector.broadcast %cst_55 : f32 to vector<2x128xf32>
      %81 = arith.mulf %79, %80 : vector<2x128xf32>
      %c0_56 = arith.constant 0 : index
      %c0_57 = arith.constant 0 : index
      %82 = vector.load %arg13[%c0_56, %c0_57] : memref<2x128xf32, #tpu.memory_space<vmem>>, vector<2x128xf32>
      tpu.vector_store %arg13[%c0_56, %c0_57], %81 {strides = array<i32>} : memref<2x128xf32, #tpu.memory_space<vmem>>, vector<2x128xf32>,
      %c0_58 = arith.constant 0 : index
      %c0_59 = arith.constant 0 : index
      %83 = vector.load %arg6[%c0_58, %c0_59] : memref<128x128xf32, #tpu.memory_space<vmem>>, vector<128x128xf32>
      %cst_60 = arith.constant dense<0.000000e+00> : vector<2x128xf32>
      %84 = tpu.matmul %81, %83, %cst_60 {dimension_numbers = #tpu.dot_dimension_numbers<[1], [0], [0], [1], [0, 0, 1, 1], [], []>} : vector<2x128xf32>, vector<128x128xf32>, vector<2x128xf32> -> vector<2x128xf32>
      %c0_61 = arith.constant 0 : index
      %c0_62 = arith.constant 0 : index
      %85 = vector.load %arg7[%c0_61, %c0_62] : memref<1x128xf32, #tpu.memory_space<vmem>>, vector<1x128xf32>
      %86 = vector.broadcast %85 : vector<1x128xf32> to vector<2x128xf32>
      %87 = arith.addf %84, %86 : vector<2x128xf32>
      %cst_63 = arith.constant dense<0.000000e+00> : vector<128xf32>
      %88 = vector.multi_reduction <add>, %87, %cst_63 [0] : vector<2x128xf32> to vector<128xf32>
      %89 = vector.shape_cast %88 : vector<128xf32> to vector<1x128xf32>
      %cst_64 = arith.constant 2.000000e+00 : f32
      %90 = vector.broadcast %cst_64 : f32 to vector<1x128xf32>
      %91 = arith.divf %89, %90 : vector<1x128xf32>
      %92 = vector.broadcast %91 : vector<1x128xf32> to vector<2x128xf32>
      %93 = arith.subf %87, %92 : vector<2x128xf32>
      %94 = arith.mulf %93, %93 : vector<2x128xf32>
      %cst_65 = arith.constant dense<0.000000e+00> : vector<128xf32>
      %95 = vector.multi_reduction <add>, %94, %cst_65 [0] : vector<2x128xf32> to vector<128xf32>
      %96 = vector.shape_cast %95 : vector<128xf32> to vector<1x128xf32>
      %cst_66 = arith.constant 2.000000e+00 : f32
      %97 = vector.broadcast %cst_66 : f32 to vector<1x128xf32>
      %98 = arith.divf %96, %97 : vector<1x128xf32>
      %99 = vector.broadcast %91 : vector<1x128xf32> to vector<2x128xf32>
      %100 = arith.subf %87, %99 : vector<2x128xf32>
      %cst_67 = arith.constant 9.99999974E-6 : f32
      %101 = vector.broadcast %cst_67 : f32 to vector<1x128xf32>
      %102 = arith.addf %98, %101 : vector<1x128xf32>
      %103 = math.rsqrt %102 : vector<1x128xf32>
      %104 = vector.broadcast %103 : vector<1x128xf32> to vector<2x128xf32>
      %105 = arith.mulf %100, %104 : vector<2x128xf32>
      %c0_68 = arith.constant 0 : index
      %c0_69 = arith.constant 0 : index
      %106 = vector.load %arg8[%c0_68, %c0_69] : memref<1x128xf32, #tpu.memory_space<vmem>>, vector<1x128xf32>
      %107 = vector.broadcast %106 : vector<1x128xf32> to vector<2x128xf32>
      %108 = arith.mulf %105, %107 : vector<2x128xf32>
      %c0_70 = arith.constant 0 : index
      %c0_71 = arith.constant 0 : index
      %109 = vector.load %arg9[%c0_70, %c0_71] : memref<1x128xf32, #tpu.memory_space<vmem>>, vector<1x128xf32>
      %110 = vector.broadcast %109 : vector<1x128xf32> to vector<2x128xf32>
      %111 = arith.addf %108, %110 : vector<2x128xf32>
      %cst_72 = arith.constant 0.000000e+00 : f32
      %112 = vector.broadcast %cst_72 : f32 to vector<2x128xf32>
      %113 = arith.maximumf %111, %112 : vector<2x128xf32>
      %c0_73 = arith.constant 0 : index
      %c0_74 = arith.constant 0 : index
      %114 = vector.load %arg10[%c0_73, %c0_74] : memref<128x128xf32, #tpu.memory_space<vmem>>, vector<128x128xf32>
      %cst_75 = arith.constant dense<0.000000e+00> : vector<2x128xf32>
      %115 = tpu.matmul %113, %114, %cst_75 {dimension_numbers = #tpu.dot_dimension_numbers<[1], [0], [0], [1], [0, 0, 1, 1], [], []>} : vector<2x128xf32>, vector<128x128xf32>, vector<2x128xf32> -> vector<2x128xf32>
      %c0_76 = arith.constant 0 : index
      %c0_77 = arith.constant 0 : index
      %116 = vector.load %arg11[%c0_76, %c0_77] : memref<1x128xf32, #tpu.memory_space<vmem>>, vector<1x128xf32>
      %117 = vector.broadcast %116 : vector<1x128xf32> to vector<2x128xf32>
      %118 = arith.addf %115, %117 : vector<2x128xf32>
      %c0_78 = arith.constant 0 : index
      %c0_79 = arith.constant 0 : index
      %119 = vector.load %arg12[%c0_78, %c0_79] : memref<2x128xf32, #tpu.memory_space<vmem>>, vector<2x128xf32>
      tpu.vector_store %arg12[%c0_78, %c0_79], %118 {strides = array<i32>} : memref<2x128xf32, #tpu.memory_space<vmem>>, vector<2x128xf32>,
    } else {
    }
    return
  }
  func.func @transform_0(%arg0: i32, %arg1: i32) -> (i32, i32, i32, i32) {
    %c0_i32 = arith.constant 0 : i32
    %c0_i32_0 = arith.constant 0 : i32
    %c0_i32_1 = arith.constant 0 : i32
    return %arg0, %arg1, %c0_i32, %c0_i32_0 : i32, i32, i32, i32
  }
  func.func @transform_1(%arg0: i32, %arg1: i32) -> (i32, i32) {
    %c0_i32 = arith.constant 0 : i32
    %c0_i32_0 = arith.constant 0 : i32
    return %arg1, %c0_i32 : i32, i32
  }
  func.func @transform_2(%arg0: i32, %arg1: i32) -> (i32, i32) {
    %c0_i32 = arith.constant 0 : i32
    %c0_i32_0 = arith.constant 0 : i32
    %c0_i32_1 = arith.constant 0 : i32
    return %c0_i32, %c0_i32_0 : i32, i32
  }
  func.func @transform_3(%arg0: i32, %arg1: i32) -> (i32, i32) {
    %c0_i32 = arith.constant 0 : i32
    %c0_i32_0 = arith.constant 0 : i32
    %c0_i32_1 = arith.constant 0 : i32
    return %c0_i32, %c0_i32_0 : i32, i32
  }
  func.func @transform_4(%arg0: i32, %arg1: i32) -> (i32, i32) {
    %c0_i32 = arith.constant 0 : i32
    %c0_i32_0 = arith.constant 0 : i32
    %c0_i32_1 = arith.constant 0 : i32
    return %c0_i32, %c0_i32_0 : i32, i32
  }
  func.func @transform_5(%arg0: i32, %arg1: i32) -> (i32, i32) {
    %c0_i32 = arith.constant 0 : i32
    %c0_i32_0 = arith.constant 0 : i32
    %c0_i32_1 = arith.constant 0 : i32
    return %c0_i32, %c0_i32_0 : i32, i32
  }
  func.func @transform_6(%arg0: i32, %arg1: i32) -> (i32, i32) {
    %c0_i32 = arith.constant 0 : i32
    %c0_i32_0 = arith.constant 0 : i32
    %c0_i32_1 = arith.constant 0 : i32
    return %c0_i32, %c0_i32_0 : i32, i32
  }
  func.func @transform_7(%arg0: i32, %arg1: i32) -> (i32, i32) {
    %c0_i32 = arith.constant 0 : i32
    %c0_i32_0 = arith.constant 0 : i32
    %c0_i32_1 = arith.constant 0 : i32
    return %c0_i32, %c0_i32_0 : i32, i32
  }
  func.func @transform_8(%arg0: i32, %arg1: i32) -> (i32, i32) {
    %c0_i32 = arith.constant 0 : i32
    %c0_i32_0 = arith.constant 0 : i32
    %c0_i32_1 = arith.constant 0 : i32
    return %c0_i32, %c0_i32_0 : i32, i32
  }
  func.func @transform_9(%arg0: i32, %arg1: i32) -> (i32, i32) {
    %c0_i32 = arith.constant 0 : i32
    %c0_i32_0 = arith.constant 0 : i32
    %c0_i32_1 = arith.constant 0 : i32
    return %c0_i32, %c0_i32_0 : i32, i32
  }
  func.func @transform_10(%arg0: i32, %arg1: i32) -> (i32, i32) {
    %c0_i32 = arith.constant 0 : i32
    %c0_i32_0 = arith.constant 0 : i32
    %c0_i32_1 = arith.constant 0 : i32
    return %c0_i32, %c0_i32_0 : i32, i32
  }
  func.func @transform_11(%arg0: i32, %arg1: i32) -> (i32, i32) {
    %c0_i32 = arith.constant 0 : i32
    %c0_i32_0 = arith.constant 0 : i32
    %c0_i32_1 = arith.constant 0 : i32
    return %c0_i32, %c0_i32_0 : i32, i32
  }
}

</mosaic_0001>

<llo_original>
// kernel: net_wrapper_forward.1
$region0: #{net_wrapper_forward.1}
  #allocation0 [shape = 'u32[]', space=smem, size = 0x4, offset = 0x4, fixed_abs, tag = 'smem constant byte address 0x4 - core index']
  #allocation1 [shape = 'u32[144,128]{1,0:T(1,128)}', space=vmem, size = 0x12000, scoped, tag = 'internal scratch']
  #allocation2 [shape = 'f32[2,128]{1,0:T(2,128)}', space=vmem, size = 0x400, scoped, tag = 'scratch operand']
  %s0 = inlined_call_operand.vmem [shape: f32[2,2,182,4], index: 0, kind: input, shape index: {}]
  %s1 = inlined_call_operand.vmem [shape: f32[288,1], index: 1, kind: input, shape index: {}]
  %s2 = inlined_call_operand.vmem [shape: f32[36,128], index: 2, kind: input, shape index: {}]
  %s3 = inlined_call_operand.vmem [shape: f32[1,128], index: 3, kind: input, shape index: {}]
  %s4 = inlined_call_operand.vmem [shape: f32[128,128], index: 4, kind: input, shape index: {}]
  %s5 = inlined_call_operand.vmem [shape: f32[1,128], index: 5, kind: input, shape index: {}]
  %s6 = inlined_call_operand.vmem [shape: f32[1,128], index: 6, kind: input, shape index: {}]
  %s7 = inlined_call_operand.vmem [shape: f32[1,128], index: 7, kind: input, shape index: {}]
  %s8 = inlined_call_operand.vmem [shape: f32[128,128], index: 8, kind: input, shape index: {}]
  %s9 = inlined_call_operand.vmem [shape: f32[1,128], index: 9, kind: input, shape index: {}]
  %s10 = inlined_call_operand.hbm [shape: f32[2,128], index: 10, kind: output, shape index: {0}]
  %s11 = inlined_call_operand.hbm [shape: f32[2,128], index: 11, kind: output, shape index: {1}]
  %12 = xla_tuple %s10, %s11
  %s13 = sld [smem:[#allocation0]]
  $region89: #{net_wrapper_forward.1} parent=0
    _
  %s15 = ssub.s32 1, %s13
  %s16 = scalar_select 0, %s15, %s13
  $region1: #{net_wrapper_forward.1} parent=0
    #allocation3 [shape = 'u8[1024]{0}', space=vmem, size = 0x400, scoped, tag = 'output window, operand 0, single buffered']
    #allocation4 [shape = 's32[2]{0}', space=sflag, size = 0x8, scoped, tag = 'scoped memory for net_wrapper_forward.1']
    #allocation5 [shape = 'u8[1024]{0}', space=vmem, size = 0x400, scoped, tag = 'output window, operand 1, single buffered']
    #allocation6 [shape = 's32[1]{0}', space=sflag, size = 0x4, scoped, tag = 'scoped memory for net_wrapper_forward.1']
    %17 = vsyncpa [#allocation4], 0
    %18 = vsyncpa [#allocation6], 0
    loop: start=0, step=1, limit=6
    $region2: #{net_wrapper_forward.1} parent=1 // loop_pre_header
      _
    $region3: #{net_wrapper_forward.1} parent=1 // loop_header
      %s20 = sphi 0, %s24
      %p21 = scmp.ge.s32.totalorder %s20, 6
      %s27 = sphi 0, %s39
      %s28 = sphi 0, %s35
      %s29 = sphi 0, %s27
      %s30 = sphi 0, %s28
      %s31 = sphi 0, %s29
      %s32 = sphi 0, %s30
      %s44 = sphi 0, %s46
      %s47 = sphi 0, %s44
      %s48 = sphi 0, %s47
      %s64 = sphi 0, %s48
      %s70 = sphi 0, %s72
      %s73 = sphi 0, %s70
      %s74 = sphi 0, %s73
      %s90 = sphi 0, %s74
      %s94 = sphi 0, %s94
      %s96 = sphi 0, %s94
      %s97 = sphi 0, %s96
      %s111 = sphi 0, %s97
      %s115 = sphi 0, %s115
      %s117 = sphi 0, %s115
      %s118 = sphi 0, %s117
      %s132 = sphi 0, %s118
      %s136 = sphi 0, %s136
      %s138 = sphi 0, %s136
      %s139 = sphi 0, %s138
      %s153 = sphi 0, %s139
      %s157 = sphi 0, %s157
      %s159 = sphi 0, %s157
      %s160 = sphi 0, %s159
      %s174 = sphi 0, %s160
      %s178 = sphi 0, %s178
      %s180 = sphi 0, %s178
      %s181 = sphi 0, %s180
      %s195 = sphi 0, %s181
      %s199 = sphi 0, %s199
      %s201 = sphi 0, %s199
      %s202 = sphi 0, %s201
      %s216 = sphi 0, %s202
      %s220 = sphi 0, %s220
      %s222 = sphi 0, %s220
      %s223 = sphi 0, %s222
      %s237 = sphi 0, %s223
      %s241 = sphi 0, %s241
      %s243 = sphi 0, %s241
      %s244 = sphi 0, %s243
      %s258 = sphi 0, %s244
      %s262 = sphi 0, %s262
      %s264 = sphi 0, %s262
      %s265 = sphi 0, %s264
      %s279 = sphi 0, %s265
      %s283 = sphi 0, %s283
      %s285 = sphi 0, %s283
      %s286 = sphi 0, %s285
      %s300 = sphi 0, %s286
    $region4: #{net_wrapper_forward.1} parent=1 // loop_header_branch
      %23 = sbr.rel (%p21) target = $region8
    $region5: #{net_wrapper_forward.1} parent=1 // loop_body
      %s25 = ssub.s32 %s20, 1
      %s26 = ssub.s32 %s20, 2
      %s33 = sadd.s32 1, %s28
      %p34 = scmp.ge.s32.totalorder %s33, 2
      %s35 = scalar_select %p34, 0, %s33
      %s36 = sadd.s32 1, %s27
      %s37 = scalar_select %p34, %s36, %s27
      %p38 = scmp.ge.s32.totalorder %s37, 2
      %s39 = scalar_select %p38, 0, %s37
      %s40 = ssub.s32 %s27, %s39
      %s41 = ssub.s32 %s28, %s35
      %s42 = sor.u32 %s40, %s41
      %p43 = scmp.eq.s32.totalorder %s42, 0
      %s45 = sadd.s32 %s44, 1
      %s46 = scalar_select %p43, %s44, %s45
      %p49 = pneg %p43
      %p50 = scmp.eq.s32.totalorder %s20, 3
      %p51 = por %p49, %p50
      %p52 = scmp.ne.s32.totalorder %s44, %s47
      %p53 = scmp.eq.s32.totalorder %s20, 0
      %p54 = por %p52, %p53
      %p55 = scmp.ne.s32.totalorder %s44, %s47
      %p56 = scmp.eq.s32.totalorder %s25, 3
      %p57 = por %p55, %p56
      %p58 = scmp.ne.s32.totalorder %s47, %s48
      %p59 = scmp.eq.s32.totalorder %s25, 0
      %p60 = por %p58, %p59
      %p61 = scmp.ne.s32.totalorder %s47, %s48
      %p62 = scmp.eq.s32.totalorder %s26, 3
      %p63 = por %p61, %p62
      %p65 = scmp.ne.s32.totalorder %s48, %s64
      %p66 = scmp.eq.s32.totalorder %s26, 0
      %p67 = por %p65, %p66
      %s68 = ssub.s32 %s28, %s35
      %p69 = scmp.eq.s32.totalorder %s68, 0
      %s71 = sadd.s32 %s70, 1
      %s72 = scalar_select %p69, %s70, %s71
      %p75 = pneg %p69
      %p76 = scmp.eq.s32.totalorder %s20, 3
      %p77 = por %p75, %p76
      %p78 = scmp.ne.s32.totalorder %s70, %s73
      %p79 = scmp.eq.s32.totalorder %s20, 0
      %p80 = por %p78, %p79
      %p81 = scmp.ne.s32.totalorder %s70, %s73
      %p82 = scmp.eq.s32.totalorder %s25, 3
      %p83 = por %p81, %p82
      %p84 = scmp.ne.s32.totalorder %s73, %s74
      %p85 = scmp.eq.s32.totalorder %s25, 0
      %p86 = por %p84, %p85
      %p87 = scmp.ne.s32.totalorder %s73, %s74
      %p88 = scmp.eq.s32.totalorder %s26, 3
      %p89 = por %p87, %p88
      %p91 = scmp.ne.s32.totalorder %s74, %s90
      %p92 = scmp.eq.s32.totalorder %s26, 0
      %p93 = por %p91, %p92
      %s95 = sadd.s32 %s94, 1
      %p98 = scmp.eq.s32.totalorder %s20, 3
      %p99 = scmp.ne.s32.totalorder %s94, %s96
      %p100 = scmp.eq.s32.totalorder %s20, 0
      %p101 = por %p99, %p100
      %p102 = scmp.ne.s32.totalorder %s94, %s96
      %p103 = scmp.eq.s32.totalorder %s25, 3
      %p104 = por %p102, %p103
      %p105 = scmp.ne.s32.totalorder %s96, %s97
      %p106 = scmp.eq.s32.totalorder %s25, 0
      %p107 = por %p105, %p106
      %p108 = scmp.ne.s32.totalorder %s96, %s97
      %p109 = scmp.eq.s32.totalorder %s26, 3
      %p110 = por %p108, %p109
      %p112 = scmp.ne.s32.totalorder %s97, %s111
      %p113 = scmp.eq.s32.totalorder %s26, 0
      %p114 = por %p112, %p113
      %s116 = sadd.s32 %s115, 1
      %p119 = scmp.eq.s32.totalorder %s20, 3
      %p120 = scmp.ne.s32.totalorder %s115, %s117
      %p121 = scmp.eq.s32.totalorder %s20, 0
      %p122 = por %p120, %p121
      %p123 = scmp.ne.s32.totalorder %s115, %s117
      %p124 = scmp.eq.s32.totalorder %s25, 3
      %p125 = por %p123, %p124
      %p126 = scmp.ne.s32.totalorder %s117, %s118
      %p127 = scmp.eq.s32.totalorder %s25, 0
      %p128 = por %p126, %p127
      %p129 = scmp.ne.s32.totalorder %s117, %s118
      %p130 = scmp.eq.s32.totalorder %s26, 3
      %p131 = por %p129, %p130
      %p133 = scmp.ne.s32.totalorder %s118, %s132
      %p134 = scmp.eq.s32.totalorder %s26, 0
      %p135 = por %p133, %p134
      %s137 = sadd.s32 %s136, 1
      %p140 = scmp.eq.s32.totalorder %s20, 3
      %p141 = scmp.ne.s32.totalorder %s136, %s138
      %p142 = scmp.eq.s32.totalorder %s20, 0
      %p143 = por %p141, %p142
      %p144 = scmp.ne.s32.totalorder %s136, %s138
      %p145 = scmp.eq.s32.totalorder %s25, 3
      %p146 = por %p144, %p145
      %p147 = scmp.ne.s32.totalorder %s138, %s139
      %p148 = scmp.eq.s32.totalorder %s25, 0
      %p149 = por %p147, %p148
      %p150 = scmp.ne.s32.totalorder %s138, %s139
      %p151 = scmp.eq.s32.totalorder %s26, 3
      %p152 = por %p150, %p151
      %p154 = scmp.ne.s32.totalorder %s139, %s153
      %p155 = scmp.eq.s32.totalorder %s26, 0
      %p156 = por %p154, %p155
      %s158 = sadd.s32 %s157, 1
      %p161 = scmp.eq.s32.totalorder %s20, 3
      %p162 = scmp.ne.s32.totalorder %s157, %s159
      %p163 = scmp.eq.s32.totalorder %s20, 0
      %p164 = por %p162, %p163
      %p165 = scmp.ne.s32.totalorder %s157, %s159
      %p166 = scmp.eq.s32.totalorder %s25, 3
      %p167 = por %p165, %p166
      %p168 = scmp.ne.s32.totalorder %s159, %s160
      %p169 = scmp.eq.s32.totalorder %s25, 0
      %p170 = por %p168, %p169
      %p171 = scmp.ne.s32.totalorder %s159, %s160
      %p172 = scmp.eq.s32.totalorder %s26, 3
      %p173 = por %p171, %p172
      %p175 = scmp.ne.s32.totalorder %s160, %s174
      %p176 = scmp.eq.s32.totalorder %s26, 0
      %p177 = por %p175, %p176
      %s179 = sadd.s32 %s178, 1
      %p182 = scmp.eq.s32.totalorder %s20, 3
      %p183 = scmp.ne.s32.totalorder %s178, %s180
      %p184 = scmp.eq.s32.totalorder %s20, 0
      %p185 = por %p183, %p184
      %p186 = scmp.ne.s32.totalorder %s178, %s180
      %p187 = scmp.eq.s32.totalorder %s25, 3
      %p188 = por %p186, %p187
      %p189 = scmp.ne.s32.totalorder %s180, %s181
      %p190 = scmp.eq.s32.totalorder %s25, 0
      %p191 = por %p189, %p190
      %p192 = scmp.ne.s32.totalorder %s180, %s181
      %p193 = scmp.eq.s32.totalorder %s26, 3
      %p194 = por %p192, %p193
      %p196 = scmp.ne.s32.totalorder %s181, %s195
      %p197 = scmp.eq.s32.totalorder %s26, 0
      %p198 = por %p196, %p197
      %s200 = sadd.s32 %s199, 1
      %p203 = scmp.eq.s32.totalorder %s20, 3
      %p204 = scmp.ne.s32.totalorder %s199, %s201
      %p205 = scmp.eq.s32.totalorder %s20, 0
      %p206 = por %p204, %p205
      %p207 = scmp.ne.s32.totalorder %s199, %s201
      %p208 = scmp.eq.s32.totalorder %s25, 3
      %p209 = por %p207, %p208
      %p210 = scmp.ne.s32.totalorder %s201, %s202
      %p211 = scmp.eq.s32.totalorder %s25, 0
      %p212 = por %p210, %p211
      %p213 = scmp.ne.s32.totalorder %s201, %s202
      %p214 = scmp.eq.s32.totalorder %s26, 3
      %p215 = por %p213, %p214
      %p217 = scmp.ne.s32.totalorder %s202, %s216
      %p218 = scmp.eq.s32.totalorder %s26, 0
      %p219 = por %p217, %p218
      %s221 = sadd.s32 %s220, 1
      %p224 = scmp.eq.s32.totalorder %s20, 3
      %p225 = scmp.ne.s32.totalorder %s220, %s222
      %p226 = scmp.eq.s32.totalorder %s20, 0
      %p227 = por %p225, %p226
      %p228 = scmp.ne.s32.totalorder %s220, %s222
      %p229 = scmp.eq.s32.totalorder %s25, 3
      %p230 = por %p228, %p229
      %p231 = scmp.ne.s32.totalorder %s222, %s223
      %p232 = scmp.eq.s32.totalorder %s25, 0
      %p233 = por %p231, %p232
      %p234 = scmp.ne.s32.totalorder %s222, %s223
      %p235 = scmp.eq.s32.totalorder %s26, 3
      %p236 = por %p234, %p235
      %p238 = scmp.ne.s32.totalorder %s223, %s237
      %p239 = scmp.eq.s32.totalorder %s26, 0
      %p240 = por %p238, %p239
      %s242 = sadd.s32 %s241, 1
      %p245 = scmp.eq.s32.totalorder %s20, 3
      %p246 = scmp.ne.s32.totalorder %s241, %s243
      %p247 = scmp.eq.s32.totalorder %s20, 0
      %p248 = por %p246, %p247
      %p249 = scmp.ne.s32.totalorder %s241, %s243
      %p250 = scmp.eq.s32.totalorder %s25, 3
      %p251 = por %p249, %p250
      %p252 = scmp.ne.s32.totalorder %s243, %s244
      %p253 = scmp.eq.s32.totalorder %s25, 0
      %p254 = por %p252, %p253
      %p255 = scmp.ne.s32.totalorder %s243, %s244
      %p256 = scmp.eq.s32.totalorder %s26, 3
      %p257 = por %p255, %p256
      %p259 = scmp.ne.s32.totalorder %s244, %s258
      %p260 = scmp.eq.s32.totalorder %s26, 0
      %p261 = por %p259, %p260
      %s263 = sadd.s32 %s262, 1
      %p266 = scmp.eq.s32.totalorder %s20, 3
      %p267 = scmp.ne.s32.totalorder %s262, %s264
      %p268 = scmp.eq.s32.totalorder %s20, 0
      %p269 = por %p267, %p268
      %p270 = scmp.ne.s32.totalorder %s262, %s264
      %p271 = scmp.eq.s32.totalorder %s25, 3
      %p272 = por %p270, %p271
      %p273 = scmp.ne.s32.totalorder %s264, %s265
      %p274 = scmp.eq.s32.totalorder %s25, 0
      %p275 = por %p273, %p274
      %p276 = scmp.ne.s32.totalorder %s264, %s265
      %p277 = scmp.eq.s32.totalorder %s26, 3
      %p278 = por %p276, %p277
      %p280 = scmp.ne.s32.totalorder %s265, %s279
      %p281 = scmp.eq.s32.totalorder %s26, 0
      %p282 = por %p280, %p281
      %s284 = sadd.s32 %s283, 1
      %p287 = scmp.eq.s32.totalorder %s20, 3
      %p288 = scmp.ne.s32.totalorder %s283, %s285
      %p289 = scmp.eq.s32.totalorder %s20, 0
      %p290 = por %p288, %p289
      %p291 = scmp.ne.s32.totalorder %s283, %s285
      %p292 = scmp.eq.s32.totalorder %s25, 3
      %p293 = por %p291, %p292
      %p294 = scmp.ne.s32.totalorder %s285, %s286
      %p295 = scmp.eq.s32.totalorder %s25, 0
      %p296 = por %p294, %p295
      %p297 = scmp.ne.s32.totalorder %s285, %s286
      %p298 = scmp.eq.s32.totalorder %s26, 3
      %p299 = por %p297, %p298
      %p301 = scmp.ne.s32.totalorder %s286, %s300
      %p302 = scmp.eq.s32.totalorder %s26, 0
      %p303 = por %p301, %p302
      %p304 = scmp.le.s32.totalorder 1, %s20
      %p305 = scmp.lt.s32.totalorder %s20, 5
      %p306 = pnand %p304, %p305
      %p307 = pneg %p306
      // Predicated region
      $region9: #{net_wrapper_forward.1} parent=5 // pred_check
        _
      $region10: #{net_wrapper_forward.1} parent=5 // pred_check_branch
        %309 = sbr.rel (%p306) target = $region12
      $region11: #{net_wrapper_forward.1} parent=5 // pred_region
        %s310 = ssub.s32 %s20, 1
        // Predicated region
        $region13: #{net_wrapper_forward.1} parent=11 // pred_check
          %p311 = pneg %p107
        $region14: #{net_wrapper_forward.1} parent=11 // pred_check_branch
          %313 = sbr.rel (%p311) target = $region16
        $region15: #{net_wrapper_forward.1} parent=11 // pred_region
          _
        $region16: #{net_wrapper_forward.1} parent=11 // pred_fallthru
          _
        // Predicated region
        $region17: #{net_wrapper_forward.1} parent=11 // pred_check
          %p314 = pneg %p128
        $region18: #{net_wrapper_forward.1} parent=11 // pred_check_branch
          %316 = sbr.rel (%p314) target = $region20
        $region19: #{net_wrapper_forward.1} parent=11 // pred_region
          _
        $region20: #{net_wrapper_forward.1} parent=11 // pred_fallthru
          _
        // Predicated region
        $region21: #{net_wrapper_forward.1} parent=11 // pred_check
          %p317 = pneg %p149
        $region22: #{net_wrapper_forward.1} parent=11 // pred_check_branch
          %319 = sbr.rel (%p317) target = $region24
        $region23: #{net_wrapper_forward.1} parent=11 // pred_region
          _
        $region24: #{net_wrapper_forward.1} parent=11 // pred_fallthru
          _
        // Predicated region
        $region25: #{net_wrapper_forward.1} parent=11 // pred_check
          %p320 = pneg %p170
        $region26: #{net_wrapper_forward.1} parent=11 // pred_check_branch
          %322 = sbr.rel (%p320) target = $region28
        $region27: #{net_wrapper_forward.1} parent=11 // pred_region
          _
        $region28: #{net_wrapper_forward.1} parent=11 // pred_fallthru
          _
        // Predicated region
        $region29: #{net_wrapper_forward.1} parent=11 // pred_check
          %p323 = pneg %p191
        $region30: #{net_wrapper_forward.1} parent=11 // pred_check_branch
          %325 = sbr.rel (%p323) target = $region32
        $region31: #{net_wrapper_forward.1} parent=11 // pred_region
          _
        $region32: #{net_wrapper_forward.1} parent=11 // pred_fallthru
          _
        // Predicated region
        $region33: #{net_wrapper_forward.1} parent=11 // pred_check
          %p326 = pneg %p212
        $region34: #{net_wrapper_forward.1} parent=11 // pred_check_branch
          %328 = sbr.rel (%p326) target = $region36
        $region35: #{net_wrapper_forward.1} parent=11 // pred_region
          _
        $region36: #{net_wrapper_forward.1} parent=11 // pred_fallthru
          _
        // Predicated region
        $region37: #{net_wrapper_forward.1} parent=11 // pred_check
          %p329 = pneg %p233
        $region38: #{net_wrapper_forward.1} parent=11 // pred_check_branch
          %331 = sbr.rel (%p329) target = $region40
        $region39: #{net_wrapper_forward.1} parent=11 // pred_region
          _
        $region40: #{net_wrapper_forward.1} parent=11 // pred_fallthru
          _
        // Predicated region
        $region41: #{net_wrapper_forward.1} parent=11 // pred_check
          %p332 = pneg %p254
        $region42: #{net_wrapper_forward.1} parent=11 // pred_check_branch
          %334 = sbr.rel (%p332) target = $region44
        $region43: #{net_wrapper_forward.1} parent=11 // pred_region
          _
        $region44: #{net_wrapper_forward.1} parent=11 // pred_fallthru
          _
      $region12: #{net_wrapper_forward.1} parent=5 // pred_fallthru
        _
      %p335 = scmp.lt.s32.totalorder %s20, 4
      // Predicated region
      $region45: #{net_wrapper_forward.1} parent=5 // pred_check
        %p336 = pneg %p335
      $region46: #{net_wrapper_forward.1} parent=5 // pred_check_branch
        %338 = sbr.rel (%p336) target = $region48
      $region47: #{net_wrapper_forward.1} parent=5 // pred_region
        // Predicated region
        $region49: #{net_wrapper_forward.1} parent=47 // pred_check
          %p339 = pneg %p54
        $region50: #{net_wrapper_forward.1} parent=47 // pred_check_branch
          %341 = sbr.rel (%p339) target = $region52
        $region51: #{net_wrapper_forward.1} parent=47 // pred_region
          %p342 = scmp.lt.s32.totalorder %s27, 1
          %s343 = scalar_select %p342, %s27, 1
          %p344 = scmp.lt.s32.totalorder %s28, 1
          %s345 = scalar_select %p344, %s28, 1
          %s346 = smul.addr %s345, 23
          %s347 = smul.addr %s343, 46
          %s348 = sadd.s32 %s346, %s347
          %s349 = smul.addr %s348, 8
          %s350 = scalar_lea.vmem %s0, %s349
        $region52: #{net_wrapper_forward.1} parent=47 // pred_fallthru
          _
        // Predicated region
        $region53: #{net_wrapper_forward.1} parent=47 // pred_check
          %p351 = pneg %p80
        $region54: #{net_wrapper_forward.1} parent=47 // pred_check_branch
          %353 = sbr.rel (%p351) target = $region56
        $region55: #{net_wrapper_forward.1} parent=47 // pred_region
          %s354 = smul.u32 18, %s28
          %p355 = scmp.lt.s32.totalorder %s354, 35
          %s356 = scalar_select %p355, %s354, 35
          %s357 = smul.addr %s356, 8
          %s358 = scalar_lea.vmem %s1, %s357
          %s359 = smul.u32 18, %s28
        $region56: #{net_wrapper_forward.1} parent=47 // pred_fallthru
          _
      $region48: #{net_wrapper_forward.1} parent=5 // pred_fallthru
        _
      %p360 = scmp.le.s32.totalorder 1, %s20
      %p361 = scmp.lt.s32.totalorder %s20, 5
      %p362 = pnand %p360, %p361
      %p363 = pneg %p362
      // Predicated region
      $region57: #{net_wrapper_forward.1} parent=5 // pred_check
        _
      $region58: #{net_wrapper_forward.1} parent=5 // pred_check_branch
        %365 = sbr.rel (%p362) target = $region60
      $region59: #{net_wrapper_forward.1} parent=5 // pred_region
        %s366 = ssub.s32 %s20, 1
        %p367 = scmp.lt.s32.totalorder %s29, 1
        %s368 = scalar_select %p367, %s29, 1
        %p369 = scmp.lt.s32.totalorder %s30, 1
        %s370 = scalar_select %p369, %s30, 1
        %s371 = smul.addr %s370, 23
        %s372 = smul.addr %s368, 46
        %s373 = sadd.s32 %s371, %s372
        %s374 = smul.addr %s373, 8
        %s375 = scalar_lea.vmem %s0, %s374
        %p376 = pneg %p60
        %p377 = pneg %p57
        %s378 = smul.u32 18, %s30
        %p379 = scmp.lt.s32.totalorder %s378, 35
        %s380 = scalar_select %p379, %s378, 35
        %s381 = smul.addr %s380, 8
        %s382 = scalar_lea.vmem %s1, %s381
        %p383 = pneg %p86
        %p384 = pneg %p83
        %p385 = pneg %p107
        %p386 = pneg %p104
        %p387 = pneg %p128
        %p388 = pneg %p125
        %p389 = pneg %p149
        %p390 = pneg %p146
        %p391 = pneg %p170
        %p392 = pneg %p167
        %p393 = pneg %p191
        %p394 = pneg %p188
        %p395 = pneg %p212
        %p396 = pneg %p209
        %p397 = pneg %p233
        %p398 = pneg %p230
        %p399 = pneg %p254
        %p400 = pneg %p251
        %p401 = pneg %p275
        %p402 = pneg %p272
        %p403 = pneg %p296
        %p404 = pneg %p293
        %p405 = scmp.lt.s32.totalorder %s29, 1
        %s406 = scalar_select %p405, %s29, 1
        %p407 = scmp.lt.s32.totalorder %s30, 1
        %s408 = scalar_select %p407, %s30, 1
        %s409 = smul.addr %s408, 23
        %s410 = smul.addr %s406, 46
        %s411 = sadd.s32 %s409, %s410
        %s412 = smul.addr %s411, 8
        %s413 = scalar_lea.vmem %s0, %s412
        %s414 = smul.u32 18, %s30
        %p415 = scmp.lt.s32.totalorder %s414, 35
        %s416 = scalar_select %p415, %s414, 35
        %s417 = smul.addr %s416, 8
        %s418 = scalar_lea.vmem %s1, %s417
        %s419 = smul.u32 18, %s30
        %p420 = scmp.eq.s32.totalorder %s29, 0
        %p421 = scmp.eq.s32.totalorder %s30, 0
        %p422 = pnand %p420, %p421
        %p423 = pneg %p422
        // Predicated region
        $region61: #{net_wrapper_forward.1} parent=59 // pred_check
          _
        $region62: #{net_wrapper_forward.1} parent=59 // pred_check_branch
          %425 = sbr.rel (%p422) target = $region64
        $region63: #{net_wrapper_forward.1} parent=59 // pred_region
          %426 = vst [vmem:[#allocation2] sm:$0x3] 0.0
        $region64: #{net_wrapper_forward.1} parent=59 // pred_fallthru
          _
        %v427 = vld [vmem:[%s2] sm:$0xff]
        %v428 = vld [vmem:[%s2 + $0x8] sm:$0xff]
        %v429 = vld [vmem:[%s2 + $0x10] sm:$0xff]
        %v430 = vld [vmem:[%s2 + $0x18] sm:$0xff]
        %v431 = vld [vmem:[%s2 + $0x20] sm:$0xf]
        %v432 = vld [vmem:[%s413] sm:$0xff]
        %v433 = vld [vmem:[%s413 + $0x8] sm:$0xff]
        %v434 = vld [vmem:[%s413 + $0x10] sm:$0xff]
        %v435 = vld [vmem:[%s413 + $0x18] sm:$0xff]
        %v436 = vld [vmem:[%s413 + $0x20] sm:$0xff]
        %v437 = vld [vmem:[%s413 + $0x28] sm:$0xff]
        %v438 = vld [vmem:[%s413 + $0x30] sm:$0xff]
        %v439 = vld [vmem:[%s413 + $0x38] sm:$0xff]
        %v440 = vld [vmem:[%s413 + $0x40] sm:$0xff]
        %v441 = vld [vmem:[%s413 + $0x48] sm:$0xff]
        %v442 = vld [vmem:[%s413 + $0x50] sm:$0xff]
        %v443 = vld [vmem:[%s413 + $0x58] sm:$0xff]
        %v444 = vld [vmem:[%s413 + $0x60] sm:$0xff]
        %v445 = vld [vmem:[%s413 + $0x68] sm:$0xff]
        %v446 = vld [vmem:[%s413 + $0x70] sm:$0xff]
        %v447 = vld [vmem:[%s413 + $0x78] sm:$0xff]
        %v448 = vld [vmem:[%s413 + $0x80] sm:$0xff]
        %v449 = vld [vmem:[%s413 + $0x88] sm:$0xff]
        %v450 = vld [vmem:[%s413 + $0x1] sm:$0xff]
        %v451 = vld [vmem:[%s413 + $0x9] sm:$0xff]
        %v452 = vld [vmem:[%s413 + $0x11] sm:$0xff]
        %v453 = vld [vmem:[%s413 + $0x19] sm:$0xff]
        %v454 = vld [vmem:[%s413 + $0x21] sm:$0xff]
        %v455 = vld [vmem:[%s413 + $0x29] sm:$0xff]
        %v456 = vld [vmem:[%s413 + $0x31] sm:$0xff]
        %v457 = vld [vmem:[%s413 + $0x39] sm:$0xff]
        %v458 = vld [vmem:[%s413 + $0x41] sm:$0xff]
        %v459 = vld [vmem:[%s413 + $0x49] sm:$0xff]
        %v460 = vld [vmem:[%s413 + $0x51] sm:$0xff]
        %v461 = vld [vmem:[%s413 + $0x59] sm:$0xff]
        %v462 = vld [vmem:[%s413 + $0x61] sm:$0xff]
        %v463 = vld [vmem:[%s413 + $0x69] sm:$0xff]
        %v464 = vld [vmem:[%s413 + $0x71] sm:$0xff]
        %v465 = vld [vmem:[%s413 + $0x79] sm:$0xff]
        %v466 = vld [vmem:[%s413 + $0x81] sm:$0xff]
        %v467 = vld [vmem:[%s413 + $0x89] sm:$0xff]
        %v469 = vrot.slane %v427, 4
        %vm470 = vcmask 31744
        %v472 = vsel %vm470, %v450, 0
        %v475 = vsel %vm470, %v451, 0
        %v478 = vsel %vm470, %v452, 0
        %v481 = vsel %vm470, %v453, 0
        %v484 = vsel %vm470, %v454, 0
        %v487 = vsel %vm470, %v455, 0
        %v490 = vsel %vm470, %v456, 0
        %v493 = vsel %vm470, %v457, 0
        %v496 = vsel %vm470, %v458, 0
        %v499 = vsel %vm470, %v459, 0
        %v502 = vsel %vm470, %v460, 0
        %v505 = vsel %vm470, %v461, 0
        %v508 = vsel %vm470, %v462, 0
        %v511 = vsel %vm470, %v463, 0
        %v514 = vsel %vm470, %v464, 0
        %v517 = vsel %vm470, %v465, 0
        %v520 = vsel %vm470, %v466, 0
        %v523 = vsel %vm470, %v467, 0
        %vm525 = vcmask 1043456
        %v526 = vsel %vm525, %v469, 0
        %528 = vmatprep.subr.mxu0 0.0
        %529 = vmatpush1.msra.mxu0 %v526
        %530 = vmatprep.subr.mxu0 0.0
        %531 = vmatpush1.msra.mxu0 0.0
        %532 = vmatprep.subr.mxu0 0.0
        %533 = vmatpush1.msra.mxu0 0.0
        %534 = vmatprep.subr.mxu0 0.0
        %535 = vmatpush1.msra.mxu0 0.0
        %536 = vmatprep.subr.mxu0 0.0
        %537 = vmatpush1.msra.mxu0 0.0
        %538 = vmatprep.subr.mxu0 0.0
        %539 = vmatpush1.msra.mxu0 0.0
        %540 = vmatprep.subr.mxu0 0.0
        %541 = vmatpush1.msra.mxu0 0.0
        %542 = vmatprep.subr.mxu0 0.0
        %543 = vmatpush1.msra.mxu0 0.0
        %544 = vmatprep.subr.mxu0 0.0
        %545 = vmatpush1.msra.mxu0 0.0
        %546 = vmatprep.subr.mxu0 0.0
        %547 = vmatpush1.msra.mxu0 0.0
        %548 = vmatprep.subr.mxu0 0.0
        %549 = vmatpush1.msra.mxu0 0.0
        %550 = vmatprep.subr.mxu0 0.0
        %551 = vmatpush1.msra.mxu0 0.0
        %552 = vmatprep.subr.mxu0 0.0
        %553 = vmatpush1.msra.mxu0 0.0
        %554 = vmatprep.subr.mxu0 0.0
        %555 = vmatpush1.msra.mxu0 0.0
        %556 = vmatprep.subr.mxu0 0.0
        %557 = vmatpush1.msra.mxu0 0.0
        %558 = vmatprep.subr.mxu0 0.0
        %559 = vmatpush1.msra.mxu0 0.0
        %560 = vmatprep.subr.mxu0 0.0
        %561 = vmatpush1.msra.mxu0 0.0
        %562 = vmatprep.subr.mxu0 0.0
        %563 = vmatpush1.msra.mxu0 0.0
        %564 = vmatprep.subr.mxu0 0.0
        %565 = vmatpush1.msra.mxu0 0.0
        %566 = vmatprep.subr.mxu0 0.0
        %567 = vmatpush1.msra.mxu0 0.0
        %568 = vmatprep.subr.mxu0 0.0
        %569 = vmatpush1.msra.mxu0 0.0
        %570 = vmatprep.subr.mxu0 0.0
        %571 = vmatpush1.msra.mxu0 0.0
        %572 = vmatprep.subr.mxu0 0.0
        %573 = vmatpush1.msra.mxu0 0.0
        %574 = vmatprep.subr.mxu0 0.0
        %575 = vmatpush1.msra.mxu0 0.0
        %576 = vmatprep.subr.mxu0 0.0
        %577 = vmatpush1.msra.mxu0 0.0
        %578 = vmatprep.subr.mxu0 0.0
        %579 = vmatpush1.msra.mxu0 0.0
        %580 = vmatprep.subr.mxu0 0.0
        %581 = vmatpush1.msra.mxu0 0.0
        %582 = vmatprep.subr.mxu0 0.0
        %583 = vmatpush1.msra.mxu0 0.0
        %584 = vmatprep.subr.mxu0 0.0
        %585 = vmatpush1.msra.mxu0 0.0
        %586 = vmatprep.subr.mxu0 0.0
        %587 = vmatpush1.msra.mxu0 0.0
        %588 = vmatprep.subr.mxu0 0.0
        %589 = vmatpush1.msra.mxu0 0.0
        %590 = vmatprep.subr.mxu0 0.0
        %591 = vmatpush1.msra.mxu0 0.0
        %592 = vmatprep.mubr.f32.mxu0 0.0
        %593 = vmatmul.mubr.f32.gmra.mrb[0].mxu0 %v472
        %v594 = vpop.f32.mrb[0].mxu0
        %v595 = vadd.f32 0.0, %v594
        %v596 = vpop.f32.mrb[0].mxu0
        %597 = vmatprep.mubr.f32.mxu0 0.0
        %598 = vmatmul.mubr.f32.gmra.mrb[0].mxu0 %v475
        %v599 = vpop.f32.mrb[0].mxu0
        %v600 = vadd.f32 0.0, %v599
        %v601 = vpop.f32.mrb[0].mxu0
        %602 = vmatprep.mubr.f32.mxu0 0.0
        %603 = vmatmul.mubr.f32.gmra.mrb[0].mxu0 %v478
        %v604 = vpop.f32.mrb[0].mxu0
        %v605 = vadd.f32 0.0, %v604
        %v606 = vpop.f32.mrb[0].mxu0
        %607 = vmatprep.mubr.f32.mxu0 0.0
        %608 = vmatmul.mubr.f32.gmra.mrb[0].mxu0 %v481
        %v609 = vpop.f32.mrb[0].mxu0
        %v610 = vadd.f32 0.0, %v609
        %v611 = vpop.f32.mrb[0].mxu0
        %612 = vmatprep.mubr.f32.mxu0 0.0
        %613 = vmatmul.mubr.f32.gmra.mrb[0].mxu0 %v484
        %v614 = vpop.f32.mrb[0].mxu0
        %v615 = vadd.f32 0.0, %v614
        %v616 = vpop.f32.mrb[0].mxu0
        %617 = vmatprep.mubr.f32.mxu0 0.0
        %618 = vmatmul.mubr.f32.gmra.mrb[0].mxu0 %v487
        %v619 = vpop.f32.mrb[0].mxu0
        %v620 = vadd.f32 0.0, %v619
        %v621 = vpop.f32.mrb[0].mxu0
        %622 = vmatprep.mubr.f32.mxu0 0.0
        %623 = vmatmul.mubr.f32.gmra.mrb[0].mxu0 %v490
        %v624 = vpop.f32.mrb[0].mxu0
        %v625 = vadd.f32 0.0, %v624
        %v626 = vpop.f32.mrb[0].mxu0
        %627 = vmatprep.mubr.f32.mxu0 0.0
        %628 = vmatmul.mubr.f32.gmra.mrb[0].mxu0 %v493
        %v629 = vpop.f32.mrb[0].mxu0
        %v630 = vadd.f32 0.0, %v629
        %v631 = vpop.f32.mrb[0].mxu0
        %632 = vmatprep.mubr.f32.mxu0 0.0
        %633 = vmatmul.mubr.f32.gmra.mrb[0].mxu0 %v496
        %v634 = vpop.f32.mrb[0].mxu0
        %v635 = vadd.f32 0.0, %v634
        %v636 = vpop.f32.mrb[0].mxu0
        %637 = vmatprep.mubr.f32.mxu0 0.0
        %638 = vmatmul.mubr.f32.gmra.mrb[0].mxu0 %v499
        %v639 = vpop.f32.mrb[0].mxu0
        %v640 = vadd.f32 0.0, %v639
        %v641 = vpop.f32.mrb[0].mxu0
        %642 = vmatprep.mubr.f32.mxu0 0.0
        %643 = vmatmul.mubr.f32.gmra.mrb[0].mxu0 %v502
        %v644 = vpop.f32.mrb[0].mxu0
        %v645 = vadd.f32 0.0, %v644
        %v646 = vpop.f32.mrb[0].mxu0
        %647 = vmatprep.mubr.f32.mxu0 0.0
        %648 = vmatmul.mubr.f32.gmra.mrb[0].mxu0 %v505
        %v649 = vpop.f32.mrb[0].mxu0
        %v650 = vadd.f32 0.0, %v649
        %v651 = vpop.f32.mrb[0].mxu0
        %652 = vmatprep.mubr.f32.mxu0 0.0
        %653 = vmatmul.mubr.f32.gmra.mrb[0].mxu0 %v508
        %v654 = vpop.f32.mrb[0].mxu0
        %v655 = vadd.f32 0.0, %v654
        %v656 = vpop.f32.mrb[0].mxu0
        %657 = vmatprep.mubr.f32.mxu0 0.0
        %658 = vmatmul.mubr.f32.gmra.mrb[0].mxu0 %v511
        %v659 = vpop.f32.mrb[0].mxu0
        %v660 = vadd.f32 0.0, %v659
        %v661 = vpop.f32.mrb[0].mxu0
        %662 = vmatprep.mubr.f32.mxu0 0.0
        %663 = vmatmul.mubr.f32.gmra.mrb[0].mxu0 %v514
        %v664 = vpop.f32.mrb[0].mxu0
        %v665 = vadd.f32 0.0, %v664
        %v666 = vpop.f32.mrb[0].mxu0
        %667 = vmatprep.mubr.f32.mxu0 0.0
        %668 = vmatmul.mubr.f32.gmra.mrb[0].mxu0 %v517
        %v669 = vpop.f32.mrb[0].mxu0
        %v670 = vadd.f32 0.0, %v669
        %v671 = vpop.f32.mrb[0].mxu0
        %672 = vmatprep.mubr.f32.mxu0 0.0
        %673 = vmatmul.mubr.f32.gmra.mrb[0].mxu0 %v520
        %v674 = vpop.f32.mrb[0].mxu0
        %v675 = vadd.f32 0.0, %v674
        %v676 = vpop.f32.mrb[0].mxu0
        %677 = vmatprep.mubr.f32.mxu0 0.0
        %678 = vmatmul.mubr.f32.gmra.mrb[0].mxu0 %v523
        %v679 = vpop.f32.mrb[0].mxu0
        %v680 = vadd.f32 0.0, %v679
        %v681 = vpop.f32.mrb[0].mxu0
        %682 = vdwg.mxu0
        %v684 = vsel %vm470, %v432, 0
        %v687 = vsel %vm470, %v433, 0
        %v690 = vsel %vm470, %v434, 0
        %v693 = vsel %vm470, %v435, 0
        %v696 = vsel %vm470, %v436, 0
        %v699 = vsel %vm470, %v437, 0
        %v702 = vsel %vm470, %v438, 0
        %v705 = vsel %vm470, %v439, 0
        %v708 = vsel %vm470, %v440, 0
        %v711 = vsel %vm470, %v441, 0
        %v714 = vsel %vm470, %v442, 0
        %v717 = vsel %vm470, %v443, 0
        %v720 = vsel %vm470, %v444, 0
        %v723 = vsel %vm470, %v445, 0
        %v726 = vsel %vm470, %v446, 0
        %v729 = vsel %vm470, %v447, 0
        %v732 = vsel %vm470, %v448, 0
        %v735 = vsel %vm470, %v449, 0
        %v737 = vsel %vm525, %v427, 0
        %739 = vmatprep.subr.mxu0 0.0
        %740 = vmatpush1.msra.mxu0 %v737
        %741 = vmatprep.subr.mxu0 0.0
        %742 = vmatpush1.msra.mxu0 0.0
        %743 = vmatprep.subr.mxu0 0.0
        %744 = vmatpush1.msra.mxu0 0.0
        %745 = vmatprep.subr.mxu0 0.0
        %746 = vmatpush1.msra.mxu0 0.0
        %747 = vmatprep.subr.mxu0 0.0
        %748 = vmatpush1.msra.mxu0 0.0
        %749 = vmatprep.subr.mxu0 0.0
        %750 = vmatpush1.msra.mxu0 0.0
        %751 = vmatprep.subr.mxu0 0.0
        %752 = vmatpush1.msra.mxu0 0.0
        %753 = vmatprep.subr.mxu0 0.0
        %754 = vmatpush1.msra.mxu0 0.0
        %755 = vmatprep.subr.mxu0 0.0
        %756 = vmatpush1.msra.mxu0 0.0
        %757 = vmatprep.subr.mxu0 0.0
        %758 = vmatpush1.msra.mxu0 0.0
        %759 = vmatprep.subr.mxu0 0.0
        %760 = vmatpush1.msra.mxu0 0.0
        %761 = vmatprep.subr.mxu0 0.0
        %762 = vmatpush1.msra.mxu0 0.0
        %763 = vmatprep.subr.mxu0 0.0
        %764 = vmatpush1.msra.mxu0 0.0
        %765 = vmatprep.subr.mxu0 0.0
        %766 = vmatpush1.msra.mxu0 0.0
        %767 = vmatprep.subr.mxu0 0.0
        %768 = vmatpush1.msra.mxu0 0.0
        %769 = vmatprep.subr.mxu0 0.0
        %770 = vmatpush1.msra.mxu0 0.0
        %771 = vmatprep.subr.mxu0 0.0
        %772 = vmatpush1.msra.mxu0 0.0
        %773 = vmatprep.subr.mxu0 0.0
        %774 = vmatpush1.msra.mxu0 0.0
        %775 = vmatprep.subr.mxu0 0.0
        %776 = vmatpush1.msra.mxu0 0.0
        %777 = vmatprep.subr.mxu0 0.0
        %778 = vmatpush1.msra.mxu0 0.0
        %779 = vmatprep.subr.mxu0 0.0
        %780 = vmatpush1.msra.mxu0 0.0
        %781 = vmatprep.subr.mxu0 0.0
        %782 = vmatpush1.msra.mxu0 0.0
        %783 = vmatprep.subr.mxu0 0.0
        %784 = vmatpush1.msra.mxu0 0.0
        %785 = vmatprep.subr.mxu0 0.0
        %786 = vmatpush1.msra.mxu0 0.0
        %787 = vmatprep.subr.mxu0 0.0
        %788 = vmatpush1.msra.mxu0 0.0
        %789 = vmatprep.subr.mxu0 0.0
        %790 = vmatpush1.msra.mxu0 0.0
        %791 = vmatprep.subr.mxu0 0.0
        %792 = vmatpush1.msra.mxu0 0.0
        %793 = vmatprep.subr.mxu0 0.0
        %794 = vmatpush1.msra.mxu0 0.0
        %795 = vmatprep.subr.mxu0 0.0
        %796 = vmatpush1.msra.mxu0 0.0
        %797 = vmatprep.subr.mxu0 0.0
        %798 = vmatpush1.msra.mxu0 0.0
        %799 = vmatprep.subr.mxu0 0.0
        %800 = vmatpush1.msra.mxu0 0.0
        %801 = vmatprep.subr.mxu0 0.0
        %802 = vmatpush1.msra.mxu0 0.0
        %803 = vmatprep.mubr.f32.mxu0 0.0
        %804 = vmatmul.mubr.f32.gmra.mrb[0].mxu0 %v684
        %v805 = vpop.f32.mrb[0].mxu0
        %v806 = vadd.f32 %v595, %v805
        %v807 = vpop.f32.mrb[0].mxu0
        %808 = vmatprep.mubr.f32.mxu0 0.0
        %809 = vmatmul.mubr.f32.gmra.mrb[0].mxu0 %v687
        %v810 = vpop.f32.mrb[0].mxu0
        %v811 = vadd.f32 %v600, %v810
        %v812 = vpop.f32.mrb[0].mxu0
        %813 = vmatprep.mubr.f32.mxu0 0.0
        %814 = vmatmul.mubr.f32.gmra.mrb[0].mxu0 %v690
        %v815 = vpop.f32.mrb[0].mxu0
        %v816 = vadd.f32 %v605, %v815
        %v817 = vpop.f32.mrb[0].mxu0
        %818 = vmatprep.mubr.f32.mxu0 0.0
        %819 = vmatmul.mubr.f32.gmra.mrb[0].mxu0 %v693
        %v820 = vpop.f32.mrb[0].mxu0
        %v821 = vadd.f32 %v610, %v820
        %v822 = vpop.f32.mrb[0].mxu0
        %823 = vmatprep.mubr.f32.mxu0 0.0
        %824 = vmatmul.mubr.f32.gmra.mrb[0].mxu0 %v696
        %v825 = vpop.f32.mrb[0].mxu0
        %v826 = vadd.f32 %v615, %v825
        %v827 = vpop.f32.mrb[0].mxu0
        %828 = vmatprep.mubr.f32.mxu0 0.0
        %829 = vmatmul.mubr.f32.gmra.mrb[0].mxu0 %v699
        %v830 = vpop.f32.mrb[0].mxu0
        %v831 = vadd.f32 %v620, %v830
        %v832 = vpop.f32.mrb[0].mxu0
        %833 = vmatprep.mubr.f32.mxu0 0.0
        %834 = vmatmul.mubr.f32.gmra.mrb[0].mxu0 %v702
        %v835 = vpop.f32.mrb[0].mxu0
        %v836 = vadd.f32 %v625, %v835
        %v837 = vpop.f32.mrb[0].mxu0
        %838 = vmatprep.mubr.f32.mxu0 0.0
        %839 = vmatmul.mubr.f32.gmra.mrb[0].mxu0 %v705
        %v840 = vpop.f32.mrb[0].mxu0
        %v841 = vadd.f32 %v630, %v840
        %v842 = vpop.f32.mrb[0].mxu0
        %843 = vmatprep.mubr.f32.mxu0 0.0
        %844 = vmatmul.mubr.f32.gmra.mrb[0].mxu0 %v708
        %v845 = vpop.f32.mrb[0].mxu0
        %v846 = vadd.f32 %v635, %v845
        %v847 = vpop.f32.mrb[0].mxu0
        %848 = vmatprep.mubr.f32.mxu0 0.0
        %849 = vmatmul.mubr.f32.gmra.mrb[0].mxu0 %v711
        %v850 = vpop.f32.mrb[0].mxu0
        %v851 = vadd.f32 %v640, %v850
        %v852 = vpop.f32.mrb[0].mxu0
        %853 = vmatprep.mubr.f32.mxu0 0.0
        %854 = vmatmul.mubr.f32.gmra.mrb[0].mxu0 %v714
        %v855 = vpop.f32.mrb[0].mxu0
        %v856 = vadd.f32 %v645, %v855
        %v857 = vpop.f32.mrb[0].mxu0
        %858 = vmatprep.mubr.f32.mxu0 0.0
        %859 = vmatmul.mubr.f32.gmra.mrb[0].mxu0 %v717
        %v860 = vpop.f32.mrb[0].mxu0
        %v861 = vadd.f32 %v650, %v860
        %v862 = vpop.f32.mrb[0].mxu0
        %863 = vmatprep.mubr.f32.mxu0 0.0
        %864 = vmatmul.mubr.f32.gmra.mrb[0].mxu0 %v720
        %v865 = vpop.f32.mrb[0].mxu0
        %v866 = vadd.f32 %v655, %v865
        %v867 = vpop.f32.mrb[0].mxu0
        %868 = vmatprep.mubr.f32.mxu0 0.0
        %869 = vmatmul.mubr.f32.gmra.mrb[0].mxu0 %v723
        %v870 = vpop.f32.mrb[0].mxu0
        %v871 = vadd.f32 %v660, %v870
        %v872 = vpop.f32.mrb[0].mxu0
        %873 = vmatprep.mubr.f32.mxu0 0.0
        %874 = vmatmul.mubr.f32.gmra.mrb[0].mxu0 %v726
        %v875 = vpop.f32.mrb[0].mxu0
        %v876 = vadd.f32 %v665, %v875
        %v877 = vpop.f32.mrb[0].mxu0
        %878 = vmatprep.mubr.f32.mxu0 0.0
        %879 = vmatmul.mubr.f32.gmra.mrb[0].mxu0 %v729
        %v880 = vpop.f32.mrb[0].mxu0
        %v881 = vadd.f32 %v670, %v880
        %v882 = vpop.f32.mrb[0].mxu0
        %883 = vmatprep.mubr.f32.mxu0 0.0
        %884 = vmatmul.mubr.f32.gmra.mrb[0].mxu0 %v732
        %v885 = vpop.f32.mrb[0].mxu0
        %v886 = vadd.f32 %v675, %v885
        %v887 = vpop.f32.mrb[0].mxu0
        %888 = vmatprep.mubr.f32.mxu0 0.0
        %889 = vmatmul.mubr.f32.gmra.mrb[0].mxu0 %v735
        %v890 = vpop.f32.mrb[0].mxu0
        %v891 = vadd.f32 %v680, %v890
        %v892 = vpop.f32.mrb[0].mxu0
        %893 = vdwg.mxu0
        %v894 = vld [vmem:[%s413 + $0x2] sm:$0xff]
        %v895 = vld [vmem:[%s413 + $0xa] sm:$0xff]
        %v896 = vld [vmem:[%s413 + $0x12] sm:$0xff]
        %v897 = vld [vmem:[%s413 + $0x1a] sm:$0xff]
        %v898 = vld [vmem:[%s413 + $0x22] sm:$0xff]
        %v899 = vld [vmem:[%s413 + $0x2a] sm:$0xff]
        %v900 = vld [vmem:[%s413 + $0x32] sm:$0xff]
        %v901 = vld [vmem:[%s413 + $0x3a] sm:$0xff]
        %v902 = vld [vmem:[%s413 + $0x42] sm:$0xff]
        %v903 = vld [vmem:[%s413 + $0x4a] sm:$0xff]
        %v904 = vld [vmem:[%s413 + $0x52] sm:$0xff]
        %v905 = vld [vmem:[%s413 + $0x5a] sm:$0xff]
        %v906 = vld [vmem:[%s413 + $0x62] sm:$0xff]
        %v907 = vld [vmem:[%s413 + $0x6a] sm:$0xff]
        %v908 = vld [vmem:[%s413 + $0x72] sm:$0xff]
        %v909 = vld [vmem:[%s413 + $0x7a] sm:$0xff]
        %v910 = vld [vmem:[%s413 + $0x82] sm:$0xff]
        %v911 = vld [vmem:[%s413 + $0x8a] sm:$0xff]
        %v913 = vsel %vm470, %v894, 0
        %v916 = vsel %vm470, %v895, 0
        %v919 = vsel %vm470, %v896, 0
        %v922 = vsel %vm470, %v897, 0
        %v925 = vsel %vm470, %v898, 0
        %v928 = vsel %vm470, %v899, 0
        %v931 = vsel %vm470, %v900, 0
        %v934 = vsel %vm470, %v901, 0
        %v937 = vsel %vm470, %v902, 0
        %v940 = vsel %vm470, %v903, 0
        %v943 = vsel %vm470, %v904, 0
        %v946 = vsel %vm470, %v905, 0
        %v949 = vsel %vm470, %v906, 0
        %v952 = vsel %vm470, %v907, 0
        %v955 = vsel %vm470, %v908, 0
        %v958 = vsel %vm470, %v909, 0
        %v961 = vsel %vm470, %v910, 0
        %v964 = vsel %vm470, %v911, 0
        %v967 = vsel %vm525, %v428, 0
        %969 = vmatprep.subr.mxu0 0.0
        %970 = vmatpush1.msra.mxu0 %v967
        %971 = vmatprep.subr.mxu0 0.0
        %972 = vmatpush1.msra.mxu0 0.0
        %973 = vmatprep.subr.mxu0 0.0
        %974 = vmatpush1.msra.mxu0 0.0
        %975 = vmatprep.subr.mxu0 0.0
        %976 = vmatpush1.msra.mxu0 0.0
        %977 = vmatprep.subr.mxu0 0.0
        %978 = vmatpush1.msra.mxu0 0.0
        %979 = vmatprep.subr.mxu0 0.0
        %980 = vmatpush1.msra.mxu0 0.0
        %981 = vmatprep.subr.mxu0 0.0
        %982 = vmatpush1.msra.mxu0 0.0
        %983 = vmatprep.subr.mxu0 0.0
        %984 = vmatpush1.msra.mxu0 0.0
        %985 = vmatprep.subr.mxu0 0.0
        %986 = vmatpush1.msra.mxu0 0.0
        %987 = vmatprep.subr.mxu0 0.0
        %988 = vmatpush1.msra.mxu0 0.0
        %989 = vmatprep.subr.mxu0 0.0
        %990 = vmatpush1.msra.mxu0 0.0
        %991 = vmatprep.subr.mxu0 0.0
        %992 = vmatpush1.msra.mxu0 0.0
        %993 = vmatprep.subr.mxu0 0.0
        %994 = vmatpush1.msra.mxu0 0.0
        %995 = vmatprep.subr.mxu0 0.0
        %996 = vmatpush1.msra.mxu0 0.0
        %997 = vmatprep.subr.mxu0 0.0
        %998 = vmatpush1.msra.mxu0 0.0
        %999 = vmatprep.subr.mxu0 0.0
        %1000 = vmatpush1.msra.mxu0 0.0
        %1001 = vmatprep.subr.mxu0 0.0
        %1002 = vmatpush1.msra.mxu0 0.0
        %1003 = vmatprep.subr.mxu0 0.0
        %1004 = vmatpush1.msra.mxu0 0.0
        %1005 = vmatprep.subr.mxu0 0.0
        %1006 = vmatpush1.msra.mxu0 0.0
        %1007 = vmatprep.subr.mxu0 0.0
        %1008 = vmatpush1.msra.mxu0 0.0
        %1009 = vmatprep.subr.mxu0 0.0
        %1010 = vmatpush1.msra.mxu0 0.0
        %1011 = vmatprep.subr.mxu0 0.0
        %1012 = vmatpush1.msra.mxu0 0.0
        %1013 = vmatprep.subr.mxu0 0.0
        %1014 = vmatpush1.msra.mxu0 0.0
        %1015 = vmatprep.subr.mxu0 0.0
        %1016 = vmatpush1.msra.mxu0 0.0
        %1017 = vmatprep.subr.mxu0 0.0
        %1018 = vmatpush1.msra.mxu0 0.0
        %1019 = vmatprep.subr.mxu0 0.0
        %1020 = vmatpush1.msra.mxu0 0.0
        %1021 = vmatprep.subr.mxu0 0.0
        %1022 = vmatpush1.msra.mxu0 0.0
        %1023 = vmatprep.subr.mxu0 0.0
        %1024 = vmatpush1.msra.mxu0 0.0
        %1025 = vmatprep.subr.mxu0 0.0
        %1026 = vmatpush1.msra.mxu0 0.0
        %1027 = vmatprep.subr.mxu0 0.0
        %1028 = vmatpush1.msra.mxu0 0.0
        %1029 = vmatprep.subr.mxu0 0.0
        %1030 = vmatpush1.msra.mxu0 0.0
        %1031 = vmatprep.subr.mxu0 0.0
        %1032 = vmatpush1.msra.mxu0 0.0
        %1033 = vmatprep.mubr.f32.mxu0 0.0
        %1034 = vmatmul.mubr.f32.gmra.mrb[0].mxu0 %v913
        %v1035 = vpop.f32.mrb[0].mxu0
        %v1036 = vadd.f32 0.0, %v1035
        %v1037 = vpop.f32.mrb[0].mxu0
        %1038 = vmatprep.mubr.f32.mxu0 0.0
        %1039 = vmatmul.mubr.f32.gmra.mrb[0].mxu0 %v916
        %v1040 = vpop.f32.mrb[0].mxu0
        %v1041 = vadd.f32 0.0, %v1040
        %v1042 = vpop.f32.mrb[0].mxu0
        %1043 = vmatprep.mubr.f32.mxu0 0.0
        %1044 = vmatmul.mubr.f32.gmra.mrb[0].mxu0 %v919
        %v1045 = vpop.f32.mrb[0].mxu0
        %v1046 = vadd.f32 0.0, %v1045
        %v1047 = vpop.f32.mrb[0].mxu0
        %1048 = vmatprep.mubr.f32.mxu0 0.0
        %1049 = vmatmul.mubr.f32.gmra.mrb[0].mxu0 %v922
        %v1050 = vpop.f32.mrb[0].mxu0
        %v1051 = vadd.f32 0.0, %v1050
        %v1052 = vpop.f32.mrb[0].mxu0
        %1053 = vmatprep.mubr.f32.mxu0 0.0
        %1054 = vmatmul.mubr.f32.gmra.mrb[0].mxu0 %v925
        %v1055 = vpop.f32.mrb[0].mxu0
        %v1056 = vadd.f32 0.0, %v1055
        %v1057 = vpop.f32.mrb[0].mxu0
        %1058 = vmatprep.mubr.f32.mxu0 0.0
        %1059 = vmatmul.mubr.f32.gmra.mrb[0].mxu0 %v928
        %v1060 = vpop.f32.mrb[0].mxu0
        %v1061 = vadd.f32 0.0, %v1060
        %v1062 = vpop.f32.mrb[0].mxu0
        %1063 = vmatprep.mubr.f32.mxu0 0.0
        %1064 = vmatmul.mubr.f32.gmra.mrb[0].mxu0 %v931
        %v1065 = vpop.f32.mrb[0].mxu0
        %v1066 = vadd.f32 0.0, %v1065
        %v1067 = vpop.f32.mrb[0].mxu0
        %1068 = vmatprep.mubr.f32.mxu0 0.0
        %1069 = vmatmul.mubr.f32.gmra.mrb[0].mxu0 %v934
        %v1070 = vpop.f32.mrb[0].mxu0
        %v1071 = vadd.f32 0.0, %v1070
        %v1072 = vpop.f32.mrb[0].mxu0
        %1073 = vmatprep.mubr.f32.mxu0 0.0
        %1074 = vmatmul.mubr.f32.gmra.mrb[0].mxu0 %v937
        %v1075 = vpop.f32.mrb[0].mxu0
        %v1076 = vadd.f32 0.0, %v1075
        %v1077 = vpop.f32.mrb[0].mxu0
        %1078 = vmatprep.mubr.f32.mxu0 0.0
        %1079 = vmatmul.mubr.f32.gmra.mrb[0].mxu0 %v940
        %v1080 = vpop.f32.mrb[0].mxu0
        %v1081 = vadd.f32 0.0, %v1080
        %v1082 = vpop.f32.mrb[0].mxu0
        %1083 = vmatprep.mubr.f32.mxu0 0.0
        %1084 = vmatmul.mubr.f32.gmra.mrb[0].mxu0 %v943
        %v1085 = vpop.f32.mrb[0].mxu0
        %v1086 = vadd.f32 0.0, %v1085
        %v1087 = vpop.f32.mrb[0].mxu0
        %1088 = vmatprep.mubr.f32.mxu0 0.0
        %1089 = vmatmul.mubr.f32.gmra.mrb[0].mxu0 %v946
        %v1090 = vpop.f32.mrb[0].mxu0
        %v1091 = vadd.f32 0.0, %v1090
        %v1092 = vpop.f32.mrb[0].mxu0
        %1093 = vmatprep.mubr.f32.mxu0 0.0
        %1094 = vmatmul.mubr.f32.gmra.mrb[0].mxu0 %v949
        %v1095 = vpop.f32.mrb[0].mxu0
        %v1096 = vadd.f32 0.0, %v1095
        %v1097 = vpop.f32.mrb[0].mxu0
        %1098 = vmatprep.mubr.f32.mxu0 0.0
        %1099 = vmatmul.mubr.f32.gmra.mrb[0].mxu0 %v952
        %v1100 = vpop.f32.mrb[0].mxu0
        %v1101 = vadd.f32 0.0, %v1100
        %v1102 = vpop.f32.mrb[0].mxu0
        %1103 = vmatprep.mubr.f32.mxu0 0.0
        %1104 = vmatmul.mubr.f32.gmra.mrb[0].mxu0 %v955
        %v1105 = vpop.f32.mrb[0].mxu0
        %v1106 = vadd.f32 0.0, %v1105
        %v1107 = vpop.f32.mrb[0].mxu0
        %1108 = vmatprep.mubr.f32.mxu0 0.0
        %1109 = vmatmul.mubr.f32.gmra.mrb[0].mxu0 %v958
        %v1110 = vpop.f32.mrb[0].mxu0
        %v1111 = vadd.f32 0.0, %v1110
        %v1112 = vpop.f32.mrb[0].mxu0
        %1113 = vmatprep.mubr.f32.mxu0 0.0
        %1114 = vmatmul.mubr.f32.gmra.mrb[0].mxu0 %v961
        %v1115 = vpop.f32.mrb[0].mxu0
        %v1116 = vadd.f32 0.0, %v1115
        %v1117 = vpop.f32.mrb[0].mxu0
        %1118 = vmatprep.mubr.f32.mxu0 0.0
        %1119 = vmatmul.mubr.f32.gmra.mrb[0].mxu0 %v964
        %v1120 = vpop.f32.mrb[0].mxu0
        %v1121 = vadd.f32 0.0, %v1120
        %v1122 = vpop.f32.mrb[0].mxu0
        %1123 = vdwg.mxu0
        %v1124 = vadd.f32 %v806, %v1036
        %v1125 = vadd.f32 %v811, %v1041
        %v1126 = vadd.f32 %v816, %v1046
        %v1127 = vadd.f32 %v821, %v1051
        %v1128 = vadd.f32 %v826, %v1056
        %v1129 = vadd.f32 %v831, %v1061
        %v1130 = vadd.f32 %v836, %v1066
        %v1131 = vadd.f32 %v841, %v1071
        %v1132 = vadd.f32 %v846, %v1076
        %v1133 = vadd.f32 %v851, %v1081
        %v1134 = vadd.f32 %v856, %v1086
        %v1135 = vadd.f32 %v861, %v1091
        %v1136 = vadd.f32 %v866, %v1096
        %v1137 = vadd.f32 %v871, %v1101
        %v1138 = vadd.f32 %v876, %v1106
        %v1139 = vadd.f32 %v881, %v1111
        %v1140 = vadd.f32 %v886, %v1116
        %v1141 = vadd.f32 %v891, %v1121
        %v1142 = vld [vmem:[%s413 + $0x12] sm:$0xff]
        %v1143 = vld [vmem:[%s413 + $0x1a] sm:$0xff]
        %v1144 = vld [vmem:[%s413 + $0x22] sm:$0xff]
        %v1145 = vld [vmem:[%s413 + $0x2a] sm:$0xff]
        %v1146 = vld [vmem:[%s413 + $0x32] sm:$0xff]
        %v1147 = vld [vmem:[%s413 + $0x3a] sm:$0xff]
        %v1148 = vld [vmem:[%s413 + $0x42] sm:$0xff]
        %v1149 = vld [vmem:[%s413 + $0x4a] sm:$0xff]
        %v1150 = vld [vmem:[%s413 + $0x52] sm:$0xff]
        %v1151 = vld [vmem:[%s413 + $0x5a] sm:$0xff]
        %v1152 = vld [vmem:[%s413 + $0x62] sm:$0xff]
        %v1153 = vld [vmem:[%s413 + $0x6a] sm:$0xff]
        %v1154 = vld [vmem:[%s413 + $0x72] sm:$0xff]
        %v1155 = vld [vmem:[%s413 + $0x7a] sm:$0xff]
        %v1156 = vld [vmem:[%s413 + $0x82] sm:$0xff]
        %v1157 = vld [vmem:[%s413 + $0x8a] sm:$0xff]
        %v1158 = vld [vmem:[%s413 + $0x92] sm:$0xff]
        %v1159 = vld [vmem:[%s413 + $0x9a] sm:$0xff]
        %v1160 = vrot.slane %v428, 4
        %v1162 = vsel %vm470, %v1142, 0
        %v1165 = vsel %vm470, %v1143, 0
        %v1168 = vsel %vm470, %v1144, 0
        %v1171 = vsel %vm470, %v1145, 0
        %v1174 = vsel %vm470, %v1146, 0
        %v1177 = vsel %vm470, %v1147, 0
        %v1180 = vsel %vm470, %v1148, 0
        %v1183 = vsel %vm470, %v1149, 0
        %v1186 = vsel %vm470, %v1150, 0
        %v1189 = vsel %vm470, %v1151, 0
        %v1192 = vsel %vm470, %v1152, 0
        %v1195 = vsel %vm470, %v1153, 0
        %v1198 = vsel %vm470, %v1154, 0
        %v1201 = vsel %vm470, %v1155, 0
        %v1204 = vsel %vm470, %v1156, 0
        %v1207 = vsel %vm470, %v1157, 0
        %v1210 = vsel %vm470, %v1158, 0
        %v1213 = vsel %vm470, %v1159, 0
        %v1215 = vsel %vm525, %v1160, 0
        %1217 = vmatprep.subr.mxu0 0.0
        %1218 = vmatpush1.msra.mxu0 %v1215
        %1219 = vmatprep.subr.mxu0 0.0
        %1220 = vmatpush1.msra.mxu0 0.0
        %1221 = vmatprep.subr.mxu0 0.0
        %1222 = vmatpush1.msra.mxu0 0.0
        %1223 = vmatprep.subr.mxu0 0.0
        %1224 = vmatpush1.msra.mxu0 0.0
        %1225 = vmatprep.subr.mxu0 0.0
        %1226 = vmatpush1.msra.mxu0 0.0
        %1227 = vmatprep.subr.mxu0 0.0
        %1228 = vmatpush1.msra.mxu0 0.0
        %1229 = vmatprep.subr.mxu0 0.0
        %1230 = vmatpush1.msra.mxu0 0.0
        %1231 = vmatprep.subr.mxu0 0.0
        %1232 = vmatpush1.msra.mxu0 0.0
        %1233 = vmatprep.subr.mxu0 0.0
        %1234 = vmatpush1.msra.mxu0 0.0
        %1235 = vmatprep.subr.mxu0 0.0
        %1236 = vmatpush1.msra.mxu0 0.0
        %1237 = vmatprep.subr.mxu0 0.0
        %1238 = vmatpush1.msra.mxu0 0.0
        %1239 = vmatprep.subr.mxu0 0.0
        %1240 = vmatpush1.msra.mxu0 0.0
        %1241 = vmatprep.subr.mxu0 0.0
        %1242 = vmatpush1.msra.mxu0 0.0
        %1243 = vmatprep.subr.mxu0 0.0
        %1244 = vmatpush1.msra.mxu0 0.0
        %1245 = vmatprep.subr.mxu0 0.0
        %1246 = vmatpush1.msra.mxu0 0.0
        %1247 = vmatprep.subr.mxu0 0.0
        %1248 = vmatpush1.msra.mxu0 0.0
        %1249 = vmatprep.subr.mxu0 0.0
        %1250 = vmatpush1.msra.mxu0 0.0
        %1251 = vmatprep.subr.mxu0 0.0
        %1252 = vmatpush1.msra.mxu0 0.0
        %1253 = vmatprep.subr.mxu0 0.0
        %1254 = vmatpush1.msra.mxu0 0.0
        %1255 = vmatprep.subr.mxu0 0.0
        %1256 = vmatpush1.msra.mxu0 0.0
        %1257 = vmatprep.subr.mxu0 0.0
        %1258 = vmatpush1.msra.mxu0 0.0
        %1259 = vmatprep.subr.mxu0 0.0
        %1260 = vmatpush1.msra.mxu0 0.0
        %1261 = vmatprep.subr.mxu0 0.0
        %1262 = vmatpush1.msra.mxu0 0.0
        %1263 = vmatprep.subr.mxu0 0.0
        %1264 = vmatpush1.msra.mxu0 0.0
        %1265 = vmatprep.subr.mxu0 0.0
        %1266 = vmatpush1.msra.mxu0 0.0
        %1267 = vmatprep.subr.mxu0 0.0
        %1268 = vmatpush1.msra.mxu0 0.0
        %1269 = vmatprep.subr.mxu0 0.0
        %1270 = vmatpush1.msra.mxu0 0.0
        %1271 = vmatprep.subr.mxu0 0.0
        %1272 = vmatpush1.msra.mxu0 0.0
        %1273 = vmatprep.subr.mxu0 0.0
        %1274 = vmatpush1.msra.mxu0 0.0
        %1275 = vmatprep.subr.mxu0 0.0
        %1276 = vmatpush1.msra.mxu0 0.0
        %1277 = vmatprep.subr.mxu0 0.0
        %1278 = vmatpush1.msra.mxu0 0.0
        %1279 = vmatprep.subr.mxu0 0.0
        %1280 = vmatpush1.msra.mxu0 0.0
        %1281 = vmatprep.mubr.f32.mxu0 0.0
        %1282 = vmatmul.mubr.f32.gmra.mrb[0].mxu0 %v1162
        %v1283 = vpop.f32.mrb[0].mxu0
        %v1284 = vadd.f32 0.0, %v1283
        %v1285 = vpop.f32.mrb[0].mxu0
        %1286 = vmatprep.mubr.f32.mxu0 0.0
        %1287 = vmatmul.mubr.f32.gmra.mrb[0].mxu0 %v1165
        %v1288 = vpop.f32.mrb[0].mxu0
        %v1289 = vadd.f32 0.0, %v1288
        %v1290 = vpop.f32.mrb[0].mxu0
        %1291 = vmatprep.mubr.f32.mxu0 0.0
        %1292 = vmatmul.mubr.f32.gmra.mrb[0].mxu0 %v1168
        %v1293 = vpop.f32.mrb[0].mxu0
        %v1294 = vadd.f32 0.0, %v1293
        %v1295 = vpop.f32.mrb[0].mxu0
        %1296 = vmatprep.mubr.f32.mxu0 0.0
        %1297 = vmatmul.mubr.f32.gmra.mrb[0].mxu0 %v1171
        %v1298 = vpop.f32.mrb[0].mxu0
        %v1299 = vadd.f32 0.0, %v1298
        %v1300 = vpop.f32.mrb[0].mxu0
        %1301 = vmatprep.mubr.f32.mxu0 0.0
        %1302 = vmatmul.mubr.f32.gmra.mrb[0].mxu0 %v1174
        %v1303 = vpop.f32.mrb[0].mxu0
        %v1304 = vadd.f32 0.0, %v1303
        %v1305 = vpop.f32.mrb[0].mxu0
        %1306 = vmatprep.mubr.f32.mxu0 0.0
        %1307 = vmatmul.mubr.f32.gmra.mrb[0].mxu0 %v1177
        %v1308 = vpop.f32.mrb[0].mxu0
        %v1309 = vadd.f32 0.0, %v1308
        %v1310 = vpop.f32.mrb[0].mxu0
        %1311 = vmatprep.mubr.f32.mxu0 0.0
        %1312 = vmatmul.mubr.f32.gmra.mrb[0].mxu0 %v1180
        %v1313 = vpop.f32.mrb[0].mxu0
        %v1314 = vadd.f32 0.0, %v1313
        %v1315 = vpop.f32.mrb[0].mxu0
        %1316 = vmatprep.mubr.f32.mxu0 0.0
        %1317 = vmatmul.mubr.f32.gmra.mrb[0].mxu0 %v1183
        %v1318 = vpop.f32.mrb[0].mxu0
        %v1319 = vadd.f32 0.0, %v1318
        %v1320 = vpop.f32.mrb[0].mxu0
        %1321 = vmatprep.mubr.f32.mxu0 0.0
        %1322 = vmatmul.mubr.f32.gmra.mrb[0].mxu0 %v1186
        %v1323 = vpop.f32.mrb[0].mxu0
        %v1324 = vadd.f32 0.0, %v1323
        %v1325 = vpop.f32.mrb[0].mxu0
        %1326 = vmatprep.mubr.f32.mxu0 0.0
        %1327 = vmatmul.mubr.f32.gmra.mrb[0].mxu0 %v1189
        %v1328 = vpop.f32.mrb[0].mxu0
        %v1329 = vadd.f32 0.0, %v1328
        %v1330 = vpop.f32.mrb[0].mxu0
        %1331 = vmatprep.mubr.f32.mxu0 0.0
        %1332 = vmatmul.mubr.f32.gmra.mrb[0].mxu0 %v1192
        %v1333 = vpop.f32.mrb[0].mxu0
        %v1334 = vadd.f32 0.0, %v1333
        %v1335 = vpop.f32.mrb[0].mxu0
        %1336 = vmatprep.mubr.f32.mxu0 0.0
        %1337 = vmatmul.mubr.f32.gmra.mrb[0].mxu0 %v1195
        %v1338 = vpop.f32.mrb[0].mxu0
        %v1339 = vadd.f32 0.0, %v1338
        %v1340 = vpop.f32.mrb[0].mxu0
        %1341 = vmatprep.mubr.f32.mxu0 0.0
        %1342 = vmatmul.mubr.f32.gmra.mrb[0].mxu0 %v1198
        %v1343 = vpop.f32.mrb[0].mxu0
        %v1344 = vadd.f32 0.0, %v1343
        %v1345 = vpop.f32.mrb[0].mxu0
        %1346 = vmatprep.mubr.f32.mxu0 0.0
        %1347 = vmatmul.mubr.f32.gmra.mrb[0].mxu0 %v1201
        %v1348 = vpop.f32.mrb[0].mxu0
        %v1349 = vadd.f32 0.0, %v1348
        %v1350 = vpop.f32.mrb[0].mxu0
        %1351 = vmatprep.mubr.f32.mxu0 0.0
        %1352 = vmatmul.mubr.f32.gmra.mrb[0].mxu0 %v1204
        %v1353 = vpop.f32.mrb[0].mxu0
        %v1354 = vadd.f32 0.0, %v1353
        %v1355 = vpop.f32.mrb[0].mxu0
        %1356 = vmatprep.mubr.f32.mxu0 0.0
        %1357 = vmatmul.mubr.f32.gmra.mrb[0].mxu0 %v1207
        %v1358 = vpop.f32.mrb[0].mxu0
        %v1359 = vadd.f32 0.0, %v1358
        %v1360 = vpop.f32.mrb[0].mxu0
        %1361 = vmatprep.mubr.f32.mxu0 0.0
        %1362 = vmatmul.mubr.f32.gmra.mrb[0].mxu0 %v1210
        %v1363 = vpop.f32.mrb[0].mxu0
        %v1364 = vadd.f32 0.0, %v1363
        %v1365 = vpop.f32.mrb[0].mxu0
        %1366 = vmatprep.mubr.f32.mxu0 0.0
        %1367 = vmatmul.mubr.f32.gmra.mrb[0].mxu0 %v1213
        %v1368 = vpop.f32.mrb[0].mxu0
        %v1369 = vadd.f32 0.0, %v1368
        %v1370 = vpop.f32.mrb[0].mxu0
        %1371 = vdwg.mxu0
        %v1372 = vadd.f32 %v1124, %v1284
        %v1373 = vadd.f32 %v1125, %v1289
        %v1374 = vadd.f32 %v1126, %v1294
        %v1375 = vadd.f32 %v1127, %v1299
        %v1376 = vadd.f32 %v1128, %v1304
        %v1377 = vadd.f32 %v1129, %v1309
        %v1378 = vadd.f32 %v1130, %v1314
        %v1379 = vadd.f32 %v1131, %v1319
        %v1380 = vadd.f32 %v1132, %v1324
        %v1381 = vadd.f32 %v1133, %v1329
        %v1382 = vadd.f32 %v1134, %v1334
        %v1383 = vadd.f32 %v1135, %v1339
        %v1384 = vadd.f32 %v1136, %v1344
        %v1385 = vadd.f32 %v1137, %v1349
        %v1386 = vadd.f32 %v1138, %v1354
        %v1387 = vadd.f32 %v1139, %v1359
        %v1388 = vadd.f32 %v1140, %v1364
        %v1389 = vadd.f32 %v1141, %v1369
        %v1390 = vld [vmem:[%s413 + $0x13] sm:$0xff]
        %v1391 = vld [vmem:[%s413 + $0x1b] sm:$0xff]
        %v1392 = vld [vmem:[%s413 + $0x23] sm:$0xff]
        %v1393 = vld [vmem:[%s413 + $0x2b] sm:$0xff]
        %v1394 = vld [vmem:[%s413 + $0x33] sm:$0xff]
        %v1395 = vld [vmem:[%s413 + $0x3b] sm:$0xff]
        %v1396 = vld [vmem:[%s413 + $0x43] sm:$0xff]
        %v1397 = vld [vmem:[%s413 + $0x4b] sm:$0xff]
        %v1398 = vld [vmem:[%s413 + $0x53] sm:$0xff]
        %v1399 = vld [vmem:[%s413 + $0x5b] sm:$0xff]
        %v1400 = vld [vmem:[%s413 + $0x63] sm:$0xff]
        %v1401 = vld [vmem:[%s413 + $0x6b] sm:$0xff]
        %v1402 = vld [vmem:[%s413 + $0x73] sm:$0xff]
        %v1403 = vld [vmem:[%s413 + $0x7b] sm:$0xff]
        %v1404 = vld [vmem:[%s413 + $0x83] sm:$0xff]
        %v1405 = vld [vmem:[%s413 + $0x8b] sm:$0xff]
        %v1406 = vld [vmem:[%s413 + $0x93] sm:$0xff]
        %v1407 = vld [vmem:[%s413 + $0x9b] sm:$0xff]
        %v1409 = vsel %vm470, %v1390, 0
        %v1412 = vsel %vm470, %v1391, 0
        %v1415 = vsel %vm470, %v1392, 0
        %v1418 = vsel %vm470, %v1393, 0
        %v1421 = vsel %vm470, %v1394, 0
        %v1424 = vsel %vm470, %v1395, 0
        %v1427 = vsel %vm470, %v1396, 0
        %v1430 = vsel %vm470, %v1397, 0
        %v1433 = vsel %vm470, %v1398, 0
        %v1436 = vsel %vm470, %v1399, 0
        %v1439 = vsel %vm470, %v1400, 0
        %v1442 = vsel %vm470, %v1401, 0
        %v1445 = vsel %vm470, %v1402, 0
        %v1448 = vsel %vm470, %v1403, 0
        %v1451 = vsel %vm470, %v1404, 0
        %v1454 = vsel %vm470, %v1405, 0
        %v1457 = vsel %vm470, %v1406, 0
        %v1460 = vsel %vm470, %v1407, 0
        %v1463 = vsel %vm525, %v429, 0
        %1465 = vmatprep.subr.mxu0 0.0
        %1466 = vmatpush1.msra.mxu0 %v1463
        %1467 = vmatprep.subr.mxu0 0.0
        %1468 = vmatpush1.msra.mxu0 0.0
        %1469 = vmatprep.subr.mxu0 0.0
        %1470 = vmatpush1.msra.mxu0 0.0
        %1471 = vmatprep.subr.mxu0 0.0
        %1472 = vmatpush1.msra.mxu0 0.0
        %1473 = vmatprep.subr.mxu0 0.0
        %1474 = vmatpush1.msra.mxu0 0.0
        %1475 = vmatprep.subr.mxu0 0.0
        %1476 = vmatpush1.msra.mxu0 0.0
        %1477 = vmatprep.subr.mxu0 0.0
        %1478 = vmatpush1.msra.mxu0 0.0
        %1479 = vmatprep.subr.mxu0 0.0
        %1480 = vmatpush1.msra.mxu0 0.0
        %1481 = vmatprep.subr.mxu0 0.0
        %1482 = vmatpush1.msra.mxu0 0.0
        %1483 = vmatprep.subr.mxu0 0.0
        %1484 = vmatpush1.msra.mxu0 0.0
        %1485 = vmatprep.subr.mxu0 0.0
        %1486 = vmatpush1.msra.mxu0 0.0
        %1487 = vmatprep.subr.mxu0 0.0
        %1488 = vmatpush1.msra.mxu0 0.0
        %1489 = vmatprep.subr.mxu0 0.0
        %1490 = vmatpush1.msra.mxu0 0.0
        %1491 = vmatprep.subr.mxu0 0.0
        %1492 = vmatpush1.msra.mxu0 0.0
        %1493 = vmatprep.subr.mxu0 0.0
        %1494 = vmatpush1.msra.mxu0 0.0
        %1495 = vmatprep.subr.mxu0 0.0
        %1496 = vmatpush1.msra.mxu0 0.0
        %1497 = vmatprep.subr.mxu0 0.0
        %1498 = vmatpush1.msra.mxu0 0.0
        %1499 = vmatprep.subr.mxu0 0.0
        %1500 = vmatpush1.msra.mxu0 0.0
        %1501 = vmatprep.subr.mxu0 0.0
        %1502 = vmatpush1.msra.mxu0 0.0
        %1503 = vmatprep.subr.mxu0 0.0
        %1504 = vmatpush1.msra.mxu0 0.0
        %1505 = vmatprep.subr.mxu0 0.0
        %1506 = vmatpush1.msra.mxu0 0.0
        %1507 = vmatprep.subr.mxu0 0.0
        %1508 = vmatpush1.msra.mxu0 0.0
        %1509 = vmatprep.subr.mxu0 0.0
        %1510 = vmatpush1.msra.mxu0 0.0
        %1511 = vmatprep.subr.mxu0 0.0
        %1512 = vmatpush1.msra.mxu0 0.0
        %1513 = vmatprep.subr.mxu0 0.0
        %1514 = vmatpush1.msra.mxu0 0.0
        %1515 = vmatprep.subr.mxu0 0.0
        %1516 = vmatpush1.msra.mxu0 0.0
        %1517 = vmatprep.subr.mxu0 0.0
        %1518 = vmatpush1.msra.mxu0 0.0
        %1519 = vmatprep.subr.mxu0 0.0
        %1520 = vmatpush1.msra.mxu0 0.0
        %1521 = vmatprep.subr.mxu0 0.0
        %1522 = vmatpush1.msra.mxu0 0.0
        %1523 = vmatprep.subr.mxu0 0.0
        %1524 = vmatpush1.msra.mxu0 0.0
        %1525 = vmatprep.subr.mxu0 0.0
        %1526 = vmatpush1.msra.mxu0 0.0
        %1527 = vmatprep.subr.mxu0 0.0
        %1528 = vmatpush1.msra.mxu0 0.0
        %1529 = vmatprep.mubr.f32.mxu0 0.0
        %1530 = vmatmul.mubr.f32.gmra.mrb[0].mxu0 %v1409
        %v1531 = vpop.f32.mrb[0].mxu0
        %v1532 = vadd.f32 0.0, %v1531
        %v1533 = vpop.f32.mrb[0].mxu0
        %1534 = vmatprep.mubr.f32.mxu0 0.0
        %1535 = vmatmul.mubr.f32.gmra.mrb[0].mxu0 %v1412
        %v1536 = vpop.f32.mrb[0].mxu0
        %v1537 = vadd.f32 0.0, %v1536
        %v1538 = vpop.f32.mrb[0].mxu0
        %1539 = vmatprep.mubr.f32.mxu0 0.0
        %1540 = vmatmul.mubr.f32.gmra.mrb[0].mxu0 %v1415
        %v1541 = vpop.f32.mrb[0].mxu0
        %v1542 = vadd.f32 0.0, %v1541
        %v1543 = vpop.f32.mrb[0].mxu0
        %1544 = vmatprep.mubr.f32.mxu0 0.0
        %1545 = vmatmul.mubr.f32.gmra.mrb[0].mxu0 %v1418
        %v1546 = vpop.f32.mrb[0].mxu0
        %v1547 = vadd.f32 0.0, %v1546
        %v1548 = vpop.f32.mrb[0].mxu0
        %1549 = vmatprep.mubr.f32.mxu0 0.0
        %1550 = vmatmul.mubr.f32.gmra.mrb[0].mxu0 %v1421
        %v1551 = vpop.f32.mrb[0].mxu0
        %v1552 = vadd.f32 0.0, %v1551
        %v1553 = vpop.f32.mrb[0].mxu0
        %1554 = vmatprep.mubr.f32.mxu0 0.0
        %1555 = vmatmul.mubr.f32.gmra.mrb[0].mxu0 %v1424
        %v1556 = vpop.f32.mrb[0].mxu0
        %v1557 = vadd.f32 0.0, %v1556
        %v1558 = vpop.f32.mrb[0].mxu0
        %1559 = vmatprep.mubr.f32.mxu0 0.0
        %1560 = vmatmul.mubr.f32.gmra.mrb[0].mxu0 %v1427
        %v1561 = vpop.f32.mrb[0].mxu0
        %v1562 = vadd.f32 0.0, %v1561
        %v1563 = vpop.f32.mrb[0].mxu0
        %1564 = vmatprep.mubr.f32.mxu0 0.0
        %1565 = vmatmul.mubr.f32.gmra.mrb[0].mxu0 %v1430
        %v1566 = vpop.f32.mrb[0].mxu0
        %v1567 = vadd.f32 0.0, %v1566
        %v1568 = vpop.f32.mrb[0].mxu0
        %1569 = vmatprep.mubr.f32.mxu0 0.0
        %1570 = vmatmul.mubr.f32.gmra.mrb[0].mxu0 %v1433
        %v1571 = vpop.f32.mrb[0].mxu0
        %v1572 = vadd.f32 0.0, %v1571
        %v1573 = vpop.f32.mrb[0].mxu0
        %1574 = vmatprep.mubr.f32.mxu0 0.0
        %1575 = vmatmul.mubr.f32.gmra.mrb[0].mxu0 %v1436
        %v1576 = vpop.f32.mrb[0].mxu0
        %v1577 = vadd.f32 0.0, %v1576
        %v1578 = vpop.f32.mrb[0].mxu0
        %1579 = vmatprep.mubr.f32.mxu0 0.0
        %1580 = vmatmul.mubr.f32.gmra.mrb[0].mxu0 %v1439
        %v1581 = vpop.f32.mrb[0].mxu0
        %v1582 = vadd.f32 0.0, %v1581
        %v1583 = vpop.f32.mrb[0].mxu0
        %1584 = vmatprep.mubr.f32.mxu0 0.0
        %1585 = vmatmul.mubr.f32.gmra.mrb[0].mxu0 %v1442
        %v1586 = vpop.f32.mrb[0].mxu0
        %v1587 = vadd.f32 0.0, %v1586
        %v1588 = vpop.f32.mrb[0].mxu0
        %1589 = vmatprep.mubr.f32.mxu0 0.0
        %1590 = vmatmul.mubr.f32.gmra.mrb[0].mxu0 %v1445
        %v1591 = vpop.f32.mrb[0].mxu0
        %v1592 = vadd.f32 0.0, %v1591
        %v1593 = vpop.f32.mrb[0].mxu0
        %1594 = vmatprep.mubr.f32.mxu0 0.0
        %1595 = vmatmul.mubr.f32.gmra.mrb[0].mxu0 %v1448
        %v1596 = vpop.f32.mrb[0].mxu0
        %v1597 = vadd.f32 0.0, %v1596
        %v1598 = vpop.f32.mrb[0].mxu0
        %1599 = vmatprep.mubr.f32.mxu0 0.0
        %1600 = vmatmul.mubr.f32.gmra.mrb[0].mxu0 %v1451
        %v1601 = vpop.f32.mrb[0].mxu0
        %v1602 = vadd.f32 0.0, %v1601
        %v1603 = vpop.f32.mrb[0].mxu0
        %1604 = vmatprep.mubr.f32.mxu0 0.0
        %1605 = vmatmul.mubr.f32.gmra.mrb[0].mxu0 %v1454
        %v1606 = vpop.f32.mrb[0].mxu0
        %v1607 = vadd.f32 0.0, %v1606
        %v1608 = vpop.f32.mrb[0].mxu0
        %1609 = vmatprep.mubr.f32.mxu0 0.0
        %1610 = vmatmul.mubr.f32.gmra.mrb[0].mxu0 %v1457
        %v1611 = vpop.f32.mrb[0].mxu0
        %v1612 = vadd.f32 0.0, %v1611
        %v1613 = vpop.f32.mrb[0].mxu0
        %1614 = vmatprep.mubr.f32.mxu0 0.0
        %1615 = vmatmul.mubr.f32.gmra.mrb[0].mxu0 %v1460
        %v1616 = vpop.f32.mrb[0].mxu0
        %v1617 = vadd.f32 0.0, %v1616
        %v1618 = vpop.f32.mrb[0].mxu0
        %1619 = vdwg.mxu0
        %v1620 = vadd.f32 %v1372, %v1532
        %v1621 = vadd.f32 %v1373, %v1537
        %v1622 = vadd.f32 %v1374, %v1542
        %v1623 = vadd.f32 %v1375, %v1547
        %v1624 = vadd.f32 %v1376, %v1552
        %v1625 = vadd.f32 %v1377, %v1557
        %v1626 = vadd.f32 %v1378, %v1562
        %v1627 = vadd.f32 %v1379, %v1567
        %v1628 = vadd.f32 %v1380, %v1572
        %v1629 = vadd.f32 %v1381, %v1577
        %v1630 = vadd.f32 %v1382, %v1582
        %v1631 = vadd.f32 %v1383, %v1587
        %v1632 = vadd.f32 %v1384, %v1592
        %v1633 = vadd.f32 %v1385, %v1597
        %v1634 = vadd.f32 %v1386, %v1602
        %v1635 = vadd.f32 %v1387, %v1607
        %v1636 = vadd.f32 %v1388, %v1612
        %v1637 = vadd.f32 %v1389, %v1617
        %v1638 = vld [vmem:[%s413 + $0x14] sm:$0xff]
        %v1639 = vld [vmem:[%s413 + $0x1c] sm:$0xff]
        %v1640 = vld [vmem:[%s413 + $0x24] sm:$0xff]
        %v1641 = vld [vmem:[%s413 + $0x2c] sm:$0xff]
        %v1642 = vld [vmem:[%s413 + $0x34] sm:$0xff]
        %v1643 = vld [vmem:[%s413 + $0x3c] sm:$0xff]
        %v1644 = vld [vmem:[%s413 + $0x44] sm:$0xff]
        %v1645 = vld [vmem:[%s413 + $0x4c] sm:$0xff]
        %v1646 = vld [vmem:[%s413 + $0x54] sm:$0xff]
        %v1647 = vld [vmem:[%s413 + $0x5c] sm:$0xff]
        %v1648 = vld [vmem:[%s413 + $0x64] sm:$0xff]
        %v1649 = vld [vmem:[%s413 + $0x6c] sm:$0xff]
        %v1650 = vld [vmem:[%s413 + $0x74] sm:$0xff]
        %v1651 = vld [vmem:[%s413 + $0x7c] sm:$0xff]
        %v1652 = vld [vmem:[%s413 + $0x84] sm:$0xff]
        %v1653 = vld [vmem:[%s413 + $0x8c] sm:$0xff]
        %v1654 = vld [vmem:[%s413 + $0x94] sm:$0xff]
        %v1655 = vld [vmem:[%s413 + $0x9c] sm:$0xff]
        %v1656 = vrot.slane %v429, 4
        %v1658 = vsel %vm470, %v1638, 0
        %v1661 = vsel %vm470, %v1639, 0
        %v1664 = vsel %vm470, %v1640, 0
        %v1667 = vsel %vm470, %v1641, 0
        %v1670 = vsel %vm470, %v1642, 0
        %v1673 = vsel %vm470, %v1643, 0
        %v1676 = vsel %vm470, %v1644, 0
        %v1679 = vsel %vm470, %v1645, 0
        %v1682 = vsel %vm470, %v1646, 0
        %v1685 = vsel %vm470, %v1647, 0
        %v1688 = vsel %vm470, %v1648, 0
        %v1691 = vsel %vm470, %v1649, 0
        %v1694 = vsel %vm470, %v1650, 0
        %v1697 = vsel %vm470, %v1651, 0
        %v1700 = vsel %vm470, %v1652, 0
        %v1703 = vsel %vm470, %v1653, 0
        %v1706 = vsel %vm470, %v1654, 0
        %v1709 = vsel %vm470, %v1655, 0
        %v1711 = vsel %vm525, %v1656, 0
        %1713 = vmatprep.subr.mxu0 0.0
        %1714 = vmatpush1.msra.mxu0 %v1711
        %1715 = vmatprep.subr.mxu0 0.0
        %1716 = vmatpush1.msra.mxu0 0.0
        %1717 = vmatprep.subr.mxu0 0.0
        %1718 = vmatpush1.msra.mxu0 0.0
        %1719 = vmatprep.subr.mxu0 0.0
        %1720 = vmatpush1.msra.mxu0 0.0
        %1721 = vmatprep.subr.mxu0 0.0
        %1722 = vmatpush1.msra.mxu0 0.0
        %1723 = vmatprep.subr.mxu0 0.0
        %1724 = vmatpush1.msra.mxu0 0.0
        %1725 = vmatprep.subr.mxu0 0.0
        %1726 = vmatpush1.msra.mxu0 0.0
        %1727 = vmatprep.subr.mxu0 0.0
        %1728 = vmatpush1.msra.mxu0 0.0
        %1729 = vmatprep.subr.mxu0 0.0
        %1730 = vmatpush1.msra.mxu0 0.0
        %1731 = vmatprep.subr.mxu0 0.0
        %1732 = vmatpush1.msra.mxu0 0.0
        %1733 = vmatprep.subr.mxu0 0.0
        %1734 = vmatpush1.msra.mxu0 0.0
        %1735 = vmatprep.subr.mxu0 0.0
        %1736 = vmatpush1.msra.mxu0 0.0
        %1737 = vmatprep.subr.mxu0 0.0
        %1738 = vmatpush1.msra.mxu0 0.0
        %1739 = vmatprep.subr.mxu0 0.0
        %1740 = vmatpush1.msra.mxu0 0.0
        %1741 = vmatprep.subr.mxu0 0.0
        %1742 = vmatpush1.msra.mxu0 0.0
        %1743 = vmatprep.subr.mxu0 0.0
        %1744 = vmatpush1.msra.mxu0 0.0
        %1745 = vmatprep.subr.mxu0 0.0
        %1746 = vmatpush1.msra.mxu0 0.0
        %1747 = vmatprep.subr.mxu0 0.0
        %1748 = vmatpush1.msra.mxu0 0.0
        %1749 = vmatprep.subr.mxu0 0.0
        %1750 = vmatpush1.msra.mxu0 0.0
        %1751 = vmatprep.subr.mxu0 0.0
        %1752 = vmatpush1.msra.mxu0 0.0
        %1753 = vmatprep.subr.mxu0 0.0
        %1754 = vmatpush1.msra.mxu0 0.0
        %1755 = vmatprep.subr.mxu0 0.0
        %1756 = vmatpush1.msra.mxu0 0.0
        %1757 = vmatprep.subr.mxu0 0.0
        %1758 = vmatpush1.msra.mxu0 0.0
        %1759 = vmatprep.subr.mxu0 0.0
        %1760 = vmatpush1.msra.mxu0 0.0
        %1761 = vmatprep.subr.mxu0 0.0
        %1762 = vmatpush1.msra.mxu0 0.0
        %1763 = vmatprep.subr.mxu0 0.0
        %1764 = vmatpush1.msra.mxu0 0.0
        %1765 = vmatprep.subr.mxu0 0.0
        %1766 = vmatpush1.msra.mxu0 0.0
        %1767 = vmatprep.subr.mxu0 0.0
        %1768 = vmatpush1.msra.mxu0 0.0
        %1769 = vmatprep.subr.mxu0 0.0
        %1770 = vmatpush1.msra.mxu0 0.0
        %1771 = vmatprep.subr.mxu0 0.0
        %1772 = vmatpush1.msra.mxu0 0.0
        %1773 = vmatprep.subr.mxu0 0.0
        %1774 = vmatpush1.msra.mxu0 0.0
        %1775 = vmatprep.subr.mxu0 0.0
        %1776 = vmatpush1.msra.mxu0 0.0
        %1777 = vmatprep.mubr.f32.mxu0 0.0
        %1778 = vmatmul.mubr.f32.gmra.mrb[0].mxu0 %v1658
        %v1779 = vpop.f32.mrb[0].mxu0
        %v1780 = vadd.f32 0.0, %v1779
        %v1781 = vpop.f32.mrb[0].mxu0
        %1782 = vmatprep.mubr.f32.mxu0 0.0
        %1783 = vmatmul.mubr.f32.gmra.mrb[0].mxu0 %v1661
        %v1784 = vpop.f32.mrb[0].mxu0
        %v1785 = vadd.f32 0.0, %v1784
        %v1786 = vpop.f32.mrb[0].mxu0
        %1787 = vmatprep.mubr.f32.mxu0 0.0
        %1788 = vmatmul.mubr.f32.gmra.mrb[0].mxu0 %v1664
        %v1789 = vpop.f32.mrb[0].mxu0
        %v1790 = vadd.f32 0.0, %v1789
        %v1791 = vpop.f32.mrb[0].mxu0
        %1792 = vmatprep.mubr.f32.mxu0 0.0
        %1793 = vmatmul.mubr.f32.gmra.mrb[0].mxu0 %v1667
        %v1794 = vpop.f32.mrb[0].mxu0
        %v1795 = vadd.f32 0.0, %v1794
        %v1796 = vpop.f32.mrb[0].mxu0
        %1797 = vmatprep.mubr.f32.mxu0 0.0
        %1798 = vmatmul.mubr.f32.gmra.mrb[0].mxu0 %v1670
        %v1799 = vpop.f32.mrb[0].mxu0
        %v1800 = vadd.f32 0.0, %v1799
        %v1801 = vpop.f32.mrb[0].mxu0
        %1802 = vmatprep.mubr.f32.mxu0 0.0
        %1803 = vmatmul.mubr.f32.gmra.mrb[0].mxu0 %v1673
        %v1804 = vpop.f32.mrb[0].mxu0
        %v1805 = vadd.f32 0.0, %v1804
        %v1806 = vpop.f32.mrb[0].mxu0
        %1807 = vmatprep.mubr.f32.mxu0 0.0
        %1808 = vmatmul.mubr.f32.gmra.mrb[0].mxu0 %v1676
        %v1809 = vpop.f32.mrb[0].mxu0
        %v1810 = vadd.f32 0.0, %v1809
        %v1811 = vpop.f32.mrb[0].mxu0
        %1812 = vmatprep.mubr.f32.mxu0 0.0
        %1813 = vmatmul.mubr.f32.gmra.mrb[0].mxu0 %v1679
        %v1814 = vpop.f32.mrb[0].mxu0
        %v1815 = vadd.f32 0.0, %v1814
        %v1816 = vpop.f32.mrb[0].mxu0
        %1817 = vmatprep.mubr.f32.mxu0 0.0
        %1818 = vmatmul.mubr.f32.gmra.mrb[0].mxu0 %v1682
        %v1819 = vpop.f32.mrb[0].mxu0
        %v1820 = vadd.f32 0.0, %v1819
        %v1821 = vpop.f32.mrb[0].mxu0
        %1822 = vmatprep.mubr.f32.mxu0 0.0
        %1823 = vmatmul.mubr.f32.gmra.mrb[0].mxu0 %v1685
        %v1824 = vpop.f32.mrb[0].mxu0
        %v1825 = vadd.f32 0.0, %v1824
        %v1826 = vpop.f32.mrb[0].mxu0
        %1827 = vmatprep.mubr.f32.mxu0 0.0
        %1828 = vmatmul.mubr.f32.gmra.mrb[0].mxu0 %v1688
        %v1829 = vpop.f32.mrb[0].mxu0
        %v1830 = vadd.f32 0.0, %v1829
        %v1831 = vpop.f32.mrb[0].mxu0
        %1832 = vmatprep.mubr.f32.mxu0 0.0
        %1833 = vmatmul.mubr.f32.gmra.mrb[0].mxu0 %v1691
        %v1834 = vpop.f32.mrb[0].mxu0
        %v1835 = vadd.f32 0.0, %v1834
        %v1836 = vpop.f32.mrb[0].mxu0
        %1837 = vmatprep.mubr.f32.mxu0 0.0
        %1838 = vmatmul.mubr.f32.gmra.mrb[0].mxu0 %v1694
        %v1839 = vpop.f32.mrb[0].mxu0
        %v1840 = vadd.f32 0.0, %v1839
        %v1841 = vpop.f32.mrb[0].mxu0
        %1842 = vmatprep.mubr.f32.mxu0 0.0
        %1843 = vmatmul.mubr.f32.gmra.mrb[0].mxu0 %v1697
        %v1844 = vpop.f32.mrb[0].mxu0
        %v1845 = vadd.f32 0.0, %v1844
        %v1846 = vpop.f32.mrb[0].mxu0
        %1847 = vmatprep.mubr.f32.mxu0 0.0
        %1848 = vmatmul.mubr.f32.gmra.mrb[0].mxu0 %v1700
        %v1849 = vpop.f32.mrb[0].mxu0
        %v1850 = vadd.f32 0.0, %v1849
        %v1851 = vpop.f32.mrb[0].mxu0
        %1852 = vmatprep.mubr.f32.mxu0 0.0
        %1853 = vmatmul.mubr.f32.gmra.mrb[0].mxu0 %v1703
        %v1854 = vpop.f32.mrb[0].mxu0
        %v1855 = vadd.f32 0.0, %v1854
        %v1856 = vpop.f32.mrb[0].mxu0
        %1857 = vmatprep.mubr.f32.mxu0 0.0
        %1858 = vmatmul.mubr.f32.gmra.mrb[0].mxu0 %v1706
        %v1859 = vpop.f32.mrb[0].mxu0
        %v1860 = vadd.f32 0.0, %v1859
        %v1861 = vpop.f32.mrb[0].mxu0
        %1862 = vmatprep.mubr.f32.mxu0 0.0
        %1863 = vmatmul.mubr.f32.gmra.mrb[0].mxu0 %v1709
        %v1864 = vpop.f32.mrb[0].mxu0
        %v1865 = vadd.f32 0.0, %v1864
        %v1866 = vpop.f32.mrb[0].mxu0
        %1867 = vdwg.mxu0
        %v1868 = vadd.f32 %v1620, %v1780
        %v1869 = vadd.f32 %v1621, %v1785
        %v1870 = vadd.f32 %v1622, %v1790
        %v1871 = vadd.f32 %v1623, %v1795
        %v1872 = vadd.f32 %v1624, %v1800
        %v1873 = vadd.f32 %v1625, %v1805
        %v1874 = vadd.f32 %v1626, %v1810
        %v1875 = vadd.f32 %v1627, %v1815
        %v1876 = vadd.f32 %v1628, %v1820
        %v1877 = vadd.f32 %v1629, %v1825
        %v1878 = vadd.f32 %v1630, %v1830
        %v1879 = vadd.f32 %v1631, %v1835
        %v1880 = vadd.f32 %v1632, %v1840
        %v1881 = vadd.f32 %v1633, %v1845
        %v1882 = vadd.f32 %v1634, %v1850
        %v1883 = vadd.f32 %v1635, %v1855
        %v1884 = vadd.f32 %v1636, %v1860
        %v1885 = vadd.f32 %v1637, %v1865
        %v1886 = vld [vmem:[%s413 + $0x24] sm:$0xff]
        %v1887 = vld [vmem:[%s413 + $0x2c] sm:$0xff]
        %v1888 = vld [vmem:[%s413 + $0x34] sm:$0xff]
        %v1889 = vld [vmem:[%s413 + $0x3c] sm:$0xff]
        %v1890 = vld [vmem:[%s413 + $0x44] sm:$0xff]
        %v1891 = vld [vmem:[%s413 + $0x4c] sm:$0xff]
        %v1892 = vld [vmem:[%s413 + $0x54] sm:$0xff]
        %v1893 = vld [vmem:[%s413 + $0x5c] sm:$0xff]
        %v1894 = vld [vmem:[%s413 + $0x64] sm:$0xff]
        %v1895 = vld [vmem:[%s413 + $0x6c] sm:$0xff]
        %v1896 = vld [vmem:[%s413 + $0x74] sm:$0xff]
        %v1897 = vld [vmem:[%s413 + $0x7c] sm:$0xff]
        %v1898 = vld [vmem:[%s413 + $0x84] sm:$0xff]
        %v1899 = vld [vmem:[%s413 + $0x8c] sm:$0xff]
        %v1900 = vld [vmem:[%s413 + $0x94] sm:$0xff]
        %v1901 = vld [vmem:[%s413 + $0x9c] sm:$0xff]
        %v1902 = vld [vmem:[%s413 + $0xa4] sm:$0xff]
        %v1903 = vld [vmem:[%s413 + $0xac] sm:$0xff]
        %v1905 = vsel %vm470, %v1886, 0
        %v1908 = vsel %vm470, %v1887, 0
        %v1911 = vsel %vm470, %v1888, 0
        %v1914 = vsel %vm470, %v1889, 0
        %v1917 = vsel %vm470, %v1890, 0
        %v1920 = vsel %vm470, %v1891, 0
        %v1923 = vsel %vm470, %v1892, 0
        %v1926 = vsel %vm470, %v1893, 0
        %v1929 = vsel %vm470, %v1894, 0
        %v1932 = vsel %vm470, %v1895, 0
        %v1935 = vsel %vm470, %v1896, 0
        %v1938 = vsel %vm470, %v1897, 0
        %v1941 = vsel %vm470, %v1898, 0
        %v1944 = vsel %vm470, %v1899, 0
        %v1947 = vsel %vm470, %v1900, 0
        %v1950 = vsel %vm470, %v1901, 0
        %v1953 = vsel %vm470, %v1902, 0
        %v1956 = vsel %vm470, %v1903, 0
        %v1959 = vsel %vm525, %v430, 0
        %1961 = vmatprep.subr.mxu0 0.0
        %1962 = vmatpush1.msra.mxu0 %v1959
        %1963 = vmatprep.subr.mxu0 0.0
        %1964 = vmatpush1.msra.mxu0 0.0
        %1965 = vmatprep.subr.mxu0 0.0
        %1966 = vmatpush1.msra.mxu0 0.0
        %1967 = vmatprep.subr.mxu0 0.0
        %1968 = vmatpush1.msra.mxu0 0.0
        %1969 = vmatprep.subr.mxu0 0.0
        %1970 = vmatpush1.msra.mxu0 0.0
        %1971 = vmatprep.subr.mxu0 0.0
        %1972 = vmatpush1.msra.mxu0 0.0
        %1973 = vmatprep.subr.mxu0 0.0
        %1974 = vmatpush1.msra.mxu0 0.0
        %1975 = vmatprep.subr.mxu0 0.0
        %1976 = vmatpush1.msra.mxu0 0.0
        %1977 = vmatprep.subr.mxu0 0.0
        %1978 = vmatpush1.msra.mxu0 0.0
        %1979 = vmatprep.subr.mxu0 0.0
        %1980 = vmatpush1.msra.mxu0 0.0
        %1981 = vmatprep.subr.mxu0 0.0
        %1982 = vmatpush1.msra.mxu0 0.0
        %1983 = vmatprep.subr.mxu0 0.0
        %1984 = vmatpush1.msra.mxu0 0.0
        %1985 = vmatprep.subr.mxu0 0.0
        %1986 = vmatpush1.msra.mxu0 0.0
        %1987 = vmatprep.subr.mxu0 0.0
        %1988 = vmatpush1.msra.mxu0 0.0
        %1989 = vmatprep.subr.mxu0 0.0
        %1990 = vmatpush1.msra.mxu0 0.0
        %1991 = vmatprep.subr.mxu0 0.0
        %1992 = vmatpush1.msra.mxu0 0.0
        %1993 = vmatprep.subr.mxu0 0.0
        %1994 = vmatpush1.msra.mxu0 0.0
        %1995 = vmatprep.subr.mxu0 0.0
        %1996 = vmatpush1.msra.mxu0 0.0
        %1997 = vmatprep.subr.mxu0 0.0
        %1998 = vmatpush1.msra.mxu0 0.0
        %1999 = vmatprep.subr.mxu0 0.0
        %2000 = vmatpush1.msra.mxu0 0.0
        %2001 = vmatprep.subr.mxu0 0.0
        %2002 = vmatpush1.msra.mxu0 0.0
        %2003 = vmatprep.subr.mxu0 0.0
        %2004 = vmatpush1.msra.mxu0 0.0
        %2005 = vmatprep.subr.mxu0 0.0
        %2006 = vmatpush1.msra.mxu0 0.0
        %2007 = vmatprep.subr.mxu0 0.0
        %2008 = vmatpush1.msra.mxu0 0.0
        %2009 = vmatprep.subr.mxu0 0.0
        %2010 = vmatpush1.msra.mxu0 0.0
        %2011 = vmatprep.subr.mxu0 0.0
        %2012 = vmatpush1.msra.mxu0 0.0
        %2013 = vmatprep.subr.mxu0 0.0
        %2014 = vmatpush1.msra.mxu0 0.0
        %2015 = vmatprep.subr.mxu0 0.0
        %2016 = vmatpush1.msra.mxu0 0.0
        %2017 = vmatprep.subr.mxu0 0.0
        %2018 = vmatpush1.msra.mxu0 0.0
        %2019 = vmatprep.subr.mxu0 0.0
        %2020 = vmatpush1.msra.mxu0 0.0
        %2021 = vmatprep.subr.mxu0 0.0
        %2022 = vmatpush1.msra.mxu0 0.0
        %2023 = vmatprep.subr.mxu0 0.0
        %2024 = vmatpush1.msra.mxu0 0.0
        %2025 = vmatprep.mubr.f32.mxu0 0.0
        %2026 = vmatmul.mubr.f32.gmra.mrb[0].mxu0 %v1905
        %v2027 = vpop.f32.mrb[0].mxu0
        %v2028 = vadd.f32 0.0, %v2027
        %v2029 = vpop.f32.mrb[0].mxu0
        %2030 = vmatprep.mubr.f32.mxu0 0.0
        %2031 = vmatmul.mubr.f32.gmra.mrb[0].mxu0 %v1908
        %v2032 = vpop.f32.mrb[0].mxu0
        %v2033 = vadd.f32 0.0, %v2032
        %v2034 = vpop.f32.mrb[0].mxu0
        %2035 = vmatprep.mubr.f32.mxu0 0.0
        %2036 = vmatmul.mubr.f32.gmra.mrb[0].mxu0 %v1911
        %v2037 = vpop.f32.mrb[0].mxu0
        %v2038 = vadd.f32 0.0, %v2037
        %v2039 = vpop.f32.mrb[0].mxu0
        %2040 = vmatprep.mubr.f32.mxu0 0.0
        %2041 = vmatmul.mubr.f32.gmra.mrb[0].mxu0 %v1914
        %v2042 = vpop.f32.mrb[0].mxu0
        %v2043 = vadd.f32 0.0, %v2042
        %v2044 = vpop.f32.mrb[0].mxu0
        %2045 = vmatprep.mubr.f32.mxu0 0.0
        %2046 = vmatmul.mubr.f32.gmra.mrb[0].mxu0 %v1917
        %v2047 = vpop.f32.mrb[0].mxu0
        %v2048 = vadd.f32 0.0, %v2047
        %v2049 = vpop.f32.mrb[0].mxu0
        %2050 = vmatprep.mubr.f32.mxu0 0.0
        %2051 = vmatmul.mubr.f32.gmra.mrb[0].mxu0 %v1920
        %v2052 = vpop.f32.mrb[0].mxu0
        %v2053 = vadd.f32 0.0, %v2052
        %v2054 = vpop.f32.mrb[0].mxu0
        %2055 = vmatprep.mubr.f32.mxu0 0.0
        %2056 = vmatmul.mubr.f32.gmra.mrb[0].mxu0 %v1923
        %v2057 = vpop.f32.mrb[0].mxu0
        %v2058 = vadd.f32 0.0, %v2057
        %v2059 = vpop.f32.mrb[0].mxu0
        %2060 = vmatprep.mubr.f32.mxu0 0.0
        %2061 = vmatmul.mubr.f32.gmra.mrb[0].mxu0 %v1926
        %v2062 = vpop.f32.mrb[0].mxu0
        %v2063 = vadd.f32 0.0, %v2062
        %v2064 = vpop.f32.mrb[0].mxu0
        %2065 = vmatprep.mubr.f32.mxu0 0.0
        %2066 = vmatmul.mubr.f32.gmra.mrb[0].mxu0 %v1929
        %v2067 = vpop.f32.mrb[0].mxu0
        %v2068 = vadd.f32 0.0, %v2067
        %v2069 = vpop.f32.mrb[0].mxu0
        %2070 = vmatprep.mubr.f32.mxu0 0.0
        %2071 = vmatmul.mubr.f32.gmra.mrb[0].mxu0 %v1932
        %v2072 = vpop.f32.mrb[0].mxu0
        %v2073 = vadd.f32 0.0, %v2072
        %v2074 = vpop.f32.mrb[0].mxu0
        %2075 = vmatprep.mubr.f32.mxu0 0.0
        %2076 = vmatmul.mubr.f32.gmra.mrb[0].mxu0 %v1935
        %v2077 = vpop.f32.mrb[0].mxu0
        %v2078 = vadd.f32 0.0, %v2077
        %v2079 = vpop.f32.mrb[0].mxu0
        %2080 = vmatprep.mubr.f32.mxu0 0.0
        %2081 = vmatmul.mubr.f32.gmra.mrb[0].mxu0 %v1938
        %v2082 = vpop.f32.mrb[0].mxu0
        %v2083 = vadd.f32 0.0, %v2082
        %v2084 = vpop.f32.mrb[0].mxu0
        %2085 = vmatprep.mubr.f32.mxu0 0.0
        %2086 = vmatmul.mubr.f32.gmra.mrb[0].mxu0 %v1941
        %v2087 = vpop.f32.mrb[0].mxu0
        %v2088 = vadd.f32 0.0, %v2087
        %v2089 = vpop.f32.mrb[0].mxu0
        %2090 = vmatprep.mubr.f32.mxu0 0.0
        %2091 = vmatmul.mubr.f32.gmra.mrb[0].mxu0 %v1944
        %v2092 = vpop.f32.mrb[0].mxu0
        %v2093 = vadd.f32 0.0, %v2092
        %v2094 = vpop.f32.mrb[0].mxu0
        %2095 = vmatprep.mubr.f32.mxu0 0.0
        %2096 = vmatmul.mubr.f32.gmra.mrb[0].mxu0 %v1947
        %v2097 = vpop.f32.mrb[0].mxu0
        %v2098 = vadd.f32 0.0, %v2097
        %v2099 = vpop.f32.mrb[0].mxu0
        %2100 = vmatprep.mubr.f32.mxu0 0.0
        %2101 = vmatmul.mubr.f32.gmra.mrb[0].mxu0 %v1950
        %v2102 = vpop.f32.mrb[0].mxu0
        %v2103 = vadd.f32 0.0, %v2102
        %v2104 = vpop.f32.mrb[0].mxu0
        %2105 = vmatprep.mubr.f32.mxu0 0.0
        %2106 = vmatmul.mubr.f32.gmra.mrb[0].mxu0 %v1953
        %v2107 = vpop.f32.mrb[0].mxu0
        %v2108 = vadd.f32 0.0, %v2107
        %v2109 = vpop.f32.mrb[0].mxu0
        %2110 = vmatprep.mubr.f32.mxu0 0.0
        %2111 = vmatmul.mubr.f32.gmra.mrb[0].mxu0 %v1956
        %v2112 = vpop.f32.mrb[0].mxu0
        %v2113 = vadd.f32 0.0, %v2112
        %v2114 = vpop.f32.mrb[0].mxu0
        %2115 = vdwg.mxu0
        %v2116 = vadd.f32 %v1868, %v2028
        %v2117 = vadd.f32 %v1869, %v2033
        %v2118 = vadd.f32 %v1870, %v2038
        %v2119 = vadd.f32 %v1871, %v2043
        %v2120 = vadd.f32 %v1872, %v2048
        %v2121 = vadd.f32 %v1873, %v2053
        %v2122 = vadd.f32 %v1874, %v2058
        %v2123 = vadd.f32 %v1875, %v2063
        %v2124 = vadd.f32 %v1876, %v2068
        %v2125 = vadd.f32 %v1877, %v2073
        %v2126 = vadd.f32 %v1878, %v2078
        %v2127 = vadd.f32 %v1879, %v2083
        %v2128 = vadd.f32 %v1880, %v2088
        %v2129 = vadd.f32 %v1881, %v2093
        %v2130 = vadd.f32 %v1882, %v2098
        %v2131 = vadd.f32 %v1883, %v2103
        %v2132 = vadd.f32 %v1884, %v2108
        %v2133 = vadd.f32 %v1885, %v2113
        %v2134 = vld [vmem:[%s413 + $0x25] sm:$0xff]
        %v2135 = vld [vmem:[%s413 + $0x2d] sm:$0xff]
        %v2136 = vld [vmem:[%s413 + $0x35] sm:$0xff]
        %v2137 = vld [vmem:[%s413 + $0x3d] sm:$0xff]
        %v2138 = vld [vmem:[%s413 + $0x45] sm:$0xff]
        %v2139 = vld [vmem:[%s413 + $0x4d] sm:$0xff]
        %v2140 = vld [vmem:[%s413 + $0x55] sm:$0xff]
        %v2141 = vld [vmem:[%s413 + $0x5d] sm:$0xff]
        %v2142 = vld [vmem:[%s413 + $0x65] sm:$0xff]
        %v2143 = vld [vmem:[%s413 + $0x6d] sm:$0xff]
        %v2144 = vld [vmem:[%s413 + $0x75] sm:$0xff]
        %v2145 = vld [vmem:[%s413 + $0x7d] sm:$0xff]
        %v2146 = vld [vmem:[%s413 + $0x85] sm:$0xff]
        %v2147 = vld [vmem:[%s413 + $0x8d] sm:$0xff]
        %v2148 = vld [vmem:[%s413 + $0x95] sm:$0xff]
        %v2149 = vld [vmem:[%s413 + $0x9d] sm:$0xff]
        %v2150 = vld [vmem:[%s413 + $0xa5] sm:$0xff]
        %v2151 = vld [vmem:[%s413 + $0xad] sm:$0xff]
        %v2152 = vrot.slane %v430, 4
        %v2154 = vsel %vm470, %v2134, 0
        %v2157 = vsel %vm470, %v2135, 0
        %v2160 = vsel %vm470, %v2136, 0
        %v2163 = vsel %vm470, %v2137, 0
        %v2166 = vsel %vm470, %v2138, 0
        %v2169 = vsel %vm470, %v2139, 0
        %v2172 = vsel %vm470, %v2140, 0
        %v2175 = vsel %vm470, %v2141, 0
        %v2178 = vsel %vm470, %v2142, 0
        %v2181 = vsel %vm470, %v2143, 0
        %v2184 = vsel %vm470, %v2144, 0
        %v2187 = vsel %vm470, %v2145, 0
        %v2190 = vsel %vm470, %v2146, 0
        %v2193 = vsel %vm470, %v2147, 0
        %v2196 = vsel %vm470, %v2148, 0
        %v2199 = vsel %vm470, %v2149, 0
        %v2202 = vsel %vm470, %v2150, 0
        %v2205 = vsel %vm470, %v2151, 0
        %v2207 = vsel %vm525, %v2152, 0
        %2209 = vmatprep.subr.mxu0 0.0
        %2210 = vmatpush1.msra.mxu0 %v2207
        %2211 = vmatprep.subr.mxu0 0.0
        %2212 = vmatpush1.msra.mxu0 0.0
        %2213 = vmatprep.subr.mxu0 0.0
        %2214 = vmatpush1.msra.mxu0 0.0
        %2215 = vmatprep.subr.mxu0 0.0
        %2216 = vmatpush1.msra.mxu0 0.0
        %2217 = vmatprep.subr.mxu0 0.0
        %2218 = vmatpush1.msra.mxu0 0.0
        %2219 = vmatprep.subr.mxu0 0.0
        %2220 = vmatpush1.msra.mxu0 0.0
        %2221 = vmatprep.subr.mxu0 0.0
        %2222 = vmatpush1.msra.mxu0 0.0
        %2223 = vmatprep.subr.mxu0 0.0
        %2224 = vmatpush1.msra.mxu0 0.0
        %2225 = vmatprep.subr.mxu0 0.0
        %2226 = vmatpush1.msra.mxu0 0.0
        %2227 = vmatprep.subr.mxu0 0.0
        %2228 = vmatpush1.msra.mxu0 0.0
        %2229 = vmatprep.subr.mxu0 0.0
        %2230 = vmatpush1.msra.mxu0 0.0
        %2231 = vmatprep.subr.mxu0 0.0
        %2232 = vmatpush1.msra.mxu0 0.0
        %2233 = vmatprep.subr.mxu0 0.0
        %2234 = vmatpush1.msra.mxu0 0.0
        %2235 = vmatprep.subr.mxu0 0.0
        %2236 = vmatpush1.msra.mxu0 0.0
        %2237 = vmatprep.subr.mxu0 0.0
        %2238 = vmatpush1.msra.mxu0 0.0
        %2239 = vmatprep.subr.mxu0 0.0
        %2240 = vmatpush1.msra.mxu0 0.0
        %2241 = vmatprep.subr.mxu0 0.0
        %2242 = vmatpush1.msra.mxu0 0.0
        %2243 = vmatprep.subr.mxu0 0.0
        %2244 = vmatpush1.msra.mxu0 0.0
        %2245 = vmatprep.subr.mxu0 0.0
        %2246 = vmatpush1.msra.mxu0 0.0
        %2247 = vmatprep.subr.mxu0 0.0
        %2248 = vmatpush1.msra.mxu0 0.0
        %2249 = vmatprep.subr.mxu0 0.0
        %2250 = vmatpush1.msra.mxu0 0.0
        %2251 = vmatprep.subr.mxu0 0.0
        %2252 = vmatpush1.msra.mxu0 0.0
        %2253 = vmatprep.subr.mxu0 0.0
        %2254 = vmatpush1.msra.mxu0 0.0
        %2255 = vmatprep.subr.mxu0 0.0
        %2256 = vmatpush1.msra.mxu0 0.0
        %2257 = vmatprep.subr.mxu0 0.0
        %2258 = vmatpush1.msra.mxu0 0.0
        %2259 = vmatprep.subr.mxu0 0.0
        %2260 = vmatpush1.msra.mxu0 0.0
        %2261 = vmatprep.subr.mxu0 0.0
        %2262 = vmatpush1.msra.mxu0 0.0
        %2263 = vmatprep.subr.mxu0 0.0
        %2264 = vmatpush1.msra.mxu0 0.0
        %2265 = vmatprep.subr.mxu0 0.0
        %2266 = vmatpush1.msra.mxu0 0.0
        %2267 = vmatprep.subr.mxu0 0.0
        %2268 = vmatpush1.msra.mxu0 0.0
        %2269 = vmatprep.subr.mxu0 0.0
        %2270 = vmatpush1.msra.mxu0 0.0
        %2271 = vmatprep.subr.mxu0 0.0
        %2272 = vmatpush1.msra.mxu0 0.0
        %2273 = vmatprep.mubr.f32.mxu0 0.0
        %2274 = vmatmul.mubr.f32.gmra.mrb[0].mxu0 %v2154
        %v2275 = vpop.f32.mrb[0].mxu0
        %v2276 = vadd.f32 0.0, %v2275
        %v2277 = vpop.f32.mrb[0].mxu0
        %2278 = vmatprep.mubr.f32.mxu0 0.0
        %2279 = vmatmul.mubr.f32.gmra.mrb[0].mxu0 %v2157
        %v2280 = vpop.f32.mrb[0].mxu0
        %v2281 = vadd.f32 0.0, %v2280
        %v2282 = vpop.f32.mrb[0].mxu0
        %2283 = vmatprep.mubr.f32.mxu0 0.0
        %2284 = vmatmul.mubr.f32.gmra.mrb[0].mxu0 %v2160
        %v2285 = vpop.f32.mrb[0].mxu0
        %v2286 = vadd.f32 0.0, %v2285
        %v2287 = vpop.f32.mrb[0].mxu0
        %2288 = vmatprep.mubr.f32.mxu0 0.0
        %2289 = vmatmul.mubr.f32.gmra.mrb[0].mxu0 %v2163
        %v2290 = vpop.f32.mrb[0].mxu0
        %v2291 = vadd.f32 0.0, %v2290
        %v2292 = vpop.f32.mrb[0].mxu0
        %2293 = vmatprep.mubr.f32.mxu0 0.0
        %2294 = vmatmul.mubr.f32.gmra.mrb[0].mxu0 %v2166
        %v2295 = vpop.f32.mrb[0].mxu0
        %v2296 = vadd.f32 0.0, %v2295
        %v2297 = vpop.f32.mrb[0].mxu0
        %2298 = vmatprep.mubr.f32.mxu0 0.0
        %2299 = vmatmul.mubr.f32.gmra.mrb[0].mxu0 %v2169
        %v2300 = vpop.f32.mrb[0].mxu0
        %v2301 = vadd.f32 0.0, %v2300
        %v2302 = vpop.f32.mrb[0].mxu0
        %2303 = vmatprep.mubr.f32.mxu0 0.0
        %2304 = vmatmul.mubr.f32.gmra.mrb[0].mxu0 %v2172
        %v2305 = vpop.f32.mrb[0].mxu0
        %v2306 = vadd.f32 0.0, %v2305
        %v2307 = vpop.f32.mrb[0].mxu0
        %2308 = vmatprep.mubr.f32.mxu0 0.0
        %2309 = vmatmul.mubr.f32.gmra.mrb[0].mxu0 %v2175
        %v2310 = vpop.f32.mrb[0].mxu0
        %v2311 = vadd.f32 0.0, %v2310
        %v2312 = vpop.f32.mrb[0].mxu0
        %2313 = vmatprep.mubr.f32.mxu0 0.0
        %2314 = vmatmul.mubr.f32.gmra.mrb[0].mxu0 %v2178
        %v2315 = vpop.f32.mrb[0].mxu0
        %v2316 = vadd.f32 0.0, %v2315
        %v2317 = vpop.f32.mrb[0].mxu0
        %2318 = vmatprep.mubr.f32.mxu0 0.0
        %2319 = vmatmul.mubr.f32.gmra.mrb[0].mxu0 %v2181
        %v2320 = vpop.f32.mrb[0].mxu0
        %v2321 = vadd.f32 0.0, %v2320
        %v2322 = vpop.f32.mrb[0].mxu0
        %2323 = vmatprep.mubr.f32.mxu0 0.0
        %2324 = vmatmul.mubr.f32.gmra.mrb[0].mxu0 %v2184
        %v2325 = vpop.f32.mrb[0].mxu0
        %v2326 = vadd.f32 0.0, %v2325
        %v2327 = vpop.f32.mrb[0].mxu0
        %2328 = vmatprep.mubr.f32.mxu0 0.0
        %2329 = vmatmul.mubr.f32.gmra.mrb[0].mxu0 %v2187
        %v2330 = vpop.f32.mrb[0].mxu0
        %v2331 = vadd.f32 0.0, %v2330
        %v2332 = vpop.f32.mrb[0].mxu0
        %2333 = vmatprep.mubr.f32.mxu0 0.0
        %2334 = vmatmul.mubr.f32.gmra.mrb[0].mxu0 %v2190
        %v2335 = vpop.f32.mrb[0].mxu0
        %v2336 = vadd.f32 0.0, %v2335
        %v2337 = vpop.f32.mrb[0].mxu0
        %2338 = vmatprep.mubr.f32.mxu0 0.0
        %2339 = vmatmul.mubr.f32.gmra.mrb[0].mxu0 %v2193
        %v2340 = vpop.f32.mrb[0].mxu0
        %v2341 = vadd.f32 0.0, %v2340
        %v2342 = vpop.f32.mrb[0].mxu0
        %2343 = vmatprep.mubr.f32.mxu0 0.0
        %2344 = vmatmul.mubr.f32.gmra.mrb[0].mxu0 %v2196
        %v2345 = vpop.f32.mrb[0].mxu0
        %v2346 = vadd.f32 0.0, %v2345
        %v2347 = vpop.f32.mrb[0].mxu0
        %2348 = vmatprep.mubr.f32.mxu0 0.0
        %2349 = vmatmul.mubr.f32.gmra.mrb[0].mxu0 %v2199
        %v2350 = vpop.f32.mrb[0].mxu0
        %v2351 = vadd.f32 0.0, %v2350
        %v2352 = vpop.f32.mrb[0].mxu0
        %2353 = vmatprep.mubr.f32.mxu0 0.0
        %2354 = vmatmul.mubr.f32.gmra.mrb[0].mxu0 %v2202
        %v2355 = vpop.f32.mrb[0].mxu0
        %v2356 = vadd.f32 0.0, %v2355
        %v2357 = vpop.f32.mrb[0].mxu0
        %2358 = vmatprep.mubr.f32.mxu0 0.0
        %2359 = vmatmul.mubr.f32.gmra.mrb[0].mxu0 %v2205
        %v2360 = vpop.f32.mrb[0].mxu0
        %v2361 = vadd.f32 0.0, %v2360
        %v2362 = vpop.f32.mrb[0].mxu0
        %2363 = vdwg.mxu0
        %v2364 = vadd.f32 %v2116, %v2276
        %v2365 = vadd.f32 %v2117, %v2281
        %v2366 = vadd.f32 %v2118, %v2286
        %v2367 = vadd.f32 %v2119, %v2291
        %v2368 = vadd.f32 %v2120, %v2296
        %v2369 = vadd.f32 %v2121, %v2301
        %v2370 = vadd.f32 %v2122, %v2306
        %v2371 = vadd.f32 %v2123, %v2311
        %v2372 = vadd.f32 %v2124, %v2316
        %v2373 = vadd.f32 %v2125, %v2321
        %v2374 = vadd.f32 %v2126, %v2326
        %v2375 = vadd.f32 %v2127, %v2331
        %v2376 = vadd.f32 %v2128, %v2336
        %v2377 = vadd.f32 %v2129, %v2341
        %v2378 = vadd.f32 %v2130, %v2346
        %v2379 = vadd.f32 %v2131, %v2351
        %v2380 = vadd.f32 %v2132, %v2356
        %v2381 = vadd.f32 %v2133, %v2361
        %v2382 = vld [vmem:[%s413 + $0x26] sm:$0xff]
        %v2383 = vld [vmem:[%s413 + $0x2e] sm:$0xff]
        %v2384 = vld [vmem:[%s413 + $0x36] sm:$0xff]
        %v2385 = vld [vmem:[%s413 + $0x3e] sm:$0xff]
        %v2386 = vld [vmem:[%s413 + $0x46] sm:$0xff]
        %v2387 = vld [vmem:[%s413 + $0x4e] sm:$0xff]
        %v2388 = vld [vmem:[%s413 + $0x56] sm:$0xff]
        %v2389 = vld [vmem:[%s413 + $0x5e] sm:$0xff]
        %v2390 = vld [vmem:[%s413 + $0x66] sm:$0xff]
        %v2391 = vld [vmem:[%s413 + $0x6e] sm:$0xff]
        %v2392 = vld [vmem:[%s413 + $0x76] sm:$0xff]
        %v2393 = vld [vmem:[%s413 + $0x7e] sm:$0xff]
        %v2394 = vld [vmem:[%s413 + $0x86] sm:$0xff]
        %v2395 = vld [vmem:[%s413 + $0x8e] sm:$0xff]
        %v2396 = vld [vmem:[%s413 + $0x96] sm:$0xff]
        %v2397 = vld [vmem:[%s413 + $0x9e] sm:$0xff]
        %v2398 = vld [vmem:[%s413 + $0xa6] sm:$0xff]
        %v2399 = vld [vmem:[%s413 + $0xae] sm:$0xff]
        %v2401 = vsel %vm470, %v2382, 0
        %v2404 = vsel %vm470, %v2383, 0
        %v2407 = vsel %vm470, %v2384, 0
        %v2410 = vsel %vm470, %v2385, 0
        %v2413 = vsel %vm470, %v2386, 0
        %v2416 = vsel %vm470, %v2387, 0
        %v2419 = vsel %vm470, %v2388, 0
        %v2422 = vsel %vm470, %v2389, 0
        %v2425 = vsel %vm470, %v2390, 0
        %v2428 = vsel %vm470, %v2391, 0
        %v2431 = vsel %vm470, %v2392, 0
        %v2434 = vsel %vm470, %v2393, 0
        %v2437 = vsel %vm470, %v2394, 0
        %v2440 = vsel %vm470, %v2395, 0
        %v2443 = vsel %vm470, %v2396, 0
        %v2446 = vsel %vm470, %v2397, 0
        %v2449 = vsel %vm470, %v2398, 0
        %v2452 = vsel %vm470, %v2399, 0
        %v2455 = vsel %vm525, %v431, 0
        %2457 = vmatprep.subr.mxu0 0.0
        %2458 = vmatpush1.msra.mxu0 %v2455
        %2459 = vmatprep.subr.mxu0 0.0
        %2460 = vmatpush1.msra.mxu0 0.0
        %2461 = vmatprep.subr.mxu0 0.0
        %2462 = vmatpush1.msra.mxu0 0.0
        %2463 = vmatprep.subr.mxu0 0.0
        %2464 = vmatpush1.msra.mxu0 0.0
        %2465 = vmatprep.subr.mxu0 0.0
        %2466 = vmatpush1.msra.mxu0 0.0
        %2467 = vmatprep.subr.mxu0 0.0
        %2468 = vmatpush1.msra.mxu0 0.0
        %2469 = vmatprep.subr.mxu0 0.0
        %2470 = vmatpush1.msra.mxu0 0.0
        %2471 = vmatprep.subr.mxu0 0.0
        %2472 = vmatpush1.msra.mxu0 0.0
        %2473 = vmatprep.subr.mxu0 0.0
        %2474 = vmatpush1.msra.mxu0 0.0
        %2475 = vmatprep.subr.mxu0 0.0
        %2476 = vmatpush1.msra.mxu0 0.0
        %2477 = vmatprep.subr.mxu0 0.0
        %2478 = vmatpush1.msra.mxu0 0.0
        %2479 = vmatprep.subr.mxu0 0.0
        %2480 = vmatpush1.msra.mxu0 0.0
        %2481 = vmatprep.subr.mxu0 0.0
        %2482 = vmatpush1.msra.mxu0 0.0
        %2483 = vmatprep.subr.mxu0 0.0
        %2484 = vmatpush1.msra.mxu0 0.0
        %2485 = vmatprep.subr.mxu0 0.0
        %2486 = vmatpush1.msra.mxu0 0.0
        %2487 = vmatprep.subr.mxu0 0.0
        %2488 = vmatpush1.msra.mxu0 0.0
        %2489 = vmatprep.subr.mxu0 0.0
        %2490 = vmatpush1.msra.mxu0 0.0
        %2491 = vmatprep.subr.mxu0 0.0
        %2492 = vmatpush1.msra.mxu0 0.0
        %2493 = vmatprep.subr.mxu0 0.0
        %2494 = vmatpush1.msra.mxu0 0.0
        %2495 = vmatprep.subr.mxu0 0.0
        %2496 = vmatpush1.msra.mxu0 0.0
        %2497 = vmatprep.subr.mxu0 0.0
        %2498 = vmatpush1.msra.mxu0 0.0
        %2499 = vmatprep.subr.mxu0 0.0
        %2500 = vmatpush1.msra.mxu0 0.0
        %2501 = vmatprep.subr.mxu0 0.0
        %2502 = vmatpush1.msra.mxu0 0.0
        %2503 = vmatprep.subr.mxu0 0.0
        %2504 = vmatpush1.msra.mxu0 0.0
        %2505 = vmatprep.subr.mxu0 0.0
        %2506 = vmatpush1.msra.mxu0 0.0
        %2507 = vmatprep.subr.mxu0 0.0
        %2508 = vmatpush1.msra.mxu0 0.0
        %2509 = vmatprep.subr.mxu0 0.0
        %2510 = vmatpush1.msra.mxu0 0.0
        %2511 = vmatprep.subr.mxu0 0.0
        %2512 = vmatpush1.msra.mxu0 0.0
        %2513 = vmatprep.subr.mxu0 0.0
        %2514 = vmatpush1.msra.mxu0 0.0
        %2515 = vmatprep.subr.mxu0 0.0
        %2516 = vmatpush1.msra.mxu0 0.0
        %2517 = vmatprep.subr.mxu0 0.0
        %2518 = vmatpush1.msra.mxu0 0.0
        %2519 = vmatprep.subr.mxu0 0.0
        %2520 = vmatpush1.msra.mxu0 0.0
        %2521 = vmatprep.mubr.f32.mxu0 0.0
        %2522 = vmatmul.mubr.f32.gmra.mrb[0].mxu0 %v2401
        %v2523 = vpop.f32.mrb[0].mxu0
        %v2524 = vadd.f32 0.0, %v2523
        %v2525 = vpop.f32.mrb[0].mxu0
        %2526 = vmatprep.mubr.f32.mxu0 0.0
        %2527 = vmatmul.mubr.f32.gmra.mrb[0].mxu0 %v2404
        %v2528 = vpop.f32.mrb[0].mxu0
        %v2529 = vadd.f32 0.0, %v2528
        %v2530 = vpop.f32.mrb[0].mxu0
        %2531 = vmatprep.mubr.f32.mxu0 0.0
        %2532 = vmatmul.mubr.f32.gmra.mrb[0].mxu0 %v2407
        %v2533 = vpop.f32.mrb[0].mxu0
        %v2534 = vadd.f32 0.0, %v2533
        %v2535 = vpop.f32.mrb[0].mxu0
        %2536 = vmatprep.mubr.f32.mxu0 0.0
        %2537 = vmatmul.mubr.f32.gmra.mrb[0].mxu0 %v2410
        %v2538 = vpop.f32.mrb[0].mxu0
        %v2539 = vadd.f32 0.0, %v2538
        %v2540 = vpop.f32.mrb[0].mxu0
        %2541 = vmatprep.mubr.f32.mxu0 0.0
        %2542 = vmatmul.mubr.f32.gmra.mrb[0].mxu0 %v2413
        %v2543 = vpop.f32.mrb[0].mxu0
        %v2544 = vadd.f32 0.0, %v2543
        %v2545 = vpop.f32.mrb[0].mxu0
        %2546 = vmatprep.mubr.f32.mxu0 0.0
        %2547 = vmatmul.mubr.f32.gmra.mrb[0].mxu0 %v2416
        %v2548 = vpop.f32.mrb[0].mxu0
        %v2549 = vadd.f32 0.0, %v2548
        %v2550 = vpop.f32.mrb[0].mxu0
        %2551 = vmatprep.mubr.f32.mxu0 0.0
        %2552 = vmatmul.mubr.f32.gmra.mrb[0].mxu0 %v2419
        %v2553 = vpop.f32.mrb[0].mxu0
        %v2554 = vadd.f32 0.0, %v2553
        %v2555 = vpop.f32.mrb[0].mxu0
        %2556 = vmatprep.mubr.f32.mxu0 0.0
        %2557 = vmatmul.mubr.f32.gmra.mrb[0].mxu0 %v2422
        %v2558 = vpop.f32.mrb[0].mxu0
        %v2559 = vadd.f32 0.0, %v2558
        %v2560 = vpop.f32.mrb[0].mxu0
        %2561 = vmatprep.mubr.f32.mxu0 0.0
        %2562 = vmatmul.mubr.f32.gmra.mrb[0].mxu0 %v2425
        %v2563 = vpop.f32.mrb[0].mxu0
        %v2564 = vadd.f32 0.0, %v2563
        %v2565 = vpop.f32.mrb[0].mxu0
        %2566 = vmatprep.mubr.f32.mxu0 0.0
        %2567 = vmatmul.mubr.f32.gmra.mrb[0].mxu0 %v2428
        %v2568 = vpop.f32.mrb[0].mxu0
        %v2569 = vadd.f32 0.0, %v2568
        %v2570 = vpop.f32.mrb[0].mxu0
        %2571 = vmatprep.mubr.f32.mxu0 0.0
        %2572 = vmatmul.mubr.f32.gmra.mrb[0].mxu0 %v2431
        %v2573 = vpop.f32.mrb[0].mxu0
        %v2574 = vadd.f32 0.0, %v2573
        %v2575 = vpop.f32.mrb[0].mxu0
        %2576 = vmatprep.mubr.f32.mxu0 0.0
        %2577 = vmatmul.mubr.f32.gmra.mrb[0].mxu0 %v2434
        %v2578 = vpop.f32.mrb[0].mxu0
        %v2579 = vadd.f32 0.0, %v2578
        %v2580 = vpop.f32.mrb[0].mxu0
        %2581 = vmatprep.mubr.f32.mxu0 0.0
        %2582 = vmatmul.mubr.f32.gmra.mrb[0].mxu0 %v2437
        %v2583 = vpop.f32.mrb[0].mxu0
        %v2584 = vadd.f32 0.0, %v2583
        %v2585 = vpop.f32.mrb[0].mxu0
        %2586 = vmatprep.mubr.f32.mxu0 0.0
        %2587 = vmatmul.mubr.f32.gmra.mrb[0].mxu0 %v2440
        %v2588 = vpop.f32.mrb[0].mxu0
        %v2589 = vadd.f32 0.0, %v2588
        %v2590 = vpop.f32.mrb[0].mxu0
        %2591 = vmatprep.mubr.f32.mxu0 0.0
        %2592 = vmatmul.mubr.f32.gmra.mrb[0].mxu0 %v2443
        %v2593 = vpop.f32.mrb[0].mxu0
        %v2594 = vadd.f32 0.0, %v2593
        %v2595 = vpop.f32.mrb[0].mxu0
        %2596 = vmatprep.mubr.f32.mxu0 0.0
        %2597 = vmatmul.mubr.f32.gmra.mrb[0].mxu0 %v2446
        %v2598 = vpop.f32.mrb[0].mxu0
        %v2599 = vadd.f32 0.0, %v2598
        %v2600 = vpop.f32.mrb[0].mxu0
        %2601 = vmatprep.mubr.f32.mxu0 0.0
        %2602 = vmatmul.mubr.f32.gmra.mrb[0].mxu0 %v2449
        %v2603 = vpop.f32.mrb[0].mxu0
        %v2604 = vadd.f32 0.0, %v2603
        %v2605 = vpop.f32.mrb[0].mxu0
        %2606 = vmatprep.mubr.f32.mxu0 0.0
        %2607 = vmatmul.mubr.f32.gmra.mrb[0].mxu0 %v2452
        %v2608 = vpop.f32.mrb[0].mxu0
        %v2609 = vadd.f32 0.0, %v2608
        %v2610 = vpop.f32.mrb[0].mxu0
        %2611 = vdwg.mxu0
        %v2612 = vadd.f32 %v2364, %v2524
        %v2613 = vadd.f32 %v2365, %v2529
        %v2614 = vadd.f32 %v2366, %v2534
        %v2615 = vadd.f32 %v2367, %v2539
        %v2616 = vadd.f32 %v2368, %v2544
        %v2617 = vadd.f32 %v2369, %v2549
        %v2618 = vadd.f32 %v2370, %v2554
        %v2619 = vadd.f32 %v2371, %v2559
        %v2620 = vadd.f32 %v2372, %v2564
        %v2621 = vadd.f32 %v2373, %v2569
        %v2622 = vadd.f32 %v2374, %v2574
        %v2623 = vadd.f32 %v2375, %v2579
        %v2624 = vadd.f32 %v2376, %v2584
        %v2625 = vadd.f32 %v2377, %v2589
        %v2626 = vadd.f32 %v2378, %v2594
        %v2627 = vadd.f32 %v2379, %v2599
        %v2628 = vadd.f32 %v2380, %v2604
        %v2629 = vadd.f32 %v2381, %v2609
        %v2630 = vld [vmem:[%s3] sm:$0x1]
        %v2632 = vlaneseq
        %v2633 = vshrl.u32 %v2632, 7
        %v2634 = vsub.s32 0, %v2633
        %v2635 = vrot.slane %v2630, %v2634
        %v2637 = vadd.f32 %v2612, %v2635
        %v2638 = vadd.f32 %v2613, %v2635
        %v2639 = vadd.f32 %v2614, %v2635
        %v2640 = vadd.f32 %v2615, %v2635
        %v2641 = vadd.f32 %v2616, %v2635
        %v2642 = vadd.f32 %v2617, %v2635
        %v2643 = vadd.f32 %v2618, %v2635
        %v2644 = vadd.f32 %v2619, %v2635
        %v2645 = vadd.f32 %v2620, %v2635
        %v2646 = vadd.f32 %v2621, %v2635
        %v2647 = vadd.f32 %v2622, %v2635
        %v2648 = vadd.f32 %v2623, %v2635
        %v2649 = vadd.f32 %v2624, %v2635
        %v2650 = vadd.f32 %v2625, %v2635
        %v2651 = vadd.f32 %v2626, %v2635
        %v2652 = vadd.f32 %v2627, %v2635
        %v2653 = vadd.f32 %v2628, %v2635
        %v2654 = vadd.f32 %v2629, %v2635
        %v2655 = vmax.f32 %v2637, 0.0
        %v2656 = vmax.f32 %v2638, 0.0
        %v2657 = vmax.f32 %v2639, 0.0
        %v2658 = vmax.f32 %v2640, 0.0
        %v2659 = vmax.f32 %v2641, 0.0
        %v2660 = vmax.f32 %v2642, 0.0
        %v2661 = vmax.f32 %v2643, 0.0
        %v2662 = vmax.f32 %v2644, 0.0
        %v2663 = vmax.f32 %v2645, 0.0
        %v2664 = vmax.f32 %v2646, 0.0
        %v2665 = vmax.f32 %v2647, 0.0
        %v2666 = vmax.f32 %v2648, 0.0
        %v2667 = vmax.f32 %v2649, 0.0
        %v2668 = vmax.f32 %v2650, 0.0
        %v2669 = vmax.f32 %v2651, 0.0
        %v2670 = vmax.f32 %v2652, 0.0
        %v2671 = vmax.f32 %v2653, 0.0
        %v2672 = vmax.f32 %v2654, 0.0
        %v2673 = vld [vmem:[%s418] sm:$0xff]
        %v2674 = vld [vmem:[%s418 + $0x8] sm:$0xff]
        %v2675 = vld [vmem:[%s418 + $0x10] sm:$0xff]
        %v2676 = vld [vmem:[%s418 + $0x18] sm:$0xff]
        %v2677 = vld [vmem:[%s418 + $0x20] sm:$0xff]
        %v2678 = vld [vmem:[%s418 + $0x28] sm:$0xff]
        %v2679 = vld [vmem:[%s418 + $0x30] sm:$0xff]
        %v2680 = vld [vmem:[%s418 + $0x38] sm:$0xff]
        %v2681 = vld [vmem:[%s418 + $0x40] sm:$0xff]
        %v2682 = vld [vmem:[%s418 + $0x48] sm:$0xff]
        %v2683 = vld [vmem:[%s418 + $0x50] sm:$0xff]
        %v2684 = vld [vmem:[%s418 + $0x58] sm:$0xff]
        %v2685 = vld [vmem:[%s418 + $0x60] sm:$0xff]
        %v2686 = vld [vmem:[%s418 + $0x68] sm:$0xff]
        %v2687 = vld [vmem:[%s418 + $0x70] sm:$0xff]
        %v2688 = vld [vmem:[%s418 + $0x78] sm:$0xff]
        %v2689 = vld [vmem:[%s418 + $0x80] sm:$0xff]
        %v2690 = vld [vmem:[%s418 + $0x88] sm:$0xff]
        %2692 = vset.pattern.permute.xlu0 0
        %2693 = vperm.xlu0 %2692, %v2673
        %v2694 = vpop.permute.xlu0 %2693
        %2697 = vset.pattern.permute.xlu0 0
        %2698 = vperm.xlu0 %2697, %v2674
        %v2699 = vpop.permute.xlu0 %2698
        %2702 = vset.pattern.permute.xlu0 0
        %2703 = vperm.xlu0 %2702, %v2675
        %v2704 = vpop.permute.xlu0 %2703
        %2707 = vset.pattern.permute.xlu0 0
        %2708 = vperm.xlu0 %2707, %v2676
        %v2709 = vpop.permute.xlu0 %2708
        %2712 = vset.pattern.permute.xlu0 0
        %2713 = vperm.xlu0 %2712, %v2677
        %v2714 = vpop.permute.xlu0 %2713
        %2717 = vset.pattern.permute.xlu0 0
        %2718 = vperm.xlu0 %2717, %v2678
        %v2719 = vpop.permute.xlu0 %2718
        %2722 = vset.pattern.permute.xlu0 0
        %2723 = vperm.xlu0 %2722, %v2679
        %v2724 = vpop.permute.xlu0 %2723
        %2727 = vset.pattern.permute.xlu0 0
        %2728 = vperm.xlu0 %2727, %v2680
        %v2729 = vpop.permute.xlu0 %2728
        %2732 = vset.pattern.permute.xlu0 0
        %2733 = vperm.xlu0 %2732, %v2681
        %v2734 = vpop.permute.xlu0 %2733
        %2737 = vset.pattern.permute.xlu0 0
        %2738 = vperm.xlu0 %2737, %v2682
        %v2739 = vpop.permute.xlu0 %2738
        %2742 = vset.pattern.permute.xlu0 0
        %2743 = vperm.xlu0 %2742, %v2683
        %v2744 = vpop.permute.xlu0 %2743
        %2747 = vset.pattern.permute.xlu0 0
        %2748 = vperm.xlu0 %2747, %v2684
        %v2749 = vpop.permute.xlu0 %2748
        %2752 = vset.pattern.permute.xlu0 0
        %2753 = vperm.xlu0 %2752, %v2685
        %v2754 = vpop.permute.xlu0 %2753
        %2757 = vset.pattern.permute.xlu0 0
        %2758 = vperm.xlu0 %2757, %v2686
        %v2759 = vpop.permute.xlu0 %2758
        %2762 = vset.pattern.permute.xlu0 0
        %2763 = vperm.xlu0 %2762, %v2687
        %v2764 = vpop.permute.xlu0 %2763
        %2767 = vset.pattern.permute.xlu0 0
        %2768 = vperm.xlu0 %2767, %v2688
        %v2769 = vpop.permute.xlu0 %2768
        %2772 = vset.pattern.permute.xlu0 0
        %2773 = vperm.xlu0 %2772, %v2689
        %v2774 = vpop.permute.xlu0 %2773
        %2777 = vset.pattern.permute.xlu0 0
        %2778 = vperm.xlu0 %2777, %v2690
        %v2779 = vpop.permute.xlu0 %2778
        %v2781 = vmul.f32 %v2655, %v2694
        %v2782 = vmul.f32 %v2656, %v2699
        %v2783 = vmul.f32 %v2657, %v2704
        %v2784 = vmul.f32 %v2658, %v2709
        %v2785 = vmul.f32 %v2659, %v2714
        %v2786 = vmul.f32 %v2660, %v2719
        %v2787 = vmul.f32 %v2661, %v2724
        %v2788 = vmul.f32 %v2662, %v2729
        %v2789 = vmul.f32 %v2663, %v2734
        %v2790 = vmul.f32 %v2664, %v2739
        %v2791 = vmul.f32 %v2665, %v2744
        %v2792 = vmul.f32 %v2666, %v2749
        %v2793 = vmul.f32 %v2667, %v2754
        %v2794 = vmul.f32 %v2668, %v2759
        %v2795 = vmul.f32 %v2669, %v2764
        %v2796 = vmul.f32 %v2670, %v2769
        %v2797 = vmul.f32 %v2671, %v2774
        %v2798 = vmul.f32 %v2672, %v2779
        %v2799 = vadd.f32 %v2781, %v2782
        %v2800 = vadd.f32 %v2799, %v2783
        %v2801 = vadd.f32 %v2800, %v2784
        %v2802 = vadd.f32 %v2801, %v2785
        %v2803 = vadd.f32 %v2802, %v2786
        %v2804 = vadd.f32 %v2803, %v2787
        %v2805 = vadd.f32 %v2804, %v2788
        %v2806 = vadd.f32 %v2805, %v2789
        %v2807 = vadd.f32 %v2806, %v2790
        %v2808 = vadd.f32 %v2807, %v2791
        %v2809 = vadd.f32 %v2808, %v2792
        %v2810 = vadd.f32 %v2809, %v2793
        %v2811 = vadd.f32 %v2810, %v2794
        %v2812 = vadd.f32 %v2811, %v2795
        %v2813 = vadd.f32 %v2812, %v2796
        %v2814 = vadd.f32 %v2813, %v2797
        %v2815 = vadd.f32 %v2814, %v2798
        %v2816 = vrot.slane %v2815, 4
        %v2817 = vadd.f32 %v2815, %v2816
        %v2818 = vrot.slane %v2817, 2
        %v2819 = vadd.f32 %v2817, %v2818
        %v2820 = vrot.slane %v2819, 1
        %v2821 = vadd.f32 %v2819, %v2820
        %v2822 = vlaneseq
        %v2823 = vshrl.u32 %v2822, 7
        %v2824 = vld [vmem:[#allocation2] sm:$0x3]
        %v2825 = vstv %s29
        %vm2826 = vcmp.eq.s32.totalorder %v2823, %v2825
        %v2827 = vsel %vm2826, 1, 0
        %vm2828 = vcmp.eq.s32.totalorder %v2827, 1
        %v2829 = vsel %vm2828, %v2821, 0.0
        %v2830 = vadd.f32 %v2824, %v2829
        %2831 = vst [vmem:[#allocation2] sm:$0x3] %v2830
        %p2832 = scmp.eq.s32.totalorder %s29, 1
        %p2833 = scmp.eq.s32.totalorder %s30, 1
        %p2834 = pnand %p2832, %p2833
        %p2835 = pneg %p2834
        // Predicated region
        $region65: #{net_wrapper_forward.1} parent=59 // pred_check
          _
        $region66: #{net_wrapper_forward.1} parent=59 // pred_check_branch
          %2837 = sbr.rel (%p2834) target = $region68
        $region67: #{net_wrapper_forward.1} parent=59 // pred_region
          %v2838 = vld [vmem:[#allocation2] sm:$0x3]
          %v2839 = vmul.f32 %v2838, 0.00390625
          %2840 = vst [vmem:[#allocation5] sm:$0x3] %v2839
          %v2841 = vld [vmem:[%s4] sm:$0xff]
          %v2842 = vld [vmem:[%s4 + $0x8] sm:$0xff]
          %v2843 = vld [vmem:[%s4 + $0x10] sm:$0xff]
          %v2844 = vld [vmem:[%s4 + $0x18] sm:$0xff]
          %v2845 = vld [vmem:[%s4 + $0x20] sm:$0xff]
          %v2846 = vld [vmem:[%s4 + $0x28] sm:$0xff]
          %v2847 = vld [vmem:[%s4 + $0x30] sm:$0xff]
          %v2848 = vld [vmem:[%s4 + $0x38] sm:$0xff]
          %v2849 = vld [vmem:[%s4 + $0x40] sm:$0xff]
          %v2850 = vld [vmem:[%s4 + $0x48] sm:$0xff]
          %v2851 = vld [vmem:[%s4 + $0x50] sm:$0xff]
          %v2852 = vld [vmem:[%s4 + $0x58] sm:$0xff]
          %v2853 = vld [vmem:[%s4 + $0x60] sm:$0xff]
          %v2854 = vld [vmem:[%s4 + $0x68] sm:$0xff]
          %v2855 = vld [vmem:[%s4 + $0x70] sm:$0xff]
          %v2856 = vld [vmem:[%s4 + $0x78] sm:$0xff]
          %v2857 = vld [vmem:[%s5] sm:$0x1]
          %v2859 = vlaneseq
          %v2860 = vshrl.u32 %v2859, 7
          %v2861 = vsub.s32 0, %v2860
          %v2862 = vrot.slane %v2857, %v2861
          %2864 = vmatprep.subr.mxu0 0.0
          %2865 = vmatpush1.msra.mxu0 %v2841
          %2866 = vmatprep.subr.mxu0 0.0
          %2867 = vmatpush1.msra.mxu0 %v2842
          %2868 = vmatprep.subr.mxu0 0.0
          %2869 = vmatpush1.msra.mxu0 %v2843
          %2870 = vmatprep.subr.mxu0 0.0
          %2871 = vmatpush1.msra.mxu0 %v2844
          %2872 = vmatprep.subr.mxu0 0.0
          %2873 = vmatpush1.msra.mxu0 %v2845
          %2874 = vmatprep.subr.mxu0 0.0
          %2875 = vmatpush1.msra.mxu0 %v2846
          %2876 = vmatprep.subr.mxu0 0.0
          %2877 = vmatpush1.msra.mxu0 %v2847
          %2878 = vmatprep.subr.mxu0 0.0
          %2879 = vmatpush1.msra.mxu0 %v2848
          %2880 = vmatprep.subr.mxu0 0.0
          %2881 = vmatpush1.msra.mxu0 %v2849
          %2882 = vmatprep.subr.mxu0 0.0
          %2883 = vmatpush1.msra.mxu0 %v2850
          %2884 = vmatprep.subr.mxu0 0.0
          %2885 = vmatpush1.msra.mxu0 %v2851
          %2886 = vmatprep.subr.mxu0 0.0
          %2887 = vmatpush1.msra.mxu0 %v2852
          %2888 = vmatprep.subr.mxu0 0.0
          %2889 = vmatpush1.msra.mxu0 %v2853
          %2890 = vmatprep.subr.mxu0 0.0
          %2891 = vmatpush1.msra.mxu0 %v2854
          %2892 = vmatprep.subr.mxu0 0.0
          %2893 = vmatpush1.msra.mxu0 %v2855
          %2894 = vmatprep.subr.mxu0 0.0
          %2895 = vmatpush1.msra.mxu0 %v2856
          %2896 = vmatprep.subr.mxu0 0.0
          %2897 = vmatpush1.msra.mxu0 0.0
          %2898 = vmatprep.subr.mxu0 0.0
          %2899 = vmatpush1.msra.mxu0 0.0
          %2900 = vmatprep.subr.mxu0 0.0
          %2901 = vmatpush1.msra.mxu0 0.0
          %2902 = vmatprep.subr.mxu0 0.0
          %2903 = vmatpush1.msra.mxu0 0.0
          %2904 = vmatprep.subr.mxu0 0.0
          %2905 = vmatpush1.msra.mxu0 0.0
          %2906 = vmatprep.subr.mxu0 0.0
          %2907 = vmatpush1.msra.mxu0 0.0
          %2908 = vmatprep.subr.mxu0 0.0
          %2909 = vmatpush1.msra.mxu0 0.0
          %2910 = vmatprep.subr.mxu0 0.0
          %2911 = vmatpush1.msra.mxu0 0.0
          %2912 = vmatprep.subr.mxu0 0.0
          %2913 = vmatpush1.msra.mxu0 0.0
          %2914 = vmatprep.subr.mxu0 0.0
          %2915 = vmatpush1.msra.mxu0 0.0
          %2916 = vmatprep.subr.mxu0 0.0
          %2917 = vmatpush1.msra.mxu0 0.0
          %2918 = vmatprep.subr.mxu0 0.0
          %2919 = vmatpush1.msra.mxu0 0.0
          %2920 = vmatprep.subr.mxu0 0.0
          %2921 = vmatpush1.msra.mxu0 0.0
          %2922 = vmatprep.subr.mxu0 0.0
          %2923 = vmatpush1.msra.mxu0 0.0
          %2924 = vmatprep.subr.mxu0 0.0
          %2925 = vmatpush1.msra.mxu0 0.0
          %2926 = vmatprep.subr.mxu0 0.0
          %2927 = vmatpush1.msra.mxu0 0.0
          %2928 = vmatprep.mubr.f32.mxu0 0.0
          %2929 = vmatmul.mubr.f32.gmra.mrb[0].mxu0 %v2839
          %v2930 = vpop.f32.mrb[0].mxu0
          %v2931 = vadd.f32 %v2862, %v2930
          %v2932 = vpop.f32.mrb[0].mxu0
          %2933 = vdwg.mxu0
          %vm2934 = vcmask 1041408
          %v2935 = vsel %vm2934, %v2931, 0.0
          %v2936 = vrot.slane %v2935, 4
          %v2937 = vadd.f32 %v2935, %v2936
          %v2938 = vrot.slane %v2937, 2
          %v2939 = vadd.f32 %v2937, %v2938
          %v2940 = vrot.slane %v2939, 1
          %v2941 = vadd.f32 %v2939, %v2940
          %v2942 = vrcp.pop 2.0
          %v2943 = vmul.f32 %v2941, %v2942
          %v2944 = vsub.f32 %v2931, %v2943
          %v2945 = vmul.f32 %v2944, %v2944
          %v2946 = vsel %vm2934, %v2945, 0.0
          %v2947 = vrot.slane %v2946, 4
          %v2948 = vadd.f32 %v2946, %v2947
          %v2949 = vrot.slane %v2948, 2
          %v2950 = vadd.f32 %v2948, %v2949
          %v2951 = vrot.slane %v2950, 1
          %v2952 = vadd.f32 %v2950, %v2951
          %v2953 = vmul.f32 %v2952, %v2942
          %v2954 = vadd.f32 %v2953, 1e-05
          %v2955 = vrsqrt.pop %v2954
          %v2956 = vmul.f32 %v2944, %v2955
          %v2957 = vld [vmem:[%s6] sm:$0x1]
          %v2959 = vlaneseq
          %v2960 = vshrl.u32 %v2959, 7
          %v2961 = vsub.s32 0, %v2960
          %v2962 = vrot.slane %v2957, %v2961
          %v2964 = vmul.f32 %v2956, %v2962
          %v2965 = vld [vmem:[%s7] sm:$0x1]
          %v2967 = vlaneseq
          %v2968 = vshrl.u32 %v2967, 7
          %v2969 = vsub.s32 0, %v2968
          %v2970 = vrot.slane %v2965, %v2969
          %v2972 = vadd.f32 %v2964, %v2970
          %v2973 = vmax.f32 %v2972, 0.0
          %v2974 = vld [vmem:[%s8] sm:$0xff]
          %v2975 = vld [vmem:[%s8 + $0x8] sm:$0xff]
          %v2976 = vld [vmem:[%s8 + $0x10] sm:$0xff]
          %v2977 = vld [vmem:[%s8 + $0x18] sm:$0xff]
          %v2978 = vld [vmem:[%s8 + $0x20] sm:$0xff]
          %v2979 = vld [vmem:[%s8 + $0x28] sm:$0xff]
          %v2980 = vld [vmem:[%s8 + $0x30] sm:$0xff]
          %v2981 = vld [vmem:[%s8 + $0x38] sm:$0xff]
          %v2982 = vld [vmem:[%s8 + $0x40] sm:$0xff]
          %v2983 = vld [vmem:[%s8 + $0x48] sm:$0xff]
          %v2984 = vld [vmem:[%s8 + $0x50] sm:$0xff]
          %v2985 = vld [vmem:[%s8 + $0x58] sm:$0xff]
          %v2986 = vld [vmem:[%s8 + $0x60] sm:$0xff]
          %v2987 = vld [vmem:[%s8 + $0x68] sm:$0xff]
          %v2988 = vld [vmem:[%s8 + $0x70] sm:$0xff]
          %v2989 = vld [vmem:[%s8 + $0x78] sm:$0xff]
          %v2990 = vld [vmem:[%s9] sm:$0x1]
          %v2992 = vlaneseq
          %v2993 = vshrl.u32 %v2992, 7
          %v2994 = vsub.s32 0, %v2993
          %v2995 = vrot.slane %v2990, %v2994
          %2997 = vmatprep.subr.mxu0 0.0
          %2998 = vmatpush1.msra.mxu0 %v2974
          %2999 = vmatprep.subr.mxu0 0.0
          %3000 = vmatpush1.msra.mxu0 %v2975
          %3001 = vmatprep.subr.mxu0 0.0
          %3002 = vmatpush1.msra.mxu0 %v2976
          %3003 = vmatprep.subr.mxu0 0.0
          %3004 = vmatpush1.msra.mxu0 %v2977
          %3005 = vmatprep.subr.mxu0 0.0
          %3006 = vmatpush1.msra.mxu0 %v2978
          %3007 = vmatprep.subr.mxu0 0.0
          %3008 = vmatpush1.msra.mxu0 %v2979
          %3009 = vmatprep.subr.mxu0 0.0
          %3010 = vmatpush1.msra.mxu0 %v2980
          %3011 = vmatprep.subr.mxu0 0.0
          %3012 = vmatpush1.msra.mxu0 %v2981
          %3013 = vmatprep.subr.mxu0 0.0
          %3014 = vmatpush1.msra.mxu0 %v2982
          %3015 = vmatprep.subr.mxu0 0.0
          %3016 = vmatpush1.msra.mxu0 %v2983
          %3017 = vmatprep.subr.mxu0 0.0
          %3018 = vmatpush1.msra.mxu0 %v2984
          %3019 = vmatprep.subr.mxu0 0.0
          %3020 = vmatpush1.msra.mxu0 %v2985
          %3021 = vmatprep.subr.mxu0 0.0
          %3022 = vmatpush1.msra.mxu0 %v2986
          %3023 = vmatprep.subr.mxu0 0.0
          %3024 = vmatpush1.msra.mxu0 %v2987
          %3025 = vmatprep.subr.mxu0 0.0
          %3026 = vmatpush1.msra.mxu0 %v2988
          %3027 = vmatprep.subr.mxu0 0.0
          %3028 = vmatpush1.msra.mxu0 %v2989
          %3029 = vmatprep.subr.mxu0 0.0
          %3030 = vmatpush1.msra.mxu0 0.0
          %3031 = vmatprep.subr.mxu0 0.0
          %3032 = vmatpush1.msra.mxu0 0.0
          %3033 = vmatprep.subr.mxu0 0.0
          %3034 = vmatpush1.msra.mxu0 0.0
          %3035 = vmatprep.subr.mxu0 0.0
          %3036 = vmatpush1.msra.mxu0 0.0
          %3037 = vmatprep.subr.mxu0 0.0
          %3038 = vmatpush1.msra.mxu0 0.0
          %3039 = vmatprep.subr.mxu0 0.0
          %3040 = vmatpush1.msra.mxu0 0.0
          %3041 = vmatprep.subr.mxu0 0.0
          %3042 = vmatpush1.msra.mxu0 0.0
          %3043 = vmatprep.subr.mxu0 0.0
          %3044 = vmatpush1.msra.mxu0 0.0
          %3045 = vmatprep.subr.mxu0 0.0
          %3046 = vmatpush1.msra.mxu0 0.0
          %3047 = vmatprep.subr.mxu0 0.0
          %3048 = vmatpush1.msra.mxu0 0.0
          %3049 = vmatprep.subr.mxu0 0.0
          %3050 = vmatpush1.msra.mxu0 0.0
          %3051 = vmatprep.subr.mxu0 0.0
          %3052 = vmatpush1.msra.mxu0 0.0
          %3053 = vmatprep.subr.mxu0 0.0
          %3054 = vmatpush1.msra.mxu0 0.0
          %3055 = vmatprep.subr.mxu0 0.0
          %3056 = vmatpush1.msra.mxu0 0.0
          %3057 = vmatprep.subr.mxu0 0.0
          %3058 = vmatpush1.msra.mxu0 0.0
          %3059 = vmatprep.subr.mxu0 0.0
          %3060 = vmatpush1.msra.mxu0 0.0
          %3061 = vmatprep.mubr.f32.mxu0 0.0
          %3062 = vmatmul.mubr.f32.gmra.mrb[0].mxu0 %v2973
          %v3063 = vpop.f32.mrb[0].mxu0
          %v3064 = vadd.f32 %v2995, %v3063
          %v3065 = vpop.f32.mrb[0].mxu0
          %3066 = vdwg.mxu0
          %3067 = vst [vmem:[#allocation3] sm:$0x3] %v3064
        $region68: #{net_wrapper_forward.1} parent=59 // pred_fallthru
          _
        // Predicated region
        $region69: #{net_wrapper_forward.1} parent=59 // pred_check
          %p3068 = pneg %p272
        $region70: #{net_wrapper_forward.1} parent=59 // pred_check_branch
          %3070 = sbr.rel (%p3068) target = $region72
        $region71: #{net_wrapper_forward.1} parent=59 // pred_region
          %s3072 = ssub.s32 32, 32
          %3073 = vsyncadd [#allocation4], %s3072
          %s3075 = sshll.u32 [#allocation3], 4
          %s3076 = int_to_ptr.vmem [resolvable:$true] %s3075
          %3078 = dma.vmem_to_hbm [thread:$0]  %s3076, 32, %s10, [#allocation4]
        $region72: #{net_wrapper_forward.1} parent=59 // pred_fallthru
          _
        // Predicated region
        $region73: #{net_wrapper_forward.1} parent=59 // pred_check
          %p3079 = pneg %p293
        $region74: #{net_wrapper_forward.1} parent=59 // pred_check_branch
          %3081 = sbr.rel (%p3079) target = $region76
        $region75: #{net_wrapper_forward.1} parent=59 // pred_region
          %s3083 = ssub.s32 32, 32
          %3084 = vsyncadd [#allocation6], %s3083
          %s3086 = sshll.u32 [#allocation5], 4
          %s3087 = int_to_ptr.vmem [resolvable:$true] %s3086
          %3089 = dma.vmem_to_hbm [thread:$0]  %s3087, 32, %s11, [#allocation6]
        $region76: #{net_wrapper_forward.1} parent=59 // pred_fallthru
          _
        // Predicated region
        $region77: #{net_wrapper_forward.1} parent=59 // pred_check
          %p3090 = pneg %p272
        $region78: #{net_wrapper_forward.1} parent=59 // pred_check_branch
          %3092 = sbr.rel (%p3090) target = $region80
        $region79: #{net_wrapper_forward.1} parent=59 // pred_region
          %3093 = dma.done [#allocation4], 32
        $region80: #{net_wrapper_forward.1} parent=59 // pred_fallthru
          _
        // Predicated region
        $region81: #{net_wrapper_forward.1} parent=59 // pred_check
          %p3094 = pneg %p293
        $region82: #{net_wrapper_forward.1} parent=59 // pred_check_branch
          %3096 = sbr.rel (%p3094) target = $region84
        $region83: #{net_wrapper_forward.1} parent=59 // pred_region
          %3097 = dma.done [#allocation6], 32
        $region84: #{net_wrapper_forward.1} parent=59 // pred_fallthru
          _
      $region60: #{net_wrapper_forward.1} parent=5 // pred_fallthru
        _
      %p3098 = scmp.le.s32.totalorder 2, %s20
      // Predicated region
      $region85: #{net_wrapper_forward.1} parent=5 // pred_check
        %p3099 = pneg %p3098
      $region86: #{net_wrapper_forward.1} parent=5 // pred_check_branch
        %3101 = sbr.rel (%p3099) target = $region88
      $region87: #{net_wrapper_forward.1} parent=5 // pred_region
        %s3102 = ssub.s32 %s20, 2
      $region88: #{net_wrapper_forward.1} parent=5 // pred_fallthru
        _
    $region6: #{net_wrapper_forward.1} parent=1 // loop_footer
      %s24 = sadd.s32 1, %s20
    $region7: #{net_wrapper_forward.1} parent=1 // loop_footer_branch
      %19 = sbr.rel target = $region3
    $region8: #{net_wrapper_forward.1} parent=1 // loop_exit
      _
    %3103 = vsyncpa [#allocation4], 1
    %s3104 = scalar_lea.sflag [#allocation4], 1
    %3105 = vsyncpa %s3104, 1
    %3106 = vsyncpa [#allocation6], 1

</llo_original>
